<compile_context>
chip_gen: v7x
topology: tpu7x:2x2x1
jax: 0.10.0
libtpu: 0.0.40
codegen_flags: <defaults>
</compile_context>

<pallas_src>
import functools

import jax
import jax.numpy as jnp
import numpy as np
from jax.experimental import pallas as pl
from jax.experimental.pallas import tpu as pltpu


def _round_up(x, m):
    return (x + m - 1) // m * m


_COMPILER_PARAMS = pltpu.CompilerParams(
    dimension_semantics=("parallel",),   # batch grid -> megacore sharding on v7x
    vmem_limit_bytes=32 << 20,           # safe on v5e/v6e and on v7x (64 MiB VMEM)
)


# ----------------------------- Pallas kernels -------------------------------
def _layer1_kernel(p1t_ref, w1t_ref, b1_ref, o_ref):
    # y1T = relu(W1T @ P1T + b1) for one image; channels on sublanes, the
    # 441(->512) output positions on lanes, so the hand-off to layer 2 stays
    # lane-dense and transpose-free.
    acc = jnp.dot(w1t_ref[...], p1t_ref[0],
                  preferred_element_type=jnp.float32)            # (Cp1, P1p)
    acc = jnp.maximum(acc + b1_ref[...], 0.0)
    o_ref[0] = acc.astype(o_ref.dtype)


def _tail_kernel(p2t_ref, w2t_ref, b2_ref, w3r_ref, b3_ref, wmu_ref, bmu_ref,
                 o_ref, *, c2_real):
    # ---- layer 2 (transposed GEMM): y2T[c2, p] = relu(W2T @ P2T + b2) ----
    y2t = jnp.dot(w2t_ref[...], p2t_ref[0],
                  preferred_element_type=jnp.float32)            # (C2p, P2p)
    y2t = jnp.maximum(y2t + b2_ref[...], 0.0).astype(jnp.bfloat16)
    # ---- layer 3 (11x11 conv -> single output position) ----
    # Contraction over (c2, position), unrolled over the few real c2 channels
    # as accumulated MXU dots: no in-kernel flatten/relayout needed.
    # Padded positions (>=121) hold relu(b2) garbage from zero patch columns,
    # but the matching w3r rows are zero so they contribute nothing.
    c3p = b3_ref.shape[-1]
    h = jnp.zeros((1, c3p), jnp.float32)
    for c2 in range(c2_real):                                    # small, unrolled
        h = h + jnp.dot(y2t[c2:c2 + 1, :], w3r_ref[c2],
                        preferred_element_type=jnp.float32)
    h = jnp.maximum(h + b3_ref[...], 0.0).astype(jnp.bfloat16)   # (1, C3p)
    # ---- conv_mu (1x1 conv) ----
    o = jnp.dot(h, wmu_ref[...], preferred_element_type=jnp.float32)
    o = o + bmu_ref[...]                                         # (1, Zp)
    o_ref[0] = jnp.broadcast_to(o, o_ref.shape[1:]).astype(o_ref.dtype)


# --------------------------- pallas_call wrappers ----------------------------
def _layer1(p1t, w1t, b1):
    N, K1p, P1p = p1t.shape
    Cp1 = w1t.shape[0]
    return pl.pallas_call(
        _layer1_kernel,
        out_shape=jax.ShapeDtypeStruct((N, Cp1, P1p), jnp.bfloat16),
        grid=(N,),
        in_specs=[
            pl.BlockSpec((1, K1p, P1p), lambda i: (i, 0, 0)),
            pl.BlockSpec((Cp1, K1p), lambda i: (0, 0)),      # resident weight
            pl.BlockSpec((Cp1, 1), lambda i: (0, 0)),
        ],
        out_specs=pl.BlockSpec((1, Cp1, P1p), lambda i: (i, 0, 0)),
        compiler_params=_COMPILER_PARAMS,
    )(p1t, w1t, b1)


def _tail(p2t, w2t, b2, w3r, b3, wmu, bmu, *, c2_real):
    N, K2p, P2p = p2t.shape
    C2p = w2t.shape[0]
    C3p = w3r.shape[2]
    Zp = wmu.shape[1]
    return pl.pallas_call(
        functools.partial(_tail_kernel, c2_real=c2_real),
        out_shape=jax.ShapeDtypeStruct((N, 8, Zp), jnp.float32),
        grid=(N,),
        in_specs=[
            pl.BlockSpec((1, K2p, P2p), lambda i: (i, 0, 0)),
            pl.BlockSpec((C2p, K2p), lambda i: (0, 0)),          # resident
            pl.BlockSpec((C2p, 1), lambda i: (0, 0)),
            pl.BlockSpec((c2_real, P2p, C3p), lambda i: (0, 0, 0)),
            pl.BlockSpec((1, C3p), lambda i: (0, 0)),
            pl.BlockSpec((C3p, Zp), lambda i: (0, 0)),
            pl.BlockSpec((1, Zp), lambda i: (0, 0)),
        ],
        out_specs=pl.BlockSpec((1, 8, Zp), lambda i: (i, 0, 0)),
        compiler_params=_COMPILER_PARAMS,
    )(p2t, w2t, b2, w3r, b3, wmu, bmu)


# ----------------------------- im2col (XLA glue) -----------------------------
def _im2col_l1(x_nchw):
    """Layer-1 im2col, channel-major: (N, K1p, P1p) bf16.
    K index = (kh*8+kw)*cin + ci ; P index = h1*Wo + w1 (row-major)."""
    N, cin, H, W = x_nchw.shape
    xp = jnp.pad(x_nchw, ((0, 0), (0, 0), (2, 2), (2, 2))).astype(jnp.bfloat16)
    Ho = (H + 4 - 8) // 4 + 1
    Wo = (W + 4 - 8) // 4 + 1
    cols = []
    for kh in range(8):
        for kw in range(8):
            s = xp[:, :, kh:kh + 4 * (Ho - 1) + 1:4, kw:kw + 4 * (Wo - 1) + 1:4]
            cols.append(s.reshape(N, cin, Ho * Wo))
    p = jnp.concatenate(cols, axis=1)                       # (N, 64*cin, Ho*Wo)
    K1, P1 = 64 * cin, Ho * Wo
    K1p, P1p = _round_up(K1, 128), _round_up(P1, 128)
    p = jnp.pad(p, ((0, 0), (0, K1p - K1), (0, P1p - P1)))  # fused with producer
    return p, Ho, Wo


def _im2col_l2(y1t, Ho, Wo):
    """Layer-2 im2col from the lane-dense channel-major layer-1 output.
    y1t: (N, Cp1, P1p) bf16 -> (N, 16*Cp1, P2p) with
    K index = (kh*4+kw)*Cp1 + c1 ; P index = h2*W2 + w2."""
    N, Cp1, _ = y1t.shape
    y = y1t[:, :, :Ho * Wo].reshape(N, Cp1, Ho, Wo)
    y = jnp.pad(y, ((0, 0), (0, 0), (1, 2), (1, 2)))        # ZeroPad2d(1,2,1,2)
    Hp, Wp = Ho + 3, Wo + 3
    H2, W2 = (Hp - 4) // 2 + 1, (Wp - 4) // 2 + 1
    cols = []
    for kh in range(4):
        for kw in range(4):
            s = y[:, :, kh:kh + 2 * (H2 - 1) + 1:2, kw:kw + 2 * (W2 - 1) + 1:2]
            cols.append(s.reshape(N, Cp1, H2 * W2))
    p = jnp.concatenate(cols, axis=1)                       # (N, 16*Cp1, H2*W2)
    P2 = H2 * W2
    P2p = _round_up(P2, 128)
    p = jnp.pad(p, ((0, 0), (0, 0), (0, P2p - P2)))
    return p, H2, W2


# ------------------------------ parameter prep -------------------------------
def prepare_params(params):
    """One-time weight prep: channel-major matmul layouts, zero-padded to
    lane-dense tiles, bf16 matmul operands / f32 biases."""
    f32, bf16 = jnp.float32, jnp.bfloat16
    ch, cin, k1h, k1w = params["w1"].shape
    c2, _, k2h, k2w = params["w2"].shape
    c3, _, k3h, k3w = params["w3"].shape
    z = params["w_mu"].shape[0]
    Cp1, C2p = _round_up(ch, 128), _round_up(c2, 128)
    C3p, Zp = _round_up(c3, 128), _round_up(z, 128)
    K1, K1p = k1h * k1w * cin, _round_up(k1h * k1w * cin, 128)
    P3, P3p = k3h * k3w, _round_up(k3h * k3w, 128)

    # layer 1: W1T[co, (kh*8+kw)*cin + ci]
    w1t = jnp.transpose(params["w1"], (0, 2, 3, 1)).reshape(ch, K1)
    w1t = jnp.pad(w1t, ((0, Cp1 - ch), (0, K1p - K1))).astype(bf16)
    b1 = jnp.pad(params["b1"], (0, Cp1 - ch)).astype(f32).reshape(Cp1, 1)

    # layer 2: W2T[c2, (kh*4+kw)*Cp1 + c1]; zero rows pre-interleaved for the
    # padded layer-1 channels so the lane-dense hand-off needs no slicing.
    w2 = jnp.transpose(params["w2"], (0, 2, 3, 1))           # (c2, kh, kw, c1)
    w2 = jnp.pad(w2, ((0, C2p - c2), (0, 0), (0, 0), (0, Cp1 - ch)))
    w2t = w2.reshape(C2p, k2h * k2w * Cp1).astype(bf16)
    b2 = jnp.pad(params["b2"], (0, C2p - c2)).astype(f32).reshape(C2p, 1)

    # layer 3: W3r[c2, p = kh*11+kw (padded to 128), c3]
    w3 = jnp.transpose(params["w3"], (1, 2, 3, 0)).reshape(c2, P3, c3)
    w3r = jnp.pad(w3, ((0, 0), (0, P3p - P3), (0, C3p - c3))).astype(bf16)
    b3 = jnp.pad(params["b3"], (0, C3p - c3)).astype(f32).reshape(1, C3p)

    # conv_mu: Wmu[c3, z]
    wmu = jnp.pad(params["w_mu"].reshape(z, c3).T,
                  ((0, C3p - c3), (0, Zp - z))).astype(bf16)
    bmu = jnp.pad(params["b_mu"], (0, Zp - z)).astype(f32).reshape(1, Zp)
    return dict(w1t=w1t, b1=b1, w2t=w2t, b2=b2, w3r=w3r, b3=b3, wmu=wmu, bmu=bmu)


# ------------------------------- TEncoder forward ----------------------------
@functools.partial(jax.jit, static_argnames=("z",))
def encoder_forward(prepped, x_nchw, *, z):
    N = x_nchw.shape[0]
    p1t, Ho, Wo = _im2col_l1(x_nchw)
    y1t = _layer1(p1t, prepped["w1t"], prepped["b1"])
    p2t, H2, W2 = _im2col_l2(y1t, Ho, Wo)
    # TODO(synk): the fused head assumes the 11x11 conv yields a 1x1 map
    # (standard 84x84 Atari input); other spatial sizes are not supported.
    assert (H2, W2) == (11, 11), (H2, W2)
    c2_real = prepped["w3r"].shape[0]
    out = _tail(p2t, prepped["w2t"], prepped["b2"], prepped["w3r"],
                prepped["b3"], prepped["wmu"], prepped["bmu"], c2_real=c2_real)
    return out[:, 0, :z].reshape(N, z, 1, 1)


# --------------------------- pure-JAX reference check -------------------------
def encoder_ref(params, x_nchw):
    def conv(x, w, b, stride, pad):
        y = jax.lax.conv_general_dilated(
            x, w, window_strides=(stride, stride),
            padding=((pad[0], pad[1]), (pad[2], pad[3])),
            dimension_numbers=("NCHW", "OIHW", "NCHW"),
            precision=jax.lax.Precision.HIGHEST)
        return y + b.reshape(1, -1, 1, 1)
    x = jax.nn.relu(conv(x_nchw, params["w1"], params["b1"], 4, (2, 2, 2, 2)))
    x = jax.nn.relu(conv(x, params["w2"], params["b2"], 2, (1, 2, 1, 2)))
    x = jax.nn.relu(conv(x, params["w3"], params["b3"], 1, (0, 0, 0, 0)))
    x = conv(x, params["w_mu"], params["b_mu"], 1, (0, 0, 0, 0))
    return x


def init_params(key, channel_in, ch, z):
    ks = jax.random.split(key, 8)
    s = 0.05
    def w(k, shape):
        return jax.random.normal(k, shape, jnp.float32) * s
    return {
        "w1": w(ks[0], (ch, channel_in, 8, 8)),        "b1": w(ks[1], (ch,)),
        "w2": w(ks[2], (ch * 2, ch, 4, 4)),            "b2": w(ks[3], (ch * 2,)),
        "w3": w(ks[4], (ch * 32, ch * 2, 11, 11)),     "b3": w(ks[5], (ch * 32,)),
        "w_mu": w(ks[6], (z, ch * 32, 1, 1)),          "b_mu": w(ks[7], (z,)),
    }


if __name__ == "__main__":
    # 84x84 is the smallest spatial size the 11x11 layer-3 conv accepts
    # (standard Atari input -> 1x1 head).  At BATCH=2 the network is
    # dispatch/DMA-latency bound, which is what the two-kernel fused
    # structure targets; larger batches simply add (parallel) grid steps.
    BATCH, CH_IN, CH, Z, HW = 2, 3, 8, 32, 84

    key = jax.random.PRNGKey(0)
    kparam, kx = jax.random.split(key)
    params = init_params(kparam, CH_IN, CH, Z)
    x = jax.random.normal(kx, (BATCH, CH_IN, HW, HW), jnp.float32)

    prepped = prepare_params(params)              # one-time, hoisted out of jit
    out = encoder_forward(prepped, x, z=Z)
    out = jax.block_until_ready(out)

    assert out.shape == (BATCH, Z, 1, 1), out.shape

    ref = jax.block_until_ready(encoder_ref(params, x))
    np.testing.assert_allclose(np.asarray(out), np.asarray(ref),
                               rtol=2e-2, atol=2e-2)   # bf16 MXU tolerance
    print("KERNEL_OK")
</pallas_src>

<mosaic_0001>
module attributes {stable_mosaic.version = 11 : i64} {
  func.func @_layer1_kernel(%arg0: i32, %arg1: memref<1x256x512xbf16, #tpu.memory_space<vmem>>, %arg2: memref<128x256xbf16, #tpu.memory_space<vmem>>, %arg3: memref<128x1xf32, #tpu.memory_space<vmem>>, %arg4: memref<1x128x512xbf16, #tpu.memory_space<vmem>>) attributes {dimension_semantics = [#tpu.dimension_semantics<parallel>], iteration_bounds = array<i64: 2>, scalar_prefetch = 0 : i64, scratch_operands = 0 : i64, tpu.core_type = #tpu.core_type<tc>, window_params = [{transform_indices = @transform_0, window_bounds = array<i64: 1, 256, 512>}, {pipeline_mode = #tpu.pipeline_mode<synchronous>, transform_indices = @transform_1, window_bounds = array<i64: 128, 256>}, {pipeline_mode = #tpu.pipeline_mode<synchronous>, transform_indices = @transform_2, window_bounds = array<i64: 128, 1>}, {transform_indices = @transform_3, window_bounds = array<i64: 1, 128, 512>}]} {
    %c0 = arith.constant 0 : index
    %c0_0 = arith.constant 0 : index
    %0 = vector.load %arg2[%c0, %c0_0] : memref<128x256xbf16, #tpu.memory_space<vmem>>, vector<128x256xbf16>
    %c0_1 = arith.constant 0 : index
    %c0_2 = arith.constant 0 : index
    %c0_3 = arith.constant 0 : index
    %1 = vector.load %arg1[%c0_1, %c0_2, %c0_3] : memref<1x256x512xbf16, #tpu.memory_space<vmem>>, vector<1x256x512xbf16>
    %2 = vector.shape_cast %1 : vector<1x256x512xbf16> to vector<256x512xbf16>
    %cst = arith.constant dense<0.000000e+00> : vector<128x512xf32>
    %3 = tpu.matmul %0, %2, %cst {dimension_numbers = #tpu.dot_dimension_numbers<[1], [0], [0], [1], [0, 0, 1, 1], [], []>} : vector<128x256xbf16>, vector<256x512xbf16>, vector<128x512xf32> -> vector<128x512xf32>
    %c0_4 = arith.constant 0 : index
    %c0_5 = arith.constant 0 : index
    %4 = vector.load %arg3[%c0_4, %c0_5] : memref<128x1xf32, #tpu.memory_space<vmem>>, vector<128x1xf32>
    %5 = vector.broadcast %4 : vector<128x1xf32> to vector<128x512xf32>
    %6 = arith.addf %3, %5 : vector<128x512xf32>
    %cst_6 = arith.constant 0.000000e+00 : f32
    %7 = vector.broadcast %cst_6 : f32 to vector<128x512xf32>
    %8 = arith.maximumf %6, %7 : vector<128x512xf32>
    %9 = arith.truncf %8 : vector<128x512xf32> to vector<128x512xbf16>
    %c0_7 = arith.constant 0 : index
    %c0_8 = arith.constant 0 : index
    %c0_9 = arith.constant 0 : index
    %10 = vector.load %arg4[%c0_7, %c0_8, %c0_9] : memref<1x128x512xbf16, #tpu.memory_space<vmem>>, vector<1x128x512xbf16>
    %11 = vector.shape_cast %10 : vector<1x128x512xbf16> to vector<128x512xbf16>
    %12 = vector.shape_cast %9 : vector<128x512xbf16> to vector<1x128x512xbf16>
    tpu.vector_store %arg4[%c0_7, %c0_8, %c0_9], %12 {strides = array<i32>} : memref<1x128x512xbf16, #tpu.memory_space<vmem>>, vector<1x128x512xbf16>,
    return
  }
  func.func @transform_0(%arg0: i32) -> (i32, i32, i32) {
    %c0_i32 = arith.constant 0 : i32
    %c0_i32_0 = arith.constant 0 : i32
    %c0_i32_1 = arith.constant 0 : i32
    return %arg0, %c0_i32, %c0_i32_0 : i32, i32, i32
  }
  func.func @transform_1(%arg0: i32) -> (i32, i32) {
    %c0_i32 = arith.constant 0 : i32
    %c0_i32_0 = arith.constant 0 : i32
    %c0_i32_1 = arith.constant 0 : i32
    return %c0_i32, %c0_i32_0 : i32, i32
  }
  func.func @transform_2(%arg0: i32) -> (i32, i32) {
    %c0_i32 = arith.constant 0 : i32
    %c0_i32_0 = arith.constant 0 : i32
    %c0_i32_1 = arith.constant 0 : i32
    return %c0_i32, %c0_i32_0 : i32, i32
  }
  func.func @transform_3(%arg0: i32) -> (i32, i32, i32) {
    %c0_i32 = arith.constant 0 : i32
    %c0_i32_0 = arith.constant 0 : i32
    %c0_i32_1 = arith.constant 0 : i32
    return %arg0, %c0_i32, %c0_i32_0 : i32, i32, i32
  }
}

module attributes {stable_mosaic.version = 11 : i64} {
  func.func @_tail_kernel(%arg0: i32, %arg1: memref<1x2048x128xbf16, #tpu.memory_space<vmem>>, %arg2: memref<128x2048xbf16, #tpu.memory_space<vmem>>, %arg3: memref<128x1xf32, #tpu.memory_space<vmem>>, %arg4: memref<16x128x256xbf16, #tpu.memory_space<vmem>>, %arg5: memref<1x256xf32, #tpu.memory_space<vmem>>, %arg6: memref<256x128xbf16, #tpu.memory_space<vmem>>, %arg7: memref<1x128xf32, #tpu.memory_space<vmem>>, %arg8: memref<1x8x128xf32, #tpu.memory_space<vmem>>) attributes {dimension_semantics = [#tpu.dimension_semantics<parallel>], iteration_bounds = array<i64: 2>, scalar_prefetch = 0 : i64, scratch_operands = 0 : i64, tpu.core_type = #tpu.core_type<tc>, window_params = [{transform_indices = @transform_0, window_bounds = array<i64: 1, 2048, 128>}, {pipeline_mode = #tpu.pipeline_mode<synchronous>, transform_indices = @transform_1, window_bounds = array<i64: 128, 2048>}, {pipeline_mode = #tpu.pipeline_mode<synchronous>, transform_indices = @transform_2, window_bounds = array<i64: 128, 1>}, {pipeline_mode = #tpu.pipeline_mode<synchronous>, transform_indices = @transform_3, window_bounds = array<i64: 16, 128, 256>}, {pipeline_mode = #tpu.pipeline_mode<synchronous>, transform_indices = @transform_4, window_bounds = array<i64: 1, 256>}, {pipeline_mode = #tpu.pipeline_mode<synchronous>, transform_indices = @transform_5, window_bounds = array<i64: 256, 128>}, {pipeline_mode = #tpu.pipeline_mode<synchronous>, transform_indices = @transform_6, window_bounds = array<i64: 1, 128>}, {transform_indices = @transform_7, window_bounds = array<i64: 1, 8, 128>}]} {
    %c0 = arith.constant 0 : index
    %c0_0 = arith.constant 0 : index
    %0 = vector.load %arg2[%c0, %c0_0] : memref<128x2048xbf16, #tpu.memory_space<vmem>>, vector<128x2048xbf16>
    %c0_1 = arith.constant 0 : index
    %c0_2 = arith.constant 0 : index
    %c0_3 = arith.constant 0 : index
    %1 = vector.load %arg1[%c0_1, %c0_2, %c0_3] : memref<1x2048x128xbf16, #tpu.memory_space<vmem>>, vector<1x2048x128xbf16>
    %2 = vector.shape_cast %1 : vector<1x2048x128xbf16> to vector<2048x128xbf16>
    %cst = arith.constant dense<0.000000e+00> : vector<128x128xf32>
    %3 = tpu.matmul %0, %2, %cst {dimension_numbers = #tpu.dot_dimension_numbers<[1], [0], [0], [1], [0, 0, 1, 1], [], []>} : vector<128x2048xbf16>, vector<2048x128xbf16>, vector<128x128xf32> -> vector<128x128xf32>
    %c0_4 = arith.constant 0 : index
    %c0_5 = arith.constant 0 : index
    %4 = vector.load %arg3[%c0_4, %c0_5] : memref<128x1xf32, #tpu.memory_space<vmem>>, vector<128x1xf32>
    %5 = vector.broadcast %4 : vector<128x1xf32> to vector<128x128xf32>
    %6 = arith.addf %3, %5 : vector<128x128xf32>
    %cst_6 = arith.constant 0.000000e+00 : f32
    %7 = vector.broadcast %cst_6 : f32 to vector<128x128xf32>
    %8 = arith.maximumf %6, %7 : vector<128x128xf32>
    %9 = arith.truncf %8 : vector<128x128xf32> to vector<128x128xbf16>
    %cst_7 = arith.constant 0.000000e+00 : f32
    %10 = vector.broadcast %cst_7 : f32 to vector<1x256xf32>
    %11 = vector.extract_strided_slice %9 {offsets = [0, 0], sizes = [1, 128], strides = [1, 1]} : vector<128x128xbf16> to vector<1x128xbf16>
    %c0_8 = arith.constant 0 : index
    %c0_9 = arith.constant 0 : index
    %c0_10 = arith.constant 0 : index
    %12 = vector.load %arg4[%c0_8, %c0_9, %c0_10] : memref<16x128x256xbf16, #tpu.memory_space<vmem>>, vector<1x128x256xbf16>
    %13 = vector.shape_cast %12 : vector<1x128x256xbf16> to vector<128x256xbf16>
    %cst_11 = arith.constant dense<0.000000e+00> : vector<1x256xf32>
    %14 = tpu.matmul %11, %13, %cst_11 {dimension_numbers = #tpu.dot_dimension_numbers<[1], [0], [0], [1], [0, 0, 1, 1], [], []>} : vector<1x128xbf16>, vector<128x256xbf16>, vector<1x256xf32> -> vector<1x256xf32>
    %15 = arith.addf %10, %14 : vector<1x256xf32>
    %16 = vector.extract_strided_slice %9 {offsets = [1, 0], sizes = [1, 128], strides = [1, 1]} : vector<128x128xbf16> to vector<1x128xbf16>
    %c1 = arith.constant 1 : index
    %c0_12 = arith.constant 0 : index
    %c0_13 = arith.constant 0 : index
    %17 = vector.load %arg4[%c1, %c0_12, %c0_13] : memref<16x128x256xbf16, #tpu.memory_space<vmem>>, vector<1x128x256xbf16>
    %18 = vector.shape_cast %17 : vector<1x128x256xbf16> to vector<128x256xbf16>
    %cst_14 = arith.constant dense<0.000000e+00> : vector<1x256xf32>
    %19 = tpu.matmul %16, %18, %cst_14 {dimension_numbers = #tpu.dot_dimension_numbers<[1], [0], [0], [1], [0, 0, 1, 1], [], []>} : vector<1x128xbf16>, vector<128x256xbf16>, vector<1x256xf32> -> vector<1x256xf32>
    %20 = arith.addf %15, %19 : vector<1x256xf32>
    %21 = vector.extract_strided_slice %9 {offsets = [2, 0], sizes = [1, 128], strides = [1, 1]} : vector<128x128xbf16> to vector<1x128xbf16>
    %c2 = arith.constant 2 : index
    %c0_15 = arith.constant 0 : index
    %c0_16 = arith.constant 0 : index
    %22 = vector.load %arg4[%c2, %c0_15, %c0_16] : memref<16x128x256xbf16, #tpu.memory_space<vmem>>, vector<1x128x256xbf16>
    %23 = vector.shape_cast %22 : vector<1x128x256xbf16> to vector<128x256xbf16>
    %cst_17 = arith.constant dense<0.000000e+00> : vector<1x256xf32>
    %24 = tpu.matmul %21, %23, %cst_17 {dimension_numbers = #tpu.dot_dimension_numbers<[1], [0], [0], [1], [0, 0, 1, 1], [], []>} : vector<1x128xbf16>, vector<128x256xbf16>, vector<1x256xf32> -> vector<1x256xf32>
    %25 = arith.addf %20, %24 : vector<1x256xf32>
    %26 = vector.extract_strided_slice %9 {offsets = [3, 0], sizes = [1, 128], strides = [1, 1]} : vector<128x128xbf16> to vector<1x128xbf16>
    %c3 = arith.constant 3 : index
    %c0_18 = arith.constant 0 : index
    %c0_19 = arith.constant 0 : index
    %27 = vector.load %arg4[%c3, %c0_18, %c0_19] : memref<16x128x256xbf16, #tpu.memory_space<vmem>>, vector<1x128x256xbf16>
    %28 = vector.shape_cast %27 : vector<1x128x256xbf16> to vector<128x256xbf16>
    %cst_20 = arith.constant dense<0.000000e+00> : vector<1x256xf32>
    %29 = tpu.matmul %26, %28, %cst_20 {dimension_numbers = #tpu.dot_dimension_numbers<[1], [0], [0], [1], [0, 0, 1, 1], [], []>} : vector<1x128xbf16>, vector<128x256xbf16>, vector<1x256xf32> -> vector<1x256xf32>
    %30 = arith.addf %25, %29 : vector<1x256xf32>
    %31 = vector.extract_strided_slice %9 {offsets = [4, 0], sizes = [1, 128], strides = [1, 1]} : vector<128x128xbf16> to vector<1x128xbf16>
    %c4 = arith.constant 4 : index
    %c0_21 = arith.constant 0 : index
    %c0_22 = arith.constant 0 : index
    %32 = vector.load %arg4[%c4, %c0_21, %c0_22] : memref<16x128x256xbf16, #tpu.memory_space<vmem>>, vector<1x128x256xbf16>
    %33 = vector.shape_cast %32 : vector<1x128x256xbf16> to vector<128x256xbf16>
    %cst_23 = arith.constant dense<0.000000e+00> : vector<1x256xf32>
    %34 = tpu.matmul %31, %33, %cst_23 {dimension_numbers = #tpu.dot_dimension_numbers<[1], [0], [0], [1], [0, 0, 1, 1], [], []>} : vector<1x128xbf16>, vector<128x256xbf16>, vector<1x256xf32> -> vector<1x256xf32>
    %35 = arith.addf %30, %34 : vector<1x256xf32>
    %36 = vector.extract_strided_slice %9 {offsets = [5, 0], sizes = [1, 128], strides = [1, 1]} : vector<128x128xbf16> to vector<1x128xbf16>
    %c5 = arith.constant 5 : index
    %c0_24 = arith.constant 0 : index
    %c0_25 = arith.constant 0 : index
    %37 = vector.load %arg4[%c5, %c0_24, %c0_25] : memref<16x128x256xbf16, #tpu.memory_space<vmem>>, vector<1x128x256xbf16>
    %38 = vector.shape_cast %37 : vector<1x128x256xbf16> to vector<128x256xbf16>
    %cst_26 = arith.constant dense<0.000000e+00> : vector<1x256xf32>
    %39 = tpu.matmul %36, %38, %cst_26 {dimension_numbers = #tpu.dot_dimension_numbers<[1], [0], [0], [1], [0, 0, 1, 1], [], []>} : vector<1x128xbf16>, vector<128x256xbf16>, vector<1x256xf32> -> vector<1x256xf32>
    %40 = arith.addf %35, %39 : vector<1x256xf32>
    %41 = vector.extract_strided_slice %9 {offsets = [6, 0], sizes = [1, 128], strides = [1, 1]} : vector<128x128xbf16> to vector<1x128xbf16>
    %c6 = arith.constant 6 : index
    %c0_27 = arith.constant 0 : index
    %c0_28 = arith.constant 0 : index
    %42 = vector.load %arg4[%c6, %c0_27, %c0_28] : memref<16x128x256xbf16, #tpu.memory_space<vmem>>, vector<1x128x256xbf16>
    %43 = vector.shape_cast %42 : vector<1x128x256xbf16> to vector<128x256xbf16>
    %cst_29 = arith.constant dense<0.000000e+00> : vector<1x256xf32>
    %44 = tpu.matmul %41, %43, %cst_29 {dimension_numbers = #tpu.dot_dimension_numbers<[1], [0], [0], [1], [0, 0, 1, 1], [], []>} : vector<1x128xbf16>, vector<128x256xbf16>, vector<1x256xf32> -> vector<1x256xf32>
    %45 = arith.addf %40, %44 : vector<1x256xf32>
    %46 = vector.extract_strided_slice %9 {offsets = [7, 0], sizes = [1, 128], strides = [1, 1]} : vector<128x128xbf16> to vector<1x128xbf16>
    %c7 = arith.constant 7 : index
    %c0_30 = arith.constant 0 : index
    %c0_31 = arith.constant 0 : index
    %47 = vector.load %arg4[%c7, %c0_30, %c0_31] : memref<16x128x256xbf16, #tpu.memory_space<vmem>>, vector<1x128x256xbf16>
    %48 = vector.shape_cast %47 : vector<1x128x256xbf16> to vector<128x256xbf16>
    %cst_32 = arith.constant dense<0.000000e+00> : vector<1x256xf32>
    %49 = tpu.matmul %46, %48, %cst_32 {dimension_numbers = #tpu.dot_dimension_numbers<[1], [0], [0], [1], [0, 0, 1, 1], [], []>} : vector<1x128xbf16>, vector<128x256xbf16>, vector<1x256xf32> -> vector<1x256xf32>
    %50 = arith.addf %45, %49 : vector<1x256xf32>
    %51 = vector.extract_strided_slice %9 {offsets = [8, 0], sizes = [1, 128], strides = [1, 1]} : vector<128x128xbf16> to vector<1x128xbf16>
    %c8 = arith.constant 8 : index
    %c0_33 = arith.constant 0 : index
    %c0_34 = arith.constant 0 : index
    %52 = vector.load %arg4[%c8, %c0_33, %c0_34] : memref<16x128x256xbf16, #tpu.memory_space<vmem>>, vector<1x128x256xbf16>
    %53 = vector.shape_cast %52 : vector<1x128x256xbf16> to vector<128x256xbf16>
    %cst_35 = arith.constant dense<0.000000e+00> : vector<1x256xf32>
    %54 = tpu.matmul %51, %53, %cst_35 {dimension_numbers = #tpu.dot_dimension_numbers<[1], [0], [0], [1], [0, 0, 1, 1], [], []>} : vector<1x128xbf16>, vector<128x256xbf16>, vector<1x256xf32> -> vector<1x256xf32>
    %55 = arith.addf %50, %54 : vector<1x256xf32>
    %56 = vector.extract_strided_slice %9 {offsets = [9, 0], sizes = [1, 128], strides = [1, 1]} : vector<128x128xbf16> to vector<1x128xbf16>
    %c9 = arith.constant 9 : index
    %c0_36 = arith.constant 0 : index
    %c0_37 = arith.constant 0 : index
    %57 = vector.load %arg4[%c9, %c0_36, %c0_37] : memref<16x128x256xbf16, #tpu.memory_space<vmem>>, vector<1x128x256xbf16>
    %58 = vector.shape_cast %57 : vector<1x128x256xbf16> to vector<128x256xbf16>
    %cst_38 = arith.constant dense<0.000000e+00> : vector<1x256xf32>
    %59 = tpu.matmul %56, %58, %cst_38 {dimension_numbers = #tpu.dot_dimension_numbers<[1], [0], [0], [1], [0, 0, 1, 1], [], []>} : vector<1x128xbf16>, vector<128x256xbf16>, vector<1x256xf32> -> vector<1x256xf32>
    %60 = arith.addf %55, %59 : vector<1x256xf32>
    %61 = vector.extract_strided_slice %9 {offsets = [10, 0], sizes = [1, 128], strides = [1, 1]} : vector<128x128xbf16> to vector<1x128xbf16>
    %c10 = arith.constant 10 : index
    %c0_39 = arith.constant 0 : index
    %c0_40 = arith.constant 0 : index
    %62 = vector.load %arg4[%c10, %c0_39, %c0_40] : memref<16x128x256xbf16, #tpu.memory_space<vmem>>, vector<1x128x256xbf16>
    %63 = vector.shape_cast %62 : vector<1x128x256xbf16> to vector<128x256xbf16>
    %cst_41 = arith.constant dense<0.000000e+00> : vector<1x256xf32>
    %64 = tpu.matmul %61, %63, %cst_41 {dimension_numbers = #tpu.dot_dimension_numbers<[1], [0], [0], [1], [0, 0, 1, 1], [], []>} : vector<1x128xbf16>, vector<128x256xbf16>, vector<1x256xf32> -> vector<1x256xf32>
    %65 = arith.addf %60, %64 : vector<1x256xf32>
    %66 = vector.extract_strided_slice %9 {offsets = [11, 0], sizes = [1, 128], strides = [1, 1]} : vector<128x128xbf16> to vector<1x128xbf16>
    %c11 = arith.constant 11 : index
    %c0_42 = arith.constant 0 : index
    %c0_43 = arith.constant 0 : index
    %67 = vector.load %arg4[%c11, %c0_42, %c0_43] : memref<16x128x256xbf16, #tpu.memory_space<vmem>>, vector<1x128x256xbf16>
    %68 = vector.shape_cast %67 : vector<1x128x256xbf16> to vector<128x256xbf16>
    %cst_44 = arith.constant dense<0.000000e+00> : vector<1x256xf32>
    %69 = tpu.matmul %66, %68, %cst_44 {dimension_numbers = #tpu.dot_dimension_numbers<[1], [0], [0], [1], [0, 0, 1, 1], [], []>} : vector<1x128xbf16>, vector<128x256xbf16>, vector<1x256xf32> -> vector<1x256xf32>
    %70 = arith.addf %65, %69 : vector<1x256xf32>
    %71 = vector.extract_strided_slice %9 {offsets = [12, 0], sizes = [1, 128], strides = [1, 1]} : vector<128x128xbf16> to vector<1x128xbf16>
    %c12 = arith.constant 12 : index
    %c0_45 = arith.constant 0 : index
    %c0_46 = arith.constant 0 : index
    %72 = vector.load %arg4[%c12, %c0_45, %c0_46] : memref<16x128x256xbf16, #tpu.memory_space<vmem>>, vector<1x128x256xbf16>
    %73 = vector.shape_cast %72 : vector<1x128x256xbf16> to vector<128x256xbf16>
    %cst_47 = arith.constant dense<0.000000e+00> : vector<1x256xf32>
    %74 = tpu.matmul %71, %73, %cst_47 {dimension_numbers = #tpu.dot_dimension_numbers<[1], [0], [0], [1], [0, 0, 1, 1], [], []>} : vector<1x128xbf16>, vector<128x256xbf16>, vector<1x256xf32> -> vector<1x256xf32>
    %75 = arith.addf %70, %74 : vector<1x256xf32>
    %76 = vector.extract_strided_slice %9 {offsets = [13, 0], sizes = [1, 128], strides = [1, 1]} : vector<128x128xbf16> to vector<1x128xbf16>
    %c13 = arith.constant 13 : index
    %c0_48 = arith.constant 0 : index
    %c0_49 = arith.constant 0 : index
    %77 = vector.load %arg4[%c13, %c0_48, %c0_49] : memref<16x128x256xbf16, #tpu.memory_space<vmem>>, vector<1x128x256xbf16>
    %78 = vector.shape_cast %77 : vector<1x128x256xbf16> to vector<128x256xbf16>
    %cst_50 = arith.constant dense<0.000000e+00> : vector<1x256xf32>
    %79 = tpu.matmul %76, %78, %cst_50 {dimension_numbers = #tpu.dot_dimension_numbers<[1], [0], [0], [1], [0, 0, 1, 1], [], []>} : vector<1x128xbf16>, vector<128x256xbf16>, vector<1x256xf32> -> vector<1x256xf32>
    %80 = arith.addf %75, %79 : vector<1x256xf32>
    %81 = vector.extract_strided_slice %9 {offsets = [14, 0], sizes = [1, 128], strides = [1, 1]} : vector<128x128xbf16> to vector<1x128xbf16>
    %c14 = arith.constant 14 : index
    %c0_51 = arith.constant 0 : index
    %c0_52 = arith.constant 0 : index
    %82 = vector.load %arg4[%c14, %c0_51, %c0_52] : memref<16x128x256xbf16, #tpu.memory_space<vmem>>, vector<1x128x256xbf16>
    %83 = vector.shape_cast %82 : vector<1x128x256xbf16> to vector<128x256xbf16>
    %cst_53 = arith.constant dense<0.000000e+00> : vector<1x256xf32>
    %84 = tpu.matmul %81, %83, %cst_53 {dimension_numbers = #tpu.dot_dimension_numbers<[1], [0], [0], [1], [0, 0, 1, 1], [], []>} : vector<1x128xbf16>, vector<128x256xbf16>, vector<1x256xf32> -> vector<1x256xf32>
    %85 = arith.addf %80, %84 : vector<1x256xf32>
    %86 = vector.extract_strided_slice %9 {offsets = [15, 0], sizes = [1, 128], strides = [1, 1]} : vector<128x128xbf16> to vector<1x128xbf16>
    %c15 = arith.constant 15 : index
    %c0_54 = arith.constant 0 : index
    %c0_55 = arith.constant 0 : index
    %87 = vector.load %arg4[%c15, %c0_54, %c0_55] : memref<16x128x256xbf16, #tpu.memory_space<vmem>>, vector<1x128x256xbf16>
    %88 = vector.shape_cast %87 : vector<1x128x256xbf16> to vector<128x256xbf16>
    %cst_56 = arith.constant dense<0.000000e+00> : vector<1x256xf32>
    %89 = tpu.matmul %86, %88, %cst_56 {dimension_numbers = #tpu.dot_dimension_numbers<[1], [0], [0], [1], [0, 0, 1, 1], [], []>} : vector<1x128xbf16>, vector<128x256xbf16>, vector<1x256xf32> -> vector<1x256xf32>
    %90 = arith.addf %85, %89 : vector<1x256xf32>
    %c0_57 = arith.constant 0 : index
    %c0_58 = arith.constant 0 : index
    %91 = vector.load %arg5[%c0_57, %c0_58] : memref<1x256xf32, #tpu.memory_space<vmem>>, vector<1x256xf32>
    %92 = arith.addf %90, %91 : vector<1x256xf32>
    %cst_59 = arith.constant 0.000000e+00 : f32
    %93 = vector.broadcast %cst_59 : f32 to vector<1x256xf32>
    %94 = arith.maximumf %92, %93 : vector<1x256xf32>
    %95 = arith.truncf %94 : vector<1x256xf32> to vector<1x256xbf16>
    %c0_60 = arith.constant 0 : index
    %c0_61 = arith.constant 0 : index
    %96 = vector.load %arg6[%c0_60, %c0_61] : memref<256x128xbf16, #tpu.memory_space<vmem>>, vector<256x128xbf16>
    %cst_62 = arith.constant dense<0.000000e+00> : vector<1x128xf32>
    %97 = tpu.matmul %95, %96, %cst_62 {dimension_numbers = #tpu.dot_dimension_numbers<[1], [0], [0], [1], [0, 0, 1, 1], [], []>} : vector<1x256xbf16>, vector<256x128xbf16>, vector<1x128xf32> -> vector<1x128xf32>
    %c0_63 = arith.constant 0 : index
    %c0_64 = arith.constant 0 : index
    %98 = vector.load %arg7[%c0_63, %c0_64] : memref<1x128xf32, #tpu.memory_space<vmem>>, vector<1x128xf32>
    %99 = arith.addf %97, %98 : vector<1x128xf32>
    %100 = vector.shape_cast %99 : vector<1x128xf32> to vector<1x128xf32>
    %101 = vector.broadcast %100 : vector<1x128xf32> to vector<8x128xf32>
    %c0_65 = arith.constant 0 : index
    %c0_66 = arith.constant 0 : index
    %c0_67 = arith.constant 0 : index
    %102 = vector.load %arg8[%c0_65, %c0_66, %c0_67] : memref<1x8x128xf32, #tpu.memory_space<vmem>>, vector<1x8x128xf32>
    %103 = vector.shape_cast %102 : vector<1x8x128xf32> to vector<8x128xf32>
    %104 = vector.shape_cast %101 : vector<8x128xf32> to vector<1x8x128xf32>
    tpu.vector_store %arg8[%c0_65, %c0_66, %c0_67], %104 {strides = array<i32>} : memref<1x8x128xf32, #tpu.memory_space<vmem>>, vector<1x8x128xf32>,
    return
  }
  func.func @transform_0(%arg0: i32) -> (i32, i32, i32) {
    %c0_i32 = arith.constant 0 : i32
    %c0_i32_0 = arith.constant 0 : i32
    %c0_i32_1 = arith.constant 0 : i32
    return %arg0, %c0_i32, %c0_i32_0 : i32, i32, i32
  }
  func.func @transform_1(%arg0: i32) -> (i32, i32) {
    %c0_i32 = arith.constant 0 : i32
    %c0_i32_0 = arith.constant 0 : i32
    %c0_i32_1 = arith.constant 0 : i32
    return %c0_i32, %c0_i32_0 : i32, i32
  }
  func.func @transform_2(%arg0: i32) -> (i32, i32) {
    %c0_i32 = arith.constant 0 : i32
    %c0_i32_0 = arith.constant 0 : i32
    %c0_i32_1 = arith.constant 0 : i32
    return %c0_i32, %c0_i32_0 : i32, i32
  }
  func.func @transform_3(%arg0: i32) -> (i32, i32, i32) {
    %c0_i32 = arith.constant 0 : i32
    %c0_i32_0 = arith.constant 0 : i32
    %c0_i32_1 = arith.constant 0 : i32
    %c0_i32_2 = arith.constant 0 : i32
    return %c0_i32, %c0_i32_0, %c0_i32_1 : i32, i32, i32
  }
  func.func @transform_4(%arg0: i32) -> (i32, i32) {
    %c0_i32 = arith.constant 0 : i32
    %c0_i32_0 = arith.constant 0 : i32
    %c0_i32_1 = arith.constant 0 : i32
    return %c0_i32, %c0_i32_0 : i32, i32
  }
  func.func @transform_5(%arg0: i32) -> (i32, i32) {
    %c0_i32 = arith.constant 0 : i32
    %c0_i32_0 = arith.constant 0 : i32
    %c0_i32_1 = arith.constant 0 : i32
    return %c0_i32, %c0_i32_0 : i32, i32
  }
  func.func @transform_6(%arg0: i32) -> (i32, i32) {
    %c0_i32 = arith.constant 0 : i32
    %c0_i32_0 = arith.constant 0 : i32
    %c0_i32_1 = arith.constant 0 : i32
    return %c0_i32, %c0_i32_0 : i32, i32
  }
  func.func @transform_7(%arg0: i32) -> (i32, i32, i32) {
    %c0_i32 = arith.constant 0 : i32
    %c0_i32_0 = arith.constant 0 : i32
    %c0_i32_1 = arith.constant 0 : i32
    return %arg0, %c0_i32, %c0_i32_0 : i32, i32, i32
  }
}

</mosaic_0001>

<llo_original>
// kernel: encoder_forward.2
$region0: #{encoder_forward.2}
  #allocation0 [shape = 'u32[]', space=smem, size = 0x4, offset = 0x4, fixed_abs, tag = 'smem constant byte address 0x4 - core index']
  #allocation1 [shape = 'u32[144,128]{1,0:T(1,128)}', space=vmem, size = 0x12000, scoped, tag = 'internal scratch']
  %s0 = inlined_call_operand.vmem [shape: bf16[2,256,512], index: 0, kind: input, shape index: {}]
  %s1 = inlined_call_operand.vmem [shape: bf16[128,256], index: 1, kind: input, shape index: {}]
  %s2 = inlined_call_operand.vmem [shape: f32[128,1], index: 2, kind: input, shape index: {}]
  %s3 = inlined_call_operand.vmem [shape: bf16[2,128,512], index: 3, kind: output, shape index: {}]
  %s4 = sld [smem:[#allocation0]]
  $region45: #{encoder_forward.2} parent=0
    _
  %s6 = ssub.s32 1, %s4
  %s7 = scalar_select 0, %s6, %s4
  loop: start=0, step=1, limit=4
  $region2: #{encoder_forward.2} parent=0 // loop_pre_header
    _
  $region3: #{encoder_forward.2} parent=0 // loop_header
    %s9 = sphi 0, %s13
    %p10 = scmp.ge.s32.totalorder %s9, 4
    %s19 = sphi 0, %s21
    %s22 = sphi 0, %s19
    %s23 = sphi 0, %s22
    %s39 = sphi 0, %s23
    %s43 = sphi 0, %s43
    %s45 = sphi 0, %s43
    %s46 = sphi 0, %s45
    %s60 = sphi 0, %s46
    %s64 = sphi 0, %s64
    %s66 = sphi 0, %s64
    %s67 = sphi 0, %s66
    %s81 = sphi 0, %s67
    %s87 = sphi 0, %s89
    %s90 = sphi 0, %s87
    %s91 = sphi 0, %s90
    %s107 = sphi 0, %s91
  $region4: #{encoder_forward.2} parent=0 // loop_header_branch
    %12 = sbr.rel (%p10) target = $region8
  $region5: #{encoder_forward.2} parent=0 // loop_body
    %s14 = ssub.s32 %s9, 1
    %s15 = ssub.s32 %s9, 2
    %s16 = sadd.s32 %s9, 1
    %s17 = ssub.s32 %s9, %s16
    %p18 = scmp.eq.s32.totalorder %s17, 0
    %s20 = sadd.s32 %s19, 1
    %s21 = scalar_select %p18, %s19, %s20
    %p24 = pneg %p18
    %p25 = scmp.eq.s32.totalorder %s9, 1
    %p26 = por %p24, %p25
    %p27 = scmp.ne.s32.totalorder %s19, %s22
    %p28 = scmp.eq.s32.totalorder %s9, 0
    %p29 = por %p27, %p28
    %p30 = scmp.ne.s32.totalorder %s19, %s22
    %p31 = scmp.eq.s32.totalorder %s14, 1
    %p32 = por %p30, %p31
    %p33 = scmp.ne.s32.totalorder %s22, %s23
    %p34 = scmp.eq.s32.totalorder %s14, 0
    %p35 = por %p33, %p34
    %p36 = scmp.ne.s32.totalorder %s22, %s23
    %p37 = scmp.eq.s32.totalorder %s15, 1
    %p38 = por %p36, %p37
    %p40 = scmp.ne.s32.totalorder %s23, %s39
    %p41 = scmp.eq.s32.totalorder %s15, 0
    %p42 = por %p40, %p41
    %s44 = sadd.s32 %s43, 1
    %p47 = scmp.eq.s32.totalorder %s9, 1
    %p48 = scmp.ne.s32.totalorder %s43, %s45
    %p49 = scmp.eq.s32.totalorder %s9, 0
    %p50 = por %p48, %p49
    %p51 = scmp.ne.s32.totalorder %s43, %s45
    %p52 = scmp.eq.s32.totalorder %s14, 1
    %p53 = por %p51, %p52
    %p54 = scmp.ne.s32.totalorder %s45, %s46
    %p55 = scmp.eq.s32.totalorder %s14, 0
    %p56 = por %p54, %p55
    %p57 = scmp.ne.s32.totalorder %s45, %s46
    %p58 = scmp.eq.s32.totalorder %s15, 1
    %p59 = por %p57, %p58
    %p61 = scmp.ne.s32.totalorder %s46, %s60
    %p62 = scmp.eq.s32.totalorder %s15, 0
    %p63 = por %p61, %p62
    %s65 = sadd.s32 %s64, 1
    %p68 = scmp.eq.s32.totalorder %s9, 1
    %p69 = scmp.ne.s32.totalorder %s64, %s66
    %p70 = scmp.eq.s32.totalorder %s9, 0
    %p71 = por %p69, %p70
    %p72 = scmp.ne.s32.totalorder %s64, %s66
    %p73 = scmp.eq.s32.totalorder %s14, 1
    %p74 = por %p72, %p73
    %p75 = scmp.ne.s32.totalorder %s66, %s67
    %p76 = scmp.eq.s32.totalorder %s14, 0
    %p77 = por %p75, %p76
    %p78 = scmp.ne.s32.totalorder %s66, %s67
    %p79 = scmp.eq.s32.totalorder %s15, 1
    %p80 = por %p78, %p79
    %p82 = scmp.ne.s32.totalorder %s67, %s81
    %p83 = scmp.eq.s32.totalorder %s15, 0
    %p84 = por %p82, %p83
    %s85 = ssub.s32 %s9, %s16
    %p86 = scmp.eq.s32.totalorder %s85, 0
    %s88 = sadd.s32 %s87, 1
    %s89 = scalar_select %p86, %s87, %s88
    %p92 = pneg %p86
    %p93 = scmp.eq.s32.totalorder %s9, 1
    %p94 = por %p92, %p93
    %p95 = scmp.ne.s32.totalorder %s87, %s90
    %p96 = scmp.eq.s32.totalorder %s9, 0
    %p97 = por %p95, %p96
    %p98 = scmp.ne.s32.totalorder %s87, %s90
    %p99 = scmp.eq.s32.totalorder %s14, 1
    %p100 = por %p98, %p99
    %p101 = scmp.ne.s32.totalorder %s90, %s91
    %p102 = scmp.eq.s32.totalorder %s14, 0
    %p103 = por %p101, %p102
    %p104 = scmp.ne.s32.totalorder %s90, %s91
    %p105 = scmp.eq.s32.totalorder %s15, 1
    %p106 = por %p104, %p105
    %p108 = scmp.ne.s32.totalorder %s91, %s107
    %p109 = scmp.eq.s32.totalorder %s15, 0
    %p110 = por %p108, %p109
    %p111 = scmp.le.s32.totalorder 1, %s9
    %p112 = scmp.lt.s32.totalorder %s9, 3
    %p113 = pnand %p111, %p112
    %p114 = pneg %p113
    // Predicated region
    $region9: #{encoder_forward.2} parent=5 // pred_check
      _
    $region10: #{encoder_forward.2} parent=5 // pred_check_branch
      %116 = sbr.rel (%p113) target = $region12
    $region11: #{encoder_forward.2} parent=5 // pred_region
      %s117 = ssub.s32 %s9, 1
      // Predicated region
      $region13: #{encoder_forward.2} parent=11 // pred_check
        %p118 = pneg %p56
      $region14: #{encoder_forward.2} parent=11 // pred_check_branch
        %120 = sbr.rel (%p118) target = $region16
      $region15: #{encoder_forward.2} parent=11 // pred_region
        _
      $region16: #{encoder_forward.2} parent=11 // pred_fallthru
        _
      // Predicated region
      $region17: #{encoder_forward.2} parent=11 // pred_check
        %p121 = pneg %p77
      $region18: #{encoder_forward.2} parent=11 // pred_check_branch
        %123 = sbr.rel (%p121) target = $region20
      $region19: #{encoder_forward.2} parent=11 // pred_region
        _
      $region20: #{encoder_forward.2} parent=11 // pred_fallthru
        _
    $region12: #{encoder_forward.2} parent=5 // pred_fallthru
      _
    %p124 = scmp.lt.s32.totalorder %s9, 2
    // Predicated region
    $region21: #{encoder_forward.2} parent=5 // pred_check
      %p125 = pneg %p124
    $region22: #{encoder_forward.2} parent=5 // pred_check_branch
      %127 = sbr.rel (%p125) target = $region24
    $region23: #{encoder_forward.2} parent=5 // pred_region
      // Predicated region
      $region25: #{encoder_forward.2} parent=23 // pred_check
        %p128 = pneg %p29
      $region26: #{encoder_forward.2} parent=23 // pred_check_branch
        %130 = sbr.rel (%p128) target = $region28
      $region27: #{encoder_forward.2} parent=23 // pred_region
        %p131 = scmp.lt.s32.totalorder %s9, 1
        %s132 = scalar_select %p131, %s9, 1
        %s133 = smul.addr %s132, 128
        %s134 = smul.addr %s133, 4
        %s135 = scalar_lea.vmem %s0, %s134
      $region28: #{encoder_forward.2} parent=23 // pred_fallthru
        _
    $region24: #{encoder_forward.2} parent=5 // pred_fallthru
      _
    %p136 = scmp.le.s32.totalorder 1, %s9
    %p137 = scmp.lt.s32.totalorder %s9, 3
    %p138 = pnand %p136, %p137
    %p139 = pneg %p138
    // Predicated region
    $region29: #{encoder_forward.2} parent=5 // pred_check
      _
    $region30: #{encoder_forward.2} parent=5 // pred_check_branch
      %141 = sbr.rel (%p138) target = $region32
    $region31: #{encoder_forward.2} parent=5 // pred_region
      %s142 = ssub.s32 %s9, 1
      %p143 = scmp.lt.s32.totalorder %s14, 1
      %s144 = scalar_select %p143, %s14, 1
      %s145 = smul.addr %s144, 128
      %s146 = smul.addr %s145, 4
      %s147 = scalar_lea.vmem %s0, %s146
      %p148 = pneg %p35
      %p149 = pneg %p32
      %p150 = pneg %p56
      %p151 = pneg %p53
      %p152 = pneg %p77
      %p153 = pneg %p74
      %p154 = pneg %p103
      %p155 = pneg %p100
      %p156 = scmp.lt.s32.totalorder %s14, 1
      %s157 = scalar_select %p156, %s14, 1
      %s158 = smul.addr %s157, 64
      %s159 = smul.addr %s158, 4
      %s160 = scalar_lea.vmem %s3, %s159
      %p161 = scmp.lt.s32.totalorder %s14, 1
      %s162 = scalar_select %p161, %s14, 1
      %s163 = smul.addr %s162, 128
      %s164 = smul.addr %s163, 4
      %s165 = scalar_lea.vmem %s0, %s164
      %p166 = scmp.lt.s32.totalorder %s14, 1
      %s167 = scalar_select %p166, %s14, 1
      %s168 = smul.addr %s167, 64
      %s169 = smul.addr %s168, 4
      %s170 = scalar_lea.vmem %s3, %s169
      %v171 = vld [vmem:[%s1] sm:$0xff]
      %v172 = vld [vmem:[%s1 + $0x8] sm:$0xff]
      %v173 = vld [vmem:[%s1 + $0x10] sm:$0xff]
      %v174 = vld [vmem:[%s1 + $0x18] sm:$0xff]
      %v175 = vld [vmem:[%s1 + $0x20] sm:$0xff]
      %v176 = vld [vmem:[%s1 + $0x28] sm:$0xff]
      %v177 = vld [vmem:[%s1 + $0x30] sm:$0xff]
      %v178 = vld [vmem:[%s1 + $0x38] sm:$0xff]
      %v179 = vld [vmem:[%s1 + $0x40] sm:$0xff]
      %v180 = vld [vmem:[%s1 + $0x48] sm:$0xff]
      %v181 = vld [vmem:[%s1 + $0x50] sm:$0xff]
      %v182 = vld [vmem:[%s1 + $0x58] sm:$0xff]
      %v183 = vld [vmem:[%s1 + $0x60] sm:$0xff]
      %v184 = vld [vmem:[%s1 + $0x68] sm:$0xff]
      %v185 = vld [vmem:[%s1 + $0x70] sm:$0xff]
      %v186 = vld [vmem:[%s1 + $0x78] sm:$0xff]
      %v187 = vld [vmem:[%s165] sm:$0xff]
      %v188 = vld [vmem:[%s165 + $0x8] sm:$0xff]
      %v189 = vld [vmem:[%s165 + $0x10] sm:$0xff]
      %v190 = vld [vmem:[%s165 + $0x18] sm:$0xff]
      %v191 = vld [vmem:[%s165 + $0x20] sm:$0xff]
      %v192 = vld [vmem:[%s165 + $0x28] sm:$0xff]
      %v193 = vld [vmem:[%s165 + $0x30] sm:$0xff]
      %v194 = vld [vmem:[%s165 + $0x38] sm:$0xff]
      %v195 = vld [vmem:[%s165 + $0x40] sm:$0xff]
      %v196 = vld [vmem:[%s165 + $0x48] sm:$0xff]
      %v197 = vld [vmem:[%s165 + $0x50] sm:$0xff]
      %v198 = vld [vmem:[%s165 + $0x58] sm:$0xff]
      %v199 = vld [vmem:[%s165 + $0x60] sm:$0xff]
      %v200 = vld [vmem:[%s165 + $0x68] sm:$0xff]
      %v201 = vld [vmem:[%s165 + $0x70] sm:$0xff]
      %v202 = vld [vmem:[%s165 + $0x78] sm:$0xff]
      %v203 = vld [vmem:[%s165 + $0x80] sm:$0xff]
      %v204 = vld [vmem:[%s165 + $0x88] sm:$0xff]
      %v205 = vld [vmem:[%s165 + $0x90] sm:$0xff]
      %v206 = vld [vmem:[%s165 + $0x98] sm:$0xff]
      %v207 = vld [vmem:[%s165 + $0xa0] sm:$0xff]
      %v208 = vld [vmem:[%s165 + $0xa8] sm:$0xff]
      %v209 = vld [vmem:[%s165 + $0xb0] sm:$0xff]
      %v210 = vld [vmem:[%s165 + $0xb8] sm:$0xff]
      %v211 = vld [vmem:[%s165 + $0xc0] sm:$0xff]
      %v212 = vld [vmem:[%s165 + $0xc8] sm:$0xff]
      %v213 = vld [vmem:[%s165 + $0xd0] sm:$0xff]
      %v214 = vld [vmem:[%s165 + $0xd8] sm:$0xff]
      %v215 = vld [vmem:[%s165 + $0xe0] sm:$0xff]
      %v216 = vld [vmem:[%s165 + $0xe8] sm:$0xff]
      %v217 = vld [vmem:[%s165 + $0xf0] sm:$0xff]
      %v218 = vld [vmem:[%s165 + $0xf8] sm:$0xff]
      %v219 = vld [vmem:[%s165 + $0x100] sm:$0xff]
      %v220 = vld [vmem:[%s165 + $0x108] sm:$0xff]
      %v221 = vld [vmem:[%s165 + $0x110] sm:$0xff]
      %v222 = vld [vmem:[%s165 + $0x118] sm:$0xff]
      %v223 = vld [vmem:[%s165 + $0x120] sm:$0xff]
      %v224 = vld [vmem:[%s165 + $0x128] sm:$0xff]
      %v225 = vld [vmem:[%s165 + $0x130] sm:$0xff]
      %v226 = vld [vmem:[%s165 + $0x138] sm:$0xff]
      %v227 = vld [vmem:[%s165 + $0x140] sm:$0xff]
      %v228 = vld [vmem:[%s165 + $0x148] sm:$0xff]
      %v229 = vld [vmem:[%s165 + $0x150] sm:$0xff]
      %v230 = vld [vmem:[%s165 + $0x158] sm:$0xff]
      %v231 = vld [vmem:[%s165 + $0x160] sm:$0xff]
      %v232 = vld [vmem:[%s165 + $0x168] sm:$0xff]
      %v233 = vld [vmem:[%s165 + $0x170] sm:$0xff]
      %v234 = vld [vmem:[%s165 + $0x178] sm:$0xff]
      %v235 = vld [vmem:[%s165 + $0x180] sm:$0xff]
      %v236 = vld [vmem:[%s165 + $0x188] sm:$0xff]
      %v237 = vld [vmem:[%s165 + $0x190] sm:$0xff]
      %v238 = vld [vmem:[%s165 + $0x198] sm:$0xff]
      %v239 = vld [vmem:[%s165 + $0x1a0] sm:$0xff]
      %v240 = vld [vmem:[%s165 + $0x1a8] sm:$0xff]
      %v241 = vld [vmem:[%s165 + $0x1b0] sm:$0xff]
      %v242 = vld [vmem:[%s165 + $0x1b8] sm:$0xff]
      %v243 = vld [vmem:[%s165 + $0x1c0] sm:$0xff]
      %v244 = vld [vmem:[%s165 + $0x1c8] sm:$0xff]
      %v245 = vld [vmem:[%s165 + $0x1d0] sm:$0xff]
      %v246 = vld [vmem:[%s165 + $0x1d8] sm:$0xff]
      %v247 = vld [vmem:[%s165 + $0x1e0] sm:$0xff]
      %v248 = vld [vmem:[%s165 + $0x1e8] sm:$0xff]
      %v249 = vld [vmem:[%s165 + $0x1f0] sm:$0xff]
      %v250 = vld [vmem:[%s165 + $0x1f8] sm:$0xff]
      %v251 = vld [vmem:[%s2] sm:$0xff]
      %v252 = vld [vmem:[%s2 + $0x8] sm:$0xff]
      %v253 = vld [vmem:[%s2 + $0x10] sm:$0xff]
      %v254 = vld [vmem:[%s2 + $0x18] sm:$0xff]
      %v255 = vld [vmem:[%s2 + $0x20] sm:$0xff]
      %v256 = vld [vmem:[%s2 + $0x28] sm:$0xff]
      %v257 = vld [vmem:[%s2 + $0x30] sm:$0xff]
      %v258 = vld [vmem:[%s2 + $0x38] sm:$0xff]
      %v259 = vld [vmem:[%s2 + $0x40] sm:$0xff]
      %v260 = vld [vmem:[%s2 + $0x48] sm:$0xff]
      %v261 = vld [vmem:[%s2 + $0x50] sm:$0xff]
      %v262 = vld [vmem:[%s2 + $0x58] sm:$0xff]
      %v263 = vld [vmem:[%s2 + $0x60] sm:$0xff]
      %v264 = vld [vmem:[%s2 + $0x68] sm:$0xff]
      %v265 = vld [vmem:[%s2 + $0x70] sm:$0xff]
      %v266 = vld [vmem:[%s2 + $0x78] sm:$0xff]
      %268 = vset.pattern.permute.xlu0 0
      %269 = vperm.xlu0 %268, %v251
      %v270 = vpop.permute.xlu0 %269
      %273 = vset.pattern.permute.xlu0 0
      %274 = vperm.xlu0 %273, %v252
      %v275 = vpop.permute.xlu0 %274
      %278 = vset.pattern.permute.xlu0 0
      %279 = vperm.xlu0 %278, %v253
      %v280 = vpop.permute.xlu0 %279
      %283 = vset.pattern.permute.xlu0 0
      %284 = vperm.xlu0 %283, %v254
      %v285 = vpop.permute.xlu0 %284
      %288 = vset.pattern.permute.xlu0 0
      %289 = vperm.xlu0 %288, %v255
      %v290 = vpop.permute.xlu0 %289
      %293 = vset.pattern.permute.xlu0 0
      %294 = vperm.xlu0 %293, %v256
      %v295 = vpop.permute.xlu0 %294
      %298 = vset.pattern.permute.xlu0 0
      %299 = vperm.xlu0 %298, %v257
      %v300 = vpop.permute.xlu0 %299
      %303 = vset.pattern.permute.xlu0 0
      %304 = vperm.xlu0 %303, %v258
      %v305 = vpop.permute.xlu0 %304
      %308 = vset.pattern.permute.xlu0 0
      %309 = vperm.xlu0 %308, %v259
      %v310 = vpop.permute.xlu0 %309
      %313 = vset.pattern.permute.xlu0 0
      %314 = vperm.xlu0 %313, %v260
      %v315 = vpop.permute.xlu0 %314
      %318 = vset.pattern.permute.xlu0 0
      %319 = vperm.xlu0 %318, %v261
      %v320 = vpop.permute.xlu0 %319
      %323 = vset.pattern.permute.xlu0 0
      %324 = vperm.xlu0 %323, %v262
      %v325 = vpop.permute.xlu0 %324
      %328 = vset.pattern.permute.xlu0 0
      %329 = vperm.xlu0 %328, %v263
      %v330 = vpop.permute.xlu0 %329
      %333 = vset.pattern.permute.xlu0 0
      %334 = vperm.xlu0 %333, %v264
      %v335 = vpop.permute.xlu0 %334
      %338 = vset.pattern.permute.xlu0 0
      %339 = vperm.xlu0 %338, %v265
      %v340 = vpop.permute.xlu0 %339
      %343 = vset.pattern.permute.xlu0 0
      %344 = vperm.xlu0 %343, %v266
      %v345 = vpop.permute.xlu0 %344
      %v363 = vunpack.c.l.b16 %v171
      %v364 = vunpack.c.h.b16 %v171
      %v365 = vunpack.c.l.b16 %v172
      %v366 = vunpack.c.h.b16 %v172
      %v367 = vunpack.c.l.b16 %v173
      %v368 = vunpack.c.h.b16 %v173
      %v369 = vunpack.c.l.b16 %v174
      %v370 = vunpack.c.h.b16 %v174
      %v371 = vunpack.c.l.b16 %v175
      %v372 = vunpack.c.h.b16 %v175
      %v373 = vunpack.c.l.b16 %v176
      %v374 = vunpack.c.h.b16 %v176
      %v375 = vunpack.c.l.b16 %v177
      %v376 = vunpack.c.h.b16 %v177
      %v377 = vunpack.c.l.b16 %v178
      %v378 = vunpack.c.h.b16 %v178
      %v379 = vunpack.c.l.b16 %v179
      %v380 = vunpack.c.h.b16 %v179
      %v381 = vunpack.c.l.b16 %v180
      %v382 = vunpack.c.h.b16 %v180
      %v383 = vunpack.c.l.b16 %v181
      %v384 = vunpack.c.h.b16 %v181
      %v385 = vunpack.c.l.b16 %v182
      %v386 = vunpack.c.h.b16 %v182
      %v387 = vunpack.c.l.b16 %v183
      %v388 = vunpack.c.h.b16 %v183
      %v389 = vunpack.c.l.b16 %v184
      %v390 = vunpack.c.h.b16 %v184
      %v391 = vunpack.c.l.b16 %v185
      %v392 = vunpack.c.h.b16 %v185
      %v393 = vunpack.c.l.b16 %v186
      %v394 = vunpack.c.h.b16 %v186
      %v395 = vpack.c.b16 %v365, %v363
      %v396 = vpack.c.b16 %v366, %v364
      %v397 = vpack.c.b16 %v369, %v367
      %v398 = vpack.c.b16 %v370, %v368
      %v399 = vpack.c.b16 %v373, %v371
      %v400 = vpack.c.b16 %v374, %v372
      %v401 = vpack.c.b16 %v377, %v375
      %v402 = vpack.c.b16 %v378, %v376
      %v403 = vpack.c.b16 %v381, %v379
      %v404 = vpack.c.b16 %v382, %v380
      %v405 = vpack.c.b16 %v385, %v383
      %v406 = vpack.c.b16 %v386, %v384
      %v407 = vpack.c.b16 %v389, %v387
      %v408 = vpack.c.b16 %v390, %v388
      %v409 = vpack.c.b16 %v393, %v391
      %v410 = vpack.c.b16 %v394, %v392
      %v491 = vunpack.c.l.b16 %v187
      %v492 = vunpack.c.h.b16 %v187
      %v493 = vunpack.c.l.b16 %v188
      %v494 = vunpack.c.h.b16 %v188
      %v495 = vunpack.c.l.b16 %v189
      %v496 = vunpack.c.h.b16 %v189
      %v497 = vunpack.c.l.b16 %v190
      %v498 = vunpack.c.h.b16 %v190
      %v499 = vunpack.c.l.b16 %v191
      %v500 = vunpack.c.h.b16 %v191
      %v501 = vunpack.c.l.b16 %v192
      %v502 = vunpack.c.h.b16 %v192
      %v503 = vunpack.c.l.b16 %v193
      %v504 = vunpack.c.h.b16 %v193
      %v505 = vunpack.c.l.b16 %v194
      %v506 = vunpack.c.h.b16 %v194
      %v507 = vunpack.c.l.b16 %v195
      %v508 = vunpack.c.h.b16 %v195
      %v509 = vunpack.c.l.b16 %v196
      %v510 = vunpack.c.h.b16 %v196
      %v511 = vunpack.c.l.b16 %v197
      %v512 = vunpack.c.h.b16 %v197
      %v513 = vunpack.c.l.b16 %v198
      %v514 = vunpack.c.h.b16 %v198
      %v515 = vunpack.c.l.b16 %v199
      %v516 = vunpack.c.h.b16 %v199
      %v517 = vunpack.c.l.b16 %v200
      %v518 = vunpack.c.h.b16 %v200
      %v519 = vunpack.c.l.b16 %v201
      %v520 = vunpack.c.h.b16 %v201
      %v521 = vunpack.c.l.b16 %v202
      %v522 = vunpack.c.h.b16 %v202
      %v523 = vunpack.c.l.b16 %v203
      %v524 = vunpack.c.h.b16 %v203
      %v525 = vunpack.c.l.b16 %v204
      %v526 = vunpack.c.h.b16 %v204
      %v527 = vunpack.c.l.b16 %v205
      %v528 = vunpack.c.h.b16 %v205
      %v529 = vunpack.c.l.b16 %v206
      %v530 = vunpack.c.h.b16 %v206
      %v531 = vunpack.c.l.b16 %v207
      %v532 = vunpack.c.h.b16 %v207
      %v533 = vunpack.c.l.b16 %v208
      %v534 = vunpack.c.h.b16 %v208
      %v535 = vunpack.c.l.b16 %v209
      %v536 = vunpack.c.h.b16 %v209
      %v537 = vunpack.c.l.b16 %v210
      %v538 = vunpack.c.h.b16 %v210
      %v539 = vunpack.c.l.b16 %v211
      %v540 = vunpack.c.h.b16 %v211
      %v541 = vunpack.c.l.b16 %v212
      %v542 = vunpack.c.h.b16 %v212
      %v543 = vunpack.c.l.b16 %v213
      %v544 = vunpack.c.h.b16 %v213
      %v545 = vunpack.c.l.b16 %v214
      %v546 = vunpack.c.h.b16 %v214
      %v547 = vunpack.c.l.b16 %v215
      %v548 = vunpack.c.h.b16 %v215
      %v549 = vunpack.c.l.b16 %v216
      %v550 = vunpack.c.h.b16 %v216
      %v551 = vunpack.c.l.b16 %v217
      %v552 = vunpack.c.h.b16 %v217
      %v553 = vunpack.c.l.b16 %v218
      %v554 = vunpack.c.h.b16 %v218
      %v555 = vunpack.c.l.b16 %v219
      %v556 = vunpack.c.h.b16 %v219
      %v557 = vunpack.c.l.b16 %v220
      %v558 = vunpack.c.h.b16 %v220
      %v559 = vunpack.c.l.b16 %v221
      %v560 = vunpack.c.h.b16 %v221
      %v561 = vunpack.c.l.b16 %v222
      %v562 = vunpack.c.h.b16 %v222
      %v563 = vunpack.c.l.b16 %v223
      %v564 = vunpack.c.h.b16 %v223
      %v565 = vunpack.c.l.b16 %v224
      %v566 = vunpack.c.h.b16 %v224
      %v567 = vunpack.c.l.b16 %v225
      %v568 = vunpack.c.h.b16 %v225
      %v569 = vunpack.c.l.b16 %v226
      %v570 = vunpack.c.h.b16 %v226
      %v571 = vunpack.c.l.b16 %v227
      %v572 = vunpack.c.h.b16 %v227
      %v573 = vunpack.c.l.b16 %v228
      %v574 = vunpack.c.h.b16 %v228
      %v575 = vunpack.c.l.b16 %v229
      %v576 = vunpack.c.h.b16 %v229
      %v577 = vunpack.c.l.b16 %v230
      %v578 = vunpack.c.h.b16 %v230
      %v579 = vunpack.c.l.b16 %v231
      %v580 = vunpack.c.h.b16 %v231
      %v581 = vunpack.c.l.b16 %v232
      %v582 = vunpack.c.h.b16 %v232
      %v583 = vunpack.c.l.b16 %v233
      %v584 = vunpack.c.h.b16 %v233
      %v585 = vunpack.c.l.b16 %v234
      %v586 = vunpack.c.h.b16 %v234
      %v587 = vunpack.c.l.b16 %v235
      %v588 = vunpack.c.h.b16 %v235
      %v589 = vunpack.c.l.b16 %v236
      %v590 = vunpack.c.h.b16 %v236
      %v591 = vunpack.c.l.b16 %v237
      %v592 = vunpack.c.h.b16 %v237
      %v593 = vunpack.c.l.b16 %v238
      %v594 = vunpack.c.h.b16 %v238
      %v595 = vunpack.c.l.b16 %v239
      %v596 = vunpack.c.h.b16 %v239
      %v597 = vunpack.c.l.b16 %v240
      %v598 = vunpack.c.h.b16 %v240
      %v599 = vunpack.c.l.b16 %v241
      %v600 = vunpack.c.h.b16 %v241
      %v601 = vunpack.c.l.b16 %v242
      %v602 = vunpack.c.h.b16 %v242
      %v603 = vunpack.c.l.b16 %v243
      %v604 = vunpack.c.h.b16 %v243
      %v605 = vunpack.c.l.b16 %v244
      %v606 = vunpack.c.h.b16 %v244
      %v607 = vunpack.c.l.b16 %v245
      %v608 = vunpack.c.h.b16 %v245
      %v609 = vunpack.c.l.b16 %v246
      %v610 = vunpack.c.h.b16 %v246
      %v611 = vunpack.c.l.b16 %v247
      %v612 = vunpack.c.h.b16 %v247
      %v613 = vunpack.c.l.b16 %v248
      %v614 = vunpack.c.h.b16 %v248
      %v615 = vunpack.c.l.b16 %v249
      %v616 = vunpack.c.h.b16 %v249
      %v617 = vunpack.c.l.b16 %v250
      %v618 = vunpack.c.h.b16 %v250
      %v619 = vpack.c.b16 %v495, %v491
      %v620 = vpack.c.b16 %v496, %v492
      %v621 = vpack.c.b16 %v497, %v493
      %v622 = vpack.c.b16 %v498, %v494
      %v623 = vpack.c.b16 %v503, %v499
      %v624 = vpack.c.b16 %v504, %v500
      %v625 = vpack.c.b16 %v505, %v501
      %v626 = vpack.c.b16 %v506, %v502
      %v627 = vpack.c.b16 %v511, %v507
      %v628 = vpack.c.b16 %v512, %v508
      %v629 = vpack.c.b16 %v513, %v509
      %v630 = vpack.c.b16 %v514, %v510
      %v631 = vpack.c.b16 %v519, %v515
      %v632 = vpack.c.b16 %v520, %v516
      %v633 = vpack.c.b16 %v521, %v517
      %v634 = vpack.c.b16 %v522, %v518
      %v635 = vpack.c.b16 %v527, %v523
      %v636 = vpack.c.b16 %v528, %v524
      %v637 = vpack.c.b16 %v529, %v525
      %v638 = vpack.c.b16 %v530, %v526
      %v639 = vpack.c.b16 %v535, %v531
      %v640 = vpack.c.b16 %v536, %v532
      %v641 = vpack.c.b16 %v537, %v533
      %v642 = vpack.c.b16 %v538, %v534
      %v643 = vpack.c.b16 %v543, %v539
      %v644 = vpack.c.b16 %v544, %v540
      %v645 = vpack.c.b16 %v545, %v541
      %v646 = vpack.c.b16 %v546, %v542
      %v647 = vpack.c.b16 %v551, %v547
      %v648 = vpack.c.b16 %v552, %v548
      %v649 = vpack.c.b16 %v553, %v549
      %v650 = vpack.c.b16 %v554, %v550
      %v651 = vpack.c.b16 %v559, %v555
      %v652 = vpack.c.b16 %v560, %v556
      %v653 = vpack.c.b16 %v561, %v557
      %v654 = vpack.c.b16 %v562, %v558
      %v655 = vpack.c.b16 %v567, %v563
      %v656 = vpack.c.b16 %v568, %v564
      %v657 = vpack.c.b16 %v569, %v565
      %v658 = vpack.c.b16 %v570, %v566
      %v659 = vpack.c.b16 %v575, %v571
      %v660 = vpack.c.b16 %v576, %v572
      %v661 = vpack.c.b16 %v577, %v573
      %v662 = vpack.c.b16 %v578, %v574
      %v663 = vpack.c.b16 %v583, %v579
      %v664 = vpack.c.b16 %v584, %v580
      %v665 = vpack.c.b16 %v585, %v581
      %v666 = vpack.c.b16 %v586, %v582
      %v667 = vpack.c.b16 %v591, %v587
      %v668 = vpack.c.b16 %v592, %v588
      %v669 = vpack.c.b16 %v593, %v589
      %v670 = vpack.c.b16 %v594, %v590
      %v671 = vpack.c.b16 %v599, %v595
      %v672 = vpack.c.b16 %v600, %v596
      %v673 = vpack.c.b16 %v601, %v597
      %v674 = vpack.c.b16 %v602, %v598
      %v675 = vpack.c.b16 %v607, %v603
      %v676 = vpack.c.b16 %v608, %v604
      %v677 = vpack.c.b16 %v609, %v605
      %v678 = vpack.c.b16 %v610, %v606
      %v679 = vpack.c.b16 %v615, %v611
      %v680 = vpack.c.b16 %v616, %v612
      %v681 = vpack.c.b16 %v617, %v613
      %v682 = vpack.c.b16 %v618, %v614
      %747 = vmatprep.subr.bf16.mxu0 %v620
      %748 = vmatpush1.bf16.msra.mxu0 %v619
      %749 = vmatprep.subr.bf16.mxu0 %v624
      %750 = vmatpush1.bf16.msra.mxu0 %v623
      %751 = vmatprep.subr.bf16.mxu0 %v628
      %752 = vmatpush1.bf16.msra.mxu0 %v627
      %753 = vmatprep.subr.bf16.mxu0 %v632
      %754 = vmatpush1.bf16.msra.mxu0 %v631
      %755 = vmatprep.subr.bf16.mxu0 %v636
      %756 = vmatpush1.bf16.msra.mxu0 %v635
      %757 = vmatprep.subr.bf16.mxu0 %v640
      %758 = vmatpush1.bf16.msra.mxu0 %v639
      %759 = vmatprep.subr.bf16.mxu0 %v644
      %760 = vmatpush1.bf16.msra.mxu0 %v643
      %761 = vmatprep.subr.bf16.mxu0 %v648
      %762 = vmatpush1.bf16.msra.mxu0 %v647
      %763 = vmatprep.subr.bf16.mxu0 %v652
      %764 = vmatpush1.bf16.msra.mxu0 %v651
      %765 = vmatprep.subr.bf16.mxu0 %v656
      %766 = vmatpush1.bf16.msra.mxu0 %v655
      %767 = vmatprep.subr.bf16.mxu0 %v660
      %768 = vmatpush1.bf16.msra.mxu0 %v659
      %769 = vmatprep.subr.bf16.mxu0 %v664
      %770 = vmatpush1.bf16.msra.mxu0 %v663
      %771 = vmatprep.subr.bf16.mxu0 %v668
      %772 = vmatpush1.bf16.msra.mxu0 %v667
      %773 = vmatprep.subr.bf16.mxu0 %v672
      %774 = vmatpush1.bf16.msra.mxu0 %v671
      %775 = vmatprep.subr.bf16.mxu0 %v676
      %776 = vmatpush1.bf16.msra.mxu0 %v675
      %777 = vmatprep.subr.bf16.mxu0 %v680
      %778 = vmatpush1.bf16.msra.mxu0 %v679
      %779 = vmatprep.mubr.bf16.mxu0 %v396
      %780 = vmatmul.mubr.bf16.gmra.mrb[0].mxu0 %v395
      %v781 = vpop.f32.mrb[0].mxu0
      %v782 = vadd.f32 %v270, %v781
      %v783 = vpop.f32.mrb[0].mxu0
      %v784 = vadd.f32 %v270, %v783
      %v785 = vpop.f32.mrb[0].mxu0
      %v786 = vadd.f32 %v275, %v785
      %v787 = vpop.f32.mrb[0].mxu0
      %v788 = vadd.f32 %v275, %v787
      %789 = vmatprep.mubr.bf16.mxu0 %v398
      %790 = vmatmul.mubr.bf16.gmra.mrb[0].mxu0 %v397
      %v791 = vpop.f32.mrb[0].mxu0
      %v792 = vadd.f32 %v280, %v791
      %v793 = vpop.f32.mrb[0].mxu0
      %v794 = vadd.f32 %v280, %v793
      %v795 = vpop.f32.mrb[0].mxu0
      %v796 = vadd.f32 %v285, %v795
      %v797 = vpop.f32.mrb[0].mxu0
      %v798 = vadd.f32 %v285, %v797
      %799 = vmatprep.mubr.bf16.mxu0 %v400
      %800 = vmatmul.mubr.bf16.gmra.mrb[0].mxu0 %v399
      %v801 = vpop.f32.mrb[0].mxu0
      %v802 = vadd.f32 %v290, %v801
      %v803 = vpop.f32.mrb[0].mxu0
      %v804 = vadd.f32 %v290, %v803
      %v805 = vpop.f32.mrb[0].mxu0
      %v806 = vadd.f32 %v295, %v805
      %v807 = vpop.f32.mrb[0].mxu0
      %v808 = vadd.f32 %v295, %v807
      %809 = vmatprep.mubr.bf16.mxu0 %v402
      %810 = vmatmul.mubr.bf16.gmra.mrb[0].mxu0 %v401
      %v811 = vpop.f32.mrb[0].mxu0
      %v812 = vadd.f32 %v300, %v811
      %v813 = vpop.f32.mrb[0].mxu0
      %v814 = vadd.f32 %v300, %v813
      %v815 = vpop.f32.mrb[0].mxu0
      %v816 = vadd.f32 %v305, %v815
      %v817 = vpop.f32.mrb[0].mxu0
      %v818 = vadd.f32 %v305, %v817
      %819 = vmatprep.mubr.bf16.mxu0 %v404
      %820 = vmatmul.mubr.bf16.gmra.mrb[0].mxu0 %v403
      %v821 = vpop.f32.mrb[0].mxu0
      %v822 = vadd.f32 %v310, %v821
      %v823 = vpop.f32.mrb[0].mxu0
      %v824 = vadd.f32 %v310, %v823
      %v825 = vpop.f32.mrb[0].mxu0
      %v826 = vadd.f32 %v315, %v825
      %v827 = vpop.f32.mrb[0].mxu0
      %v828 = vadd.f32 %v315, %v827
      %829 = vmatprep.mubr.bf16.mxu0 %v406
      %830 = vmatmul.mubr.bf16.gmra.mrb[0].mxu0 %v405
      %v831 = vpop.f32.mrb[0].mxu0
      %v832 = vadd.f32 %v320, %v831
      %v833 = vpop.f32.mrb[0].mxu0
      %v834 = vadd.f32 %v320, %v833
      %v835 = vpop.f32.mrb[0].mxu0
      %v836 = vadd.f32 %v325, %v835
      %v837 = vpop.f32.mrb[0].mxu0
      %v838 = vadd.f32 %v325, %v837
      %839 = vmatprep.mubr.bf16.mxu0 %v408
      %840 = vmatmul.mubr.bf16.gmra.mrb[0].mxu0 %v407
      %v841 = vpop.f32.mrb[0].mxu0
      %v842 = vadd.f32 %v330, %v841
      %v843 = vpop.f32.mrb[0].mxu0
      %v844 = vadd.f32 %v330, %v843
      %v845 = vpop.f32.mrb[0].mxu0
      %v846 = vadd.f32 %v335, %v845
      %v847 = vpop.f32.mrb[0].mxu0
      %v848 = vadd.f32 %v335, %v847
      %849 = vmatprep.mubr.bf16.mxu0 %v410
      %850 = vmatmul.mubr.bf16.gmra.mrb[0].mxu0 %v409
      %v851 = vpop.f32.mrb[0].mxu0
      %v852 = vadd.f32 %v340, %v851
      %v853 = vpop.f32.mrb[0].mxu0
      %v854 = vadd.f32 %v340, %v853
      %v855 = vpop.f32.mrb[0].mxu0
      %v856 = vadd.f32 %v345, %v855
      %v857 = vpop.f32.mrb[0].mxu0
      %v858 = vadd.f32 %v345, %v857
      %859 = vdwg.mxu0
      %860 = vmatprep.subr.bf16.mxu0 %v622
      %861 = vmatpush1.bf16.msra.mxu0 %v621
      %862 = vmatprep.subr.bf16.mxu0 %v626
      %863 = vmatpush1.bf16.msra.mxu0 %v625
      %864 = vmatprep.subr.bf16.mxu0 %v630
      %865 = vmatpush1.bf16.msra.mxu0 %v629
      %866 = vmatprep.subr.bf16.mxu0 %v634
      %867 = vmatpush1.bf16.msra.mxu0 %v633
      %868 = vmatprep.subr.bf16.mxu0 %v638
      %869 = vmatpush1.bf16.msra.mxu0 %v637
      %870 = vmatprep.subr.bf16.mxu0 %v642
      %871 = vmatpush1.bf16.msra.mxu0 %v641
      %872 = vmatprep.subr.bf16.mxu0 %v646
      %873 = vmatpush1.bf16.msra.mxu0 %v645
      %874 = vmatprep.subr.bf16.mxu0 %v650
      %875 = vmatpush1.bf16.msra.mxu0 %v649
      %876 = vmatprep.subr.bf16.mxu0 %v654
      %877 = vmatpush1.bf16.msra.mxu0 %v653
      %878 = vmatprep.subr.bf16.mxu0 %v658
      %879 = vmatpush1.bf16.msra.mxu0 %v657
      %880 = vmatprep.subr.bf16.mxu0 %v662
      %881 = vmatpush1.bf16.msra.mxu0 %v661
      %882 = vmatprep.subr.bf16.mxu0 %v666
      %883 = vmatpush1.bf16.msra.mxu0 %v665
      %884 = vmatprep.subr.bf16.mxu0 %v670
      %885 = vmatpush1.bf16.msra.mxu0 %v669
      %886 = vmatprep.subr.bf16.mxu0 %v674
      %887 = vmatpush1.bf16.msra.mxu0 %v673
      %888 = vmatprep.subr.bf16.mxu0 %v678
      %889 = vmatpush1.bf16.msra.mxu0 %v677
      %890 = vmatprep.subr.bf16.mxu0 %v682
      %891 = vmatpush1.bf16.msra.mxu0 %v681
      %892 = vmatprep.mubr.bf16.mxu0 %v396
      %893 = vmatmul.mubr.bf16.gmra.mrb[0].mxu0 %v395
      %v894 = vpop.f32.mrb[0].mxu0
      %v895 = vadd.f32 %v270, %v894
      %v896 = vpop.f32.mrb[0].mxu0
      %v897 = vadd.f32 %v270, %v896
      %v898 = vpop.f32.mrb[0].mxu0
      %v899 = vadd.f32 %v275, %v898
      %v900 = vpop.f32.mrb[0].mxu0
      %v901 = vadd.f32 %v275, %v900
      %902 = vmatprep.mubr.bf16.mxu0 %v398
      %903 = vmatmul.mubr.bf16.gmra.mrb[0].mxu0 %v397
      %v904 = vpop.f32.mrb[0].mxu0
      %v905 = vadd.f32 %v280, %v904
      %v906 = vpop.f32.mrb[0].mxu0
      %v907 = vadd.f32 %v280, %v906
      %v908 = vpop.f32.mrb[0].mxu0
      %v909 = vadd.f32 %v285, %v908
      %v910 = vpop.f32.mrb[0].mxu0
      %v911 = vadd.f32 %v285, %v910
      %912 = vmatprep.mubr.bf16.mxu0 %v400
      %913 = vmatmul.mubr.bf16.gmra.mrb[0].mxu0 %v399
      %v914 = vpop.f32.mrb[0].mxu0
      %v915 = vadd.f32 %v290, %v914
      %v916 = vpop.f32.mrb[0].mxu0
      %v917 = vadd.f32 %v290, %v916
      %v918 = vpop.f32.mrb[0].mxu0
      %v919 = vadd.f32 %v295, %v918
      %v920 = vpop.f32.mrb[0].mxu0
      %v921 = vadd.f32 %v295, %v920
      %922 = vmatprep.mubr.bf16.mxu0 %v402
      %923 = vmatmul.mubr.bf16.gmra.mrb[0].mxu0 %v401
      %v924 = vpop.f32.mrb[0].mxu0
      %v925 = vadd.f32 %v300, %v924
      %v926 = vpop.f32.mrb[0].mxu0
      %v927 = vadd.f32 %v300, %v926
      %v928 = vpop.f32.mrb[0].mxu0
      %v929 = vadd.f32 %v305, %v928
      %v930 = vpop.f32.mrb[0].mxu0
      %v931 = vadd.f32 %v305, %v930
      %932 = vmatprep.mubr.bf16.mxu0 %v404
      %933 = vmatmul.mubr.bf16.gmra.mrb[0].mxu0 %v403
      %v934 = vpop.f32.mrb[0].mxu0
      %v935 = vadd.f32 %v310, %v934
      %v936 = vpop.f32.mrb[0].mxu0
      %v937 = vadd.f32 %v310, %v936
      %v938 = vpop.f32.mrb[0].mxu0
      %v939 = vadd.f32 %v315, %v938
      %v940 = vpop.f32.mrb[0].mxu0
      %v941 = vadd.f32 %v315, %v940
      %942 = vmatprep.mubr.bf16.mxu0 %v406
      %943 = vmatmul.mubr.bf16.gmra.mrb[0].mxu0 %v405
      %v944 = vpop.f32.mrb[0].mxu0
      %v945 = vadd.f32 %v320, %v944
      %v946 = vpop.f32.mrb[0].mxu0
      %v947 = vadd.f32 %v320, %v946
      %v948 = vpop.f32.mrb[0].mxu0
      %v949 = vadd.f32 %v325, %v948
      %v950 = vpop.f32.mrb[0].mxu0
      %v951 = vadd.f32 %v325, %v950
      %952 = vmatprep.mubr.bf16.mxu0 %v408
      %953 = vmatmul.mubr.bf16.gmra.mrb[0].mxu0 %v407
      %v954 = vpop.f32.mrb[0].mxu0
      %v955 = vadd.f32 %v330, %v954
      %v956 = vpop.f32.mrb[0].mxu0
      %v957 = vadd.f32 %v330, %v956
      %v958 = vpop.f32.mrb[0].mxu0
      %v959 = vadd.f32 %v335, %v958
      %v960 = vpop.f32.mrb[0].mxu0
      %v961 = vadd.f32 %v335, %v960
      %962 = vmatprep.mubr.bf16.mxu0 %v410
      %963 = vmatmul.mubr.bf16.gmra.mrb[0].mxu0 %v409
      %v964 = vpop.f32.mrb[0].mxu0
      %v965 = vadd.f32 %v340, %v964
      %v966 = vpop.f32.mrb[0].mxu0
      %v967 = vadd.f32 %v340, %v966
      %v968 = vpop.f32.mrb[0].mxu0
      %v969 = vadd.f32 %v345, %v968
      %v970 = vpop.f32.mrb[0].mxu0
      %v971 = vadd.f32 %v345, %v970
      %972 = vdwg.mxu0
      %v973 = vmax.f32 %v782, 0.0
      %v974 = vmax.f32 %v784, 0.0
      %v975 = vmax.f32 %v895, 0.0
      %v976 = vmax.f32 %v897, 0.0
      %v977 = vmax.f32 %v786, 0.0
      %v978 = vmax.f32 %v788, 0.0
      %v979 = vmax.f32 %v899, 0.0
      %v980 = vmax.f32 %v901, 0.0
      %v981 = vmax.f32 %v792, 0.0
      %v982 = vmax.f32 %v794, 0.0
      %v983 = vmax.f32 %v905, 0.0
      %v984 = vmax.f32 %v907, 0.0
      %v985 = vmax.f32 %v796, 0.0
      %v986 = vmax.f32 %v798, 0.0
      %v987 = vmax.f32 %v909, 0.0
      %v988 = vmax.f32 %v911, 0.0
      %v989 = vmax.f32 %v802, 0.0
      %v990 = vmax.f32 %v804, 0.0
      %v991 = vmax.f32 %v915, 0.0
      %v992 = vmax.f32 %v917, 0.0
      %v993 = vmax.f32 %v806, 0.0
      %v994 = vmax.f32 %v808, 0.0
      %v995 = vmax.f32 %v919, 0.0
      %v996 = vmax.f32 %v921, 0.0
      %v997 = vmax.f32 %v812, 0.0
      %v998 = vmax.f32 %v814, 0.0
      %v999 = vmax.f32 %v925, 0.0
      %v1000 = vmax.f32 %v927, 0.0
      %v1001 = vmax.f32 %v816, 0.0
      %v1002 = vmax.f32 %v818, 0.0
      %v1003 = vmax.f32 %v929, 0.0
      %v1004 = vmax.f32 %v931, 0.0
      %v1005 = vmax.f32 %v822, 0.0
      %v1006 = vmax.f32 %v824, 0.0
      %v1007 = vmax.f32 %v935, 0.0
      %v1008 = vmax.f32 %v937, 0.0
      %v1009 = vmax.f32 %v826, 0.0
      %v1010 = vmax.f32 %v828, 0.0
      %v1011 = vmax.f32 %v939, 0.0
      %v1012 = vmax.f32 %v941, 0.0
      %v1013 = vmax.f32 %v832, 0.0
      %v1014 = vmax.f32 %v834, 0.0
      %v1015 = vmax.f32 %v945, 0.0
      %v1016 = vmax.f32 %v947, 0.0
      %v1017 = vmax.f32 %v836, 0.0
      %v1018 = vmax.f32 %v838, 0.0
      %v1019 = vmax.f32 %v949, 0.0
      %v1020 = vmax.f32 %v951, 0.0
      %v1021 = vmax.f32 %v842, 0.0
      %v1022 = vmax.f32 %v844, 0.0
      %v1023 = vmax.f32 %v955, 0.0
      %v1024 = vmax.f32 %v957, 0.0
      %v1025 = vmax.f32 %v846, 0.0
      %v1026 = vmax.f32 %v848, 0.0
      %v1027 = vmax.f32 %v959, 0.0
      %v1028 = vmax.f32 %v961, 0.0
      %v1029 = vmax.f32 %v852, 0.0
      %v1030 = vmax.f32 %v854, 0.0
      %v1031 = vmax.f32 %v965, 0.0
      %v1032 = vmax.f32 %v967, 0.0
      %v1033 = vmax.f32 %v856, 0.0
      %v1034 = vmax.f32 %v858, 0.0
      %v1035 = vmax.f32 %v969, 0.0
      %v1036 = vmax.f32 %v971, 0.0
      %v1037 = vpack.c.bf16 %v977, %v973
      %v1038 = vpack.c.bf16 %v978, %v974
      %v1039 = vpack.c.bf16 %v979, %v975
      %v1040 = vpack.c.bf16 %v980, %v976
      %v1041 = vpack.c.bf16 %v985, %v981
      %v1042 = vpack.c.bf16 %v986, %v982
      %v1043 = vpack.c.bf16 %v987, %v983
      %v1044 = vpack.c.bf16 %v988, %v984
      %v1045 = vpack.c.bf16 %v993, %v989
      %v1046 = vpack.c.bf16 %v994, %v990
      %v1047 = vpack.c.bf16 %v995, %v991
      %v1048 = vpack.c.bf16 %v996, %v992
      %v1049 = vpack.c.bf16 %v1001, %v997
      %v1050 = vpack.c.bf16 %v1002, %v998
      %v1051 = vpack.c.bf16 %v1003, %v999
      %v1052 = vpack.c.bf16 %v1004, %v1000
      %v1053 = vpack.c.bf16 %v1009, %v1005
      %v1054 = vpack.c.bf16 %v1010, %v1006
      %v1055 = vpack.c.bf16 %v1011, %v1007
      %v1056 = vpack.c.bf16 %v1012, %v1008
      %v1057 = vpack.c.bf16 %v1017, %v1013
      %v1058 = vpack.c.bf16 %v1018, %v1014
      %v1059 = vpack.c.bf16 %v1019, %v1015
      %v1060 = vpack.c.bf16 %v1020, %v1016
      %v1061 = vpack.c.bf16 %v1025, %v1021
      %v1062 = vpack.c.bf16 %v1026, %v1022
      %v1063 = vpack.c.bf16 %v1027, %v1023
      %v1064 = vpack.c.bf16 %v1028, %v1024
      %v1065 = vpack.c.bf16 %v1033, %v1029
      %v1066 = vpack.c.bf16 %v1034, %v1030
      %v1067 = vpack.c.bf16 %v1035, %v1031
      %v1068 = vpack.c.bf16 %v1036, %v1032
      %v1101 = vunpack.c.l.b16 %v1037
      %v1102 = vunpack.c.l.b16 %v1038
      %v1103 = vunpack.c.l.b16 %v1039
      %v1104 = vunpack.c.l.b16 %v1040
      %v1105 = vunpack.c.h.b16 %v1037
      %v1106 = vunpack.c.h.b16 %v1038
      %v1107 = vunpack.c.h.b16 %v1039
      %v1108 = vunpack.c.h.b16 %v1040
      %v1109 = vunpack.c.l.b16 %v1041
      %v1110 = vunpack.c.l.b16 %v1042
      %v1111 = vunpack.c.l.b16 %v1043
      %v1112 = vunpack.c.l.b16 %v1044
      %v1113 = vunpack.c.h.b16 %v1041
      %v1114 = vunpack.c.h.b16 %v1042
      %v1115 = vunpack.c.h.b16 %v1043
      %v1116 = vunpack.c.h.b16 %v1044
      %v1117 = vunpack.c.l.b16 %v1045
      %v1118 = vunpack.c.l.b16 %v1046
      %v1119 = vunpack.c.l.b16 %v1047
      %v1120 = vunpack.c.l.b16 %v1048
      %v1121 = vunpack.c.h.b16 %v1045
      %v1122 = vunpack.c.h.b16 %v1046
      %v1123 = vunpack.c.h.b16 %v1047
      %v1124 = vunpack.c.h.b16 %v1048
      %v1125 = vunpack.c.l.b16 %v1049
      %v1126 = vunpack.c.l.b16 %v1050
      %v1127 = vunpack.c.l.b16 %v1051
      %v1128 = vunpack.c.l.b16 %v1052
      %v1129 = vunpack.c.h.b16 %v1049
      %v1130 = vunpack.c.h.b16 %v1050
      %v1131 = vunpack.c.h.b16 %v1051
      %v1132 = vunpack.c.h.b16 %v1052
      %v1133 = vunpack.c.l.b16 %v1053
      %v1134 = vunpack.c.l.b16 %v1054
      %v1135 = vunpack.c.l.b16 %v1055
      %v1136 = vunpack.c.l.b16 %v1056
      %v1137 = vunpack.c.h.b16 %v1053
      %v1138 = vunpack.c.h.b16 %v1054
      %v1139 = vunpack.c.h.b16 %v1055
      %v1140 = vunpack.c.h.b16 %v1056
      %v1141 = vunpack.c.l.b16 %v1057
      %v1142 = vunpack.c.l.b16 %v1058
      %v1143 = vunpack.c.l.b16 %v1059
      %v1144 = vunpack.c.l.b16 %v1060
      %v1145 = vunpack.c.h.b16 %v1057
      %v1146 = vunpack.c.h.b16 %v1058
      %v1147 = vunpack.c.h.b16 %v1059
      %v1148 = vunpack.c.h.b16 %v1060
      %v1149 = vunpack.c.l.b16 %v1061
      %v1150 = vunpack.c.l.b16 %v1062
      %v1151 = vunpack.c.l.b16 %v1063
      %v1152 = vunpack.c.l.b16 %v1064
      %v1153 = vunpack.c.h.b16 %v1061
      %v1154 = vunpack.c.h.b16 %v1062
      %v1155 = vunpack.c.h.b16 %v1063
      %v1156 = vunpack.c.h.b16 %v1064
      %v1157 = vunpack.c.l.b16 %v1065
      %v1158 = vunpack.c.l.b16 %v1066
      %v1159 = vunpack.c.l.b16 %v1067
      %v1160 = vunpack.c.l.b16 %v1068
      %v1161 = vunpack.c.h.b16 %v1065
      %v1162 = vunpack.c.h.b16 %v1066
      %v1163 = vunpack.c.h.b16 %v1067
      %v1164 = vunpack.c.h.b16 %v1068
      %v1165 = vpack.c.b16 %v1102, %v1101
      %v1166 = vpack.c.b16 %v1104, %v1103
      %v1167 = vpack.c.b16 %v1106, %v1105
      %v1168 = vpack.c.b16 %v1108, %v1107
      %v1169 = vpack.c.b16 %v1110, %v1109
      %v1170 = vpack.c.b16 %v1112, %v1111
      %v1171 = vpack.c.b16 %v1114, %v1113
      %v1172 = vpack.c.b16 %v1116, %v1115
      %v1173 = vpack.c.b16 %v1118, %v1117
      %v1174 = vpack.c.b16 %v1120, %v1119
      %v1175 = vpack.c.b16 %v1122, %v1121
      %v1176 = vpack.c.b16 %v1124, %v1123
      %v1177 = vpack.c.b16 %v1126, %v1125
      %v1178 = vpack.c.b16 %v1128, %v1127
      %v1179 = vpack.c.b16 %v1130, %v1129
      %v1180 = vpack.c.b16 %v1132, %v1131
      %v1181 = vpack.c.b16 %v1134, %v1133
      %v1182 = vpack.c.b16 %v1136, %v1135
      %v1183 = vpack.c.b16 %v1138, %v1137
      %v1184 = vpack.c.b16 %v1140, %v1139
      %v1185 = vpack.c.b16 %v1142, %v1141
      %v1186 = vpack.c.b16 %v1144, %v1143
      %v1187 = vpack.c.b16 %v1146, %v1145
      %v1188 = vpack.c.b16 %v1148, %v1147
      %v1189 = vpack.c.b16 %v1150, %v1149
      %v1190 = vpack.c.b16 %v1152, %v1151
      %v1191 = vpack.c.b16 %v1154, %v1153
      %v1192 = vpack.c.b16 %v1156, %v1155
      %v1193 = vpack.c.b16 %v1158, %v1157
      %v1194 = vpack.c.b16 %v1160, %v1159
      %v1195 = vpack.c.b16 %v1162, %v1161
      %v1196 = vpack.c.b16 %v1164, %v1163
      %1229 = vst [vmem:[%s170] sm:$0xff] %v1165
      %1230 = vst [vmem:[%s170 + $0x8] sm:$0xff] %v1166
      %1231 = vst [vmem:[%s170 + $0x10] sm:$0xff] %v1167
      %1232 = vst [vmem:[%s170 + $0x18] sm:$0xff] %v1168
      %1233 = vst [vmem:[%s170 + $0x20] sm:$0xff] %v1169
      %1234 = vst [vmem:[%s170 + $0x28] sm:$0xff] %v1170
      %1235 = vst [vmem:[%s170 + $0x30] sm:$0xff] %v1171
      %1236 = vst [vmem:[%s170 + $0x38] sm:$0xff] %v1172
      %1237 = vst [vmem:[%s170 + $0x40] sm:$0xff] %v1173
      %1238 = vst [vmem:[%s170 + $0x48] sm:$0xff] %v1174
      %1239 = vst [vmem:[%s170 + $0x50] sm:$0xff] %v1175
      %1240 = vst [vmem:[%s170 + $0x58] sm:$0xff] %v1176
      %1241 = vst [vmem:[%s170 + $0x60] sm:$0xff] %v1177
      %1242 = vst [vmem:[%s170 + $0x68] sm:$0xff] %v1178
      %1243 = vst [vmem:[%s170 + $0x70] sm:$0xff] %v1179
      %1244 = vst [vmem:[%s170 + $0x78] sm:$0xff] %v1180
      %1245 = vst [vmem:[%s170 + $0x80] sm:$0xff] %v1181
      %1246 = vst [vmem:[%s170 + $0x88] sm:$0xff] %v1182
      %1247 = vst [vmem:[%s170 + $0x90] sm:$0xff] %v1183
      %1248 = vst [vmem:[%s170 + $0x98] sm:$0xff] %v1184
      %1249 = vst [vmem:[%s170 + $0xa0] sm:$0xff] %v1185
      %1250 = vst [vmem:[%s170 + $0xa8] sm:$0xff] %v1186
      %1251 = vst [vmem:[%s170 + $0xb0] sm:$0xff] %v1187
      %1252 = vst [vmem:[%s170 + $0xb8] sm:$0xff] %v1188
      %1253 = vst [vmem:[%s170 + $0xc0] sm:$0xff] %v1189
      %1254 = vst [vmem:[%s170 + $0xc8] sm:$0xff] %v1190
      %1255 = vst [vmem:[%s170 + $0xd0] sm:$0xff] %v1191
      %1256 = vst [vmem:[%s170 + $0xd8] sm:$0xff] %v1192
      %1257 = vst [vmem:[%s170 + $0xe0] sm:$0xff] %v1193
      %1258 = vst [vmem:[%s170 + $0xe8] sm:$0xff] %v1194
      %1259 = vst [vmem:[%s170 + $0xf0] sm:$0xff] %v1195
      %1260 = vst [vmem:[%s170 + $0xf8] sm:$0xff] %v1196
      %p1261 = scmp.lt.s32.totalorder %s14, 1
      %s1262 = scalar_select %p1261, %s14, 1
      %s1263 = smul.addr %s1262, 64
      %s1264 = smul.addr %s1263, 4
      %s1265 = scalar_lea.vmem %s3, %s1264
      // Predicated region
      $region33: #{encoder_forward.2} parent=31 // pred_check
        %p1266 = pneg %p100
      $region34: #{encoder_forward.2} parent=31 // pred_check_branch
        %1268 = sbr.rel (%p1266) target = $region36
      $region35: #{encoder_forward.2} parent=31 // pred_region
        _
      $region36: #{encoder_forward.2} parent=31 // pred_fallthru
        _
    $region32: #{encoder_forward.2} parent=5 // pred_fallthru
      _
    %p1269 = scmp.le.s32.totalorder 2, %s9
    // Predicated region
    $region37: #{encoder_forward.2} parent=5 // pred_check
      %p1270 = pneg %p1269
    $region38: #{encoder_forward.2} parent=5 // pred_check_branch
      %1272 = sbr.rel (%p1270) target = $region40
    $region39: #{encoder_forward.2} parent=5 // pred_region
      %s1273 = ssub.s32 %s9, 2
      // Predicated region
      $region41: #{encoder_forward.2} parent=39 // pred_check
        %p1274 = pneg %p106
      $region42: #{encoder_forward.2} parent=39 // pred_check_branch
        %1276 = sbr.rel (%p1274) target = $region44
      $region43: #{encoder_forward.2} parent=39 // pred_region
        %p1277 = scmp.lt.s32.totalorder %s15, 1
        %s1278 = scalar_select %p1277, %s15, 1
        %s1279 = smul.addr %s1278, 64
        %s1280 = smul.addr %s1279, 4
        %s1281 = scalar_lea.vmem %s3, %s1280
      $region44: #{encoder_forward.2} parent=39 // pred_fallthru
        _
    $region40: #{encoder_forward.2} parent=5 // pred_fallthru
      _
  $region6: #{encoder_forward.2} parent=0 // loop_footer
    %s13 = sadd.s32 1, %s9
  $region7: #{encoder_forward.2} parent=0 // loop_footer_branch
    %8 = sbr.rel target = $region3
  $region8: #{encoder_forward.2} parent=0 // loop_exit
    _

// kernel: encoder_forward.3
$region0: #{encoder_forward.3}
  #allocation0 [shape = 'u32[]', space=smem, size = 0x4, offset = 0x4, fixed_abs, tag = 'smem constant byte address 0x4 - core index']
  #allocation1 [shape = 'u32[144,128]{1,0:T(1,128)}', space=vmem, size = 0x12000, scoped, tag = 'internal scratch']
  %s0 = inlined_call_operand.vmem [shape: bf16[2,2048,128], index: 0, kind: input, shape index: {}]
  %s1 = inlined_call_operand.vmem [shape: bf16[128,2048], index: 1, kind: input, shape index: {}]
  %s2 = inlined_call_operand.vmem [shape: f32[128,1], index: 2, kind: input, shape index: {}]
  %s3 = inlined_call_operand.vmem [shape: bf16[16,128,256], index: 3, kind: input, shape index: {}]
  %s4 = inlined_call_operand.vmem [shape: f32[1,256], index: 4, kind: input, shape index: {}]
  %s5 = inlined_call_operand.vmem [shape: bf16[256,128], index: 5, kind: input, shape index: {}]
  %s6 = inlined_call_operand.vmem [shape: f32[1,128], index: 6, kind: input, shape index: {}]
  %s7 = inlined_call_operand.vmem [shape: f32[2,8,128], index: 7, kind: output, shape index: {}]
  %s8 = sld [smem:[#allocation0]]
  $region61: #{encoder_forward.3} parent=0
    _
  %s10 = ssub.s32 1, %s8
  %s11 = scalar_select 0, %s10, %s8
  loop: start=0, step=1, limit=4
  $region2: #{encoder_forward.3} parent=0 // loop_pre_header
    _
  $region3: #{encoder_forward.3} parent=0 // loop_header
    %s13 = sphi 0, %s17
    %p14 = scmp.ge.s32.totalorder %s13, 4
    %s23 = sphi 0, %s25
    %s26 = sphi 0, %s23
    %s27 = sphi 0, %s26
    %s43 = sphi 0, %s27
    %s47 = sphi 0, %s47
    %s49 = sphi 0, %s47
    %s50 = sphi 0, %s49
    %s64 = sphi 0, %s50
    %s68 = sphi 0, %s68
    %s70 = sphi 0, %s68
    %s71 = sphi 0, %s70
    %s85 = sphi 0, %s71
    %s89 = sphi 0, %s89
    %s91 = sphi 0, %s89
    %s92 = sphi 0, %s91
    %s106 = sphi 0, %s92
    %s110 = sphi 0, %s110
    %s112 = sphi 0, %s110
    %s113 = sphi 0, %s112
    %s127 = sphi 0, %s113
    %s131 = sphi 0, %s131
    %s133 = sphi 0, %s131
    %s134 = sphi 0, %s133
    %s148 = sphi 0, %s134
    %s152 = sphi 0, %s152
    %s154 = sphi 0, %s152
    %s155 = sphi 0, %s154
    %s169 = sphi 0, %s155
    %s175 = sphi 0, %s177
    %s178 = sphi 0, %s175
    %s179 = sphi 0, %s178
    %s195 = sphi 0, %s179
  $region4: #{encoder_forward.3} parent=0 // loop_header_branch
    %16 = sbr.rel (%p14) target = $region8
  $region5: #{encoder_forward.3} parent=0 // loop_body
    %s18 = ssub.s32 %s13, 1
    %s19 = ssub.s32 %s13, 2
    %s20 = sadd.s32 %s13, 1
    %s21 = ssub.s32 %s13, %s20
    %p22 = scmp.eq.s32.totalorder %s21, 0
    %s24 = sadd.s32 %s23, 1
    %s25 = scalar_select %p22, %s23, %s24
    %p28 = pneg %p22
    %p29 = scmp.eq.s32.totalorder %s13, 1
    %p30 = por %p28, %p29
    %p31 = scmp.ne.s32.totalorder %s23, %s26
    %p32 = scmp.eq.s32.totalorder %s13, 0
    %p33 = por %p31, %p32
    %p34 = scmp.ne.s32.totalorder %s23, %s26
    %p35 = scmp.eq.s32.totalorder %s18, 1
    %p36 = por %p34, %p35
    %p37 = scmp.ne.s32.totalorder %s26, %s27
    %p38 = scmp.eq.s32.totalorder %s18, 0
    %p39 = por %p37, %p38
    %p40 = scmp.ne.s32.totalorder %s26, %s27
    %p41 = scmp.eq.s32.totalorder %s19, 1
    %p42 = por %p40, %p41
    %p44 = scmp.ne.s32.totalorder %s27, %s43
    %p45 = scmp.eq.s32.totalorder %s19, 0
    %p46 = por %p44, %p45
    %s48 = sadd.s32 %s47, 1
    %p51 = scmp.eq.s32.totalorder %s13, 1
    %p52 = scmp.ne.s32.totalorder %s47, %s49
    %p53 = scmp.eq.s32.totalorder %s13, 0
    %p54 = por %p52, %p53
    %p55 = scmp.ne.s32.totalorder %s47, %s49
    %p56 = scmp.eq.s32.totalorder %s18, 1
    %p57 = por %p55, %p56
    %p58 = scmp.ne.s32.totalorder %s49, %s50
    %p59 = scmp.eq.s32.totalorder %s18, 0
    %p60 = por %p58, %p59
    %p61 = scmp.ne.s32.totalorder %s49, %s50
    %p62 = scmp.eq.s32.totalorder %s19, 1
    %p63 = por %p61, %p62
    %p65 = scmp.ne.s32.totalorder %s50, %s64
    %p66 = scmp.eq.s32.totalorder %s19, 0
    %p67 = por %p65, %p66
    %s69 = sadd.s32 %s68, 1
    %p72 = scmp.eq.s32.totalorder %s13, 1
    %p73 = scmp.ne.s32.totalorder %s68, %s70
    %p74 = scmp.eq.s32.totalorder %s13, 0
    %p75 = por %p73, %p74
    %p76 = scmp.ne.s32.totalorder %s68, %s70
    %p77 = scmp.eq.s32.totalorder %s18, 1
    %p78 = por %p76, %p77
    %p79 = scmp.ne.s32.totalorder %s70, %s71
    %p80 = scmp.eq.s32.totalorder %s18, 0
    %p81 = por %p79, %p80
    %p82 = scmp.ne.s32.totalorder %s70, %s71
    %p83 = scmp.eq.s32.totalorder %s19, 1
    %p84 = por %p82, %p83
    %p86 = scmp.ne.s32.totalorder %s71, %s85
    %p87 = scmp.eq.s32.totalorder %s19, 0
    %p88 = por %p86, %p87
    %s90 = sadd.s32 %s89, 1
    %p93 = scmp.eq.s32.totalorder %s13, 1
    %p94 = scmp.ne.s32.totalorder %s89, %s91
    %p95 = scmp.eq.s32.totalorder %s13, 0
    %p96 = por %p94, %p95
    %p97 = scmp.ne.s32.totalorder %s89, %s91
    %p98 = scmp.eq.s32.totalorder %s18, 1
    %p99 = por %p97, %p98
    %p100 = scmp.ne.s32.totalorder %s91, %s92
    %p101 = scmp.eq.s32.totalorder %s18, 0
    %p102 = por %p100, %p101
    %p103 = scmp.ne.s32.totalorder %s91, %s92
    %p104 = scmp.eq.s32.totalorder %s19, 1
    %p105 = por %p103, %p104
    %p107 = scmp.ne.s32.totalorder %s92, %s106
    %p108 = scmp.eq.s32.totalorder %s19, 0
    %p109 = por %p107, %p108
    %s111 = sadd.s32 %s110, 1
    %p114 = scmp.eq.s32.totalorder %s13, 1
    %p115 = scmp.ne.s32.totalorder %s110, %s112
    %p116 = scmp.eq.s32.totalorder %s13, 0
    %p117 = por %p115, %p116
    %p118 = scmp.ne.s32.totalorder %s110, %s112
    %p119 = scmp.eq.s32.totalorder %s18, 1
    %p120 = por %p118, %p119
    %p121 = scmp.ne.s32.totalorder %s112, %s113
    %p122 = scmp.eq.s32.totalorder %s18, 0
    %p123 = por %p121, %p122
    %p124 = scmp.ne.s32.totalorder %s112, %s113
    %p125 = scmp.eq.s32.totalorder %s19, 1
    %p126 = por %p124, %p125
    %p128 = scmp.ne.s32.totalorder %s113, %s127
    %p129 = scmp.eq.s32.totalorder %s19, 0
    %p130 = por %p128, %p129
    %s132 = sadd.s32 %s131, 1
    %p135 = scmp.eq.s32.totalorder %s13, 1
    %p136 = scmp.ne.s32.totalorder %s131, %s133
    %p137 = scmp.eq.s32.totalorder %s13, 0
    %p138 = por %p136, %p137
    %p139 = scmp.ne.s32.totalorder %s131, %s133
    %p140 = scmp.eq.s32.totalorder %s18, 1
    %p141 = por %p139, %p140
    %p142 = scmp.ne.s32.totalorder %s133, %s134
    %p143 = scmp.eq.s32.totalorder %s18, 0
    %p144 = por %p142, %p143
    %p145 = scmp.ne.s32.totalorder %s133, %s134
    %p146 = scmp.eq.s32.totalorder %s19, 1
    %p147 = por %p145, %p146
    %p149 = scmp.ne.s32.totalorder %s134, %s148
    %p150 = scmp.eq.s32.totalorder %s19, 0
    %p151 = por %p149, %p150
    %s153 = sadd.s32 %s152, 1
    %p156 = scmp.eq.s32.totalorder %s13, 1
    %p157 = scmp.ne.s32.totalorder %s152, %s154
    %p158 = scmp.eq.s32.totalorder %s13, 0
    %p159 = por %p157, %p158
    %p160 = scmp.ne.s32.totalorder %s152, %s154
    %p161 = scmp.eq.s32.totalorder %s18, 1
    %p162 = por %p160, %p161
    %p163 = scmp.ne.s32.totalorder %s154, %s155
    %p164 = scmp.eq.s32.totalorder %s18, 0
    %p165 = por %p163, %p164
    %p166 = scmp.ne.s32.totalorder %s154, %s155
    %p167 = scmp.eq.s32.totalorder %s19, 1
    %p168 = por %p166, %p167
    %p170 = scmp.ne.s32.totalorder %s155, %s169
    %p171 = scmp.eq.s32.totalorder %s19, 0
    %p172 = por %p170, %p171
    %s173 = ssub.s32 %s13, %s20
    %p174 = scmp.eq.s32.totalorder %s173, 0
    %s176 = sadd.s32 %s175, 1
    %s177 = scalar_select %p174, %s175, %s176
    %p180 = pneg %p174
    %p181 = scmp.eq.s32.totalorder %s13, 1
    %p182 = por %p180, %p181
    %p183 = scmp.ne.s32.totalorder %s175, %s178
    %p184 = scmp.eq.s32.totalorder %s13, 0
    %p185 = por %p183, %p184
    %p186 = scmp.ne.s32.totalorder %s175, %s178
    %p187 = scmp.eq.s32.totalorder %s18, 1
    %p188 = por %p186, %p187
    %p189 = scmp.ne.s32.totalorder %s178, %s179
    %p190 = scmp.eq.s32.totalorder %s18, 0
    %p191 = por %p189, %p190
    %p192 = scmp.ne.s32.totalorder %s178, %s179
    %p193 = scmp.eq.s32.totalorder %s19, 1
    %p194 = por %p192, %p193
    %p196 = scmp.ne.s32.totalorder %s179, %s195
    %p197 = scmp.eq.s32.totalorder %s19, 0
    %p198 = por %p196, %p197
    %p199 = scmp.le.s32.totalorder 1, %s13
    %p200 = scmp.lt.s32.totalorder %s13, 3
    %p201 = pnand %p199, %p200
    %p202 = pneg %p201
    // Predicated region
    $region9: #{encoder_forward.3} parent=5 // pred_check
      _
    $region10: #{encoder_forward.3} parent=5 // pred_check_branch
      %204 = sbr.rel (%p201) target = $region12
    $region11: #{encoder_forward.3} parent=5 // pred_region
      %s205 = ssub.s32 %s13, 1
      // Predicated region
      $region13: #{encoder_forward.3} parent=11 // pred_check
        %p206 = pneg %p60
      $region14: #{encoder_forward.3} parent=11 // pred_check_branch
        %208 = sbr.rel (%p206) target = $region16
      $region15: #{encoder_forward.3} parent=11 // pred_region
        _
      $region16: #{encoder_forward.3} parent=11 // pred_fallthru
        _
      // Predicated region
      $region17: #{encoder_forward.3} parent=11 // pred_check
        %p209 = pneg %p81
      $region18: #{encoder_forward.3} parent=11 // pred_check_branch
        %211 = sbr.rel (%p209) target = $region20
      $region19: #{encoder_forward.3} parent=11 // pred_region
        _
      $region20: #{encoder_forward.3} parent=11 // pred_fallthru
        _
      // Predicated region
      $region21: #{encoder_forward.3} parent=11 // pred_check
        %p212 = pneg %p102
      $region22: #{encoder_forward.3} parent=11 // pred_check_branch
        %214 = sbr.rel (%p212) target = $region24
      $region23: #{encoder_forward.3} parent=11 // pred_region
        _
      $region24: #{encoder_forward.3} parent=11 // pred_fallthru
        _
      // Predicated region
      $region25: #{encoder_forward.3} parent=11 // pred_check
        %p215 = pneg %p123
      $region26: #{encoder_forward.3} parent=11 // pred_check_branch
        %217 = sbr.rel (%p215) target = $region28
      $region27: #{encoder_forward.3} parent=11 // pred_region
        _
      $region28: #{encoder_forward.3} parent=11 // pred_fallthru
        _
      // Predicated region
      $region29: #{encoder_forward.3} parent=11 // pred_check
        %p218 = pneg %p144
      $region30: #{encoder_forward.3} parent=11 // pred_check_branch
        %220 = sbr.rel (%p218) target = $region32
      $region31: #{encoder_forward.3} parent=11 // pred_region
        _
      $region32: #{encoder_forward.3} parent=11 // pred_fallthru
        _
      // Predicated region
      $region33: #{encoder_forward.3} parent=11 // pred_check
        %p221 = pneg %p165
      $region34: #{encoder_forward.3} parent=11 // pred_check_branch
        %223 = sbr.rel (%p221) target = $region36
      $region35: #{encoder_forward.3} parent=11 // pred_region
        _
      $region36: #{encoder_forward.3} parent=11 // pred_fallthru
        _
    $region12: #{encoder_forward.3} parent=5 // pred_fallthru
      _
    %p224 = scmp.lt.s32.totalorder %s13, 2
    // Predicated region
    $region37: #{encoder_forward.3} parent=5 // pred_check
      %p225 = pneg %p224
    $region38: #{encoder_forward.3} parent=5 // pred_check_branch
      %227 = sbr.rel (%p225) target = $region40
    $region39: #{encoder_forward.3} parent=5 // pred_region
      // Predicated region
      $region41: #{encoder_forward.3} parent=39 // pred_check
        %p228 = pneg %p33
      $region42: #{encoder_forward.3} parent=39 // pred_check_branch
        %230 = sbr.rel (%p228) target = $region44
      $region43: #{encoder_forward.3} parent=39 // pred_region
        %p231 = scmp.lt.s32.totalorder %s13, 1
        %s232 = scalar_select %p231, %s13, 1
        %s233 = smul.addr %s232, 256
        %s234 = smul.addr %s233, 4
        %s235 = scalar_lea.vmem %s0, %s234
      $region44: #{encoder_forward.3} parent=39 // pred_fallthru
        _
    $region40: #{encoder_forward.3} parent=5 // pred_fallthru
      _
    %p236 = scmp.le.s32.totalorder 1, %s13
    %p237 = scmp.lt.s32.totalorder %s13, 3
    %p238 = pnand %p236, %p237
    %p239 = pneg %p238
    // Predicated region
    $region45: #{encoder_forward.3} parent=5 // pred_check
      _
    $region46: #{encoder_forward.3} parent=5 // pred_check_branch
      %241 = sbr.rel (%p238) target = $region48
    $region47: #{encoder_forward.3} parent=5 // pred_region
      %s242 = ssub.s32 %s13, 1
      %p243 = scmp.lt.s32.totalorder %s18, 1
      %s244 = scalar_select %p243, %s18, 1
      %s245 = smul.addr %s244, 256
      %s246 = smul.addr %s245, 4
      %s247 = scalar_lea.vmem %s0, %s246
      %p248 = pneg %p39
      %p249 = pneg %p36
      %p250 = pneg %p60
      %p251 = pneg %p57
      %p252 = pneg %p81
      %p253 = pneg %p78
      %p254 = pneg %p102
      %p255 = pneg %p99
      %p256 = pneg %p123
      %p257 = pneg %p120
      %p258 = pneg %p144
      %p259 = pneg %p141
      %p260 = pneg %p165
      %p261 = pneg %p162
      %p262 = pneg %p191
      %p263 = pneg %p188
      %p264 = scmp.lt.s32.totalorder %s18, 1
      %s265 = scalar_select %p264, %s18, 1
      %s266 = smul.addr %s265, 8
      %s267 = scalar_lea.vmem %s7, %s266
      %p268 = scmp.lt.s32.totalorder %s18, 1
      %s269 = scalar_select %p268, %s18, 1
      %s270 = smul.addr %s269, 256
      %s271 = smul.addr %s270, 4
      %s272 = scalar_lea.vmem %s0, %s271
      %p273 = scmp.lt.s32.totalorder %s18, 1
      %s274 = scalar_select %p273, %s18, 1
      %s275 = smul.addr %s274, 8
      %s276 = scalar_lea.vmem %s7, %s275
      %v278 = vld [vmem:[%s1] sm:$0xff]
      %v279 = vld [vmem:[%s1 + $0x8] sm:$0xff]
      %v280 = vld [vmem:[%s1 + $0x10] sm:$0xff]
      %v281 = vld [vmem:[%s1 + $0x18] sm:$0xff]
      %v282 = vld [vmem:[%s1 + $0x20] sm:$0xff]
      %v283 = vld [vmem:[%s1 + $0x28] sm:$0xff]
      %v284 = vld [vmem:[%s1 + $0x30] sm:$0xff]
      %v285 = vld [vmem:[%s1 + $0x38] sm:$0xff]
      %v286 = vld [vmem:[%s1 + $0x40] sm:$0xff]
      %v287 = vld [vmem:[%s1 + $0x48] sm:$0xff]
      %v288 = vld [vmem:[%s1 + $0x50] sm:$0xff]
      %v289 = vld [vmem:[%s1 + $0x58] sm:$0xff]
      %v290 = vld [vmem:[%s1 + $0x60] sm:$0xff]
      %v291 = vld [vmem:[%s1 + $0x68] sm:$0xff]
      %v292 = vld [vmem:[%s1 + $0x70] sm:$0xff]
      %v293 = vld [vmem:[%s1 + $0x78] sm:$0xff]
      %v294 = vld [vmem:[%s1 + $0x80] sm:$0xff]
      %v295 = vld [vmem:[%s1 + $0x88] sm:$0xff]
      %v296 = vld [vmem:[%s1 + $0x90] sm:$0xff]
      %v297 = vld [vmem:[%s1 + $0x98] sm:$0xff]
      %v298 = vld [vmem:[%s1 + $0xa0] sm:$0xff]
      %v299 = vld [vmem:[%s1 + $0xa8] sm:$0xff]
      %v300 = vld [vmem:[%s1 + $0xb0] sm:$0xff]
      %v301 = vld [vmem:[%s1 + $0xb8] sm:$0xff]
      %v302 = vld [vmem:[%s1 + $0xc0] sm:$0xff]
      %v303 = vld [vmem:[%s1 + $0xc8] sm:$0xff]
      %v304 = vld [vmem:[%s1 + $0xd0] sm:$0xff]
      %v305 = vld [vmem:[%s1 + $0xd8] sm:$0xff]
      %v306 = vld [vmem:[%s1 + $0xe0] sm:$0xff]
      %v307 = vld [vmem:[%s1 + $0xe8] sm:$0xff]
      %v308 = vld [vmem:[%s1 + $0xf0] sm:$0xff]
      %v309 = vld [vmem:[%s1 + $0xf8] sm:$0xff]
      %v310 = vld [vmem:[%s1 + $0x100] sm:$0xff]
      %v311 = vld [vmem:[%s1 + $0x108] sm:$0xff]
      %v312 = vld [vmem:[%s1 + $0x110] sm:$0xff]
      %v313 = vld [vmem:[%s1 + $0x118] sm:$0xff]
      %v314 = vld [vmem:[%s1 + $0x120] sm:$0xff]
      %v315 = vld [vmem:[%s1 + $0x128] sm:$0xff]
      %v316 = vld [vmem:[%s1 + $0x130] sm:$0xff]
      %v317 = vld [vmem:[%s1 + $0x138] sm:$0xff]
      %v318 = vld [vmem:[%s1 + $0x140] sm:$0xff]
      %v319 = vld [vmem:[%s1 + $0x148] sm:$0xff]
      %v320 = vld [vmem:[%s1 + $0x150] sm:$0xff]
      %v321 = vld [vmem:[%s1 + $0x158] sm:$0xff]
      %v322 = vld [vmem:[%s1 + $0x160] sm:$0xff]
      %v323 = vld [vmem:[%s1 + $0x168] sm:$0xff]
      %v324 = vld [vmem:[%s1 + $0x170] sm:$0xff]
      %v325 = vld [vmem:[%s1 + $0x178] sm:$0xff]
      %v326 = vld [vmem:[%s1 + $0x180] sm:$0xff]
      %v327 = vld [vmem:[%s1 + $0x188] sm:$0xff]
      %v328 = vld [vmem:[%s1 + $0x190] sm:$0xff]
      %v329 = vld [vmem:[%s1 + $0x198] sm:$0xff]
      %v330 = vld [vmem:[%s1 + $0x1a0] sm:$0xff]
      %v331 = vld [vmem:[%s1 + $0x1a8] sm:$0xff]
      %v332 = vld [vmem:[%s1 + $0x1b0] sm:$0xff]
      %v333 = vld [vmem:[%s1 + $0x1b8] sm:$0xff]
      %v334 = vld [vmem:[%s1 + $0x1c0] sm:$0xff]
      %v335 = vld [vmem:[%s1 + $0x1c8] sm:$0xff]
      %v336 = vld [vmem:[%s1 + $0x1d0] sm:$0xff]
      %v337 = vld [vmem:[%s1 + $0x1d8] sm:$0xff]
      %v338 = vld [vmem:[%s1 + $0x1e0] sm:$0xff]
      %v339 = vld [vmem:[%s1 + $0x1e8] sm:$0xff]
      %v340 = vld [vmem:[%s1 + $0x1f0] sm:$0xff]
      %v341 = vld [vmem:[%s1 + $0x1f8] sm:$0xff]
      %v342 = vld [vmem:[%s1 + $0x200] sm:$0xff]
      %v343 = vld [vmem:[%s1 + $0x208] sm:$0xff]
      %v344 = vld [vmem:[%s1 + $0x210] sm:$0xff]
      %v345 = vld [vmem:[%s1 + $0x218] sm:$0xff]
      %v346 = vld [vmem:[%s1 + $0x220] sm:$0xff]
      %v347 = vld [vmem:[%s1 + $0x228] sm:$0xff]
      %v348 = vld [vmem:[%s1 + $0x230] sm:$0xff]
      %v349 = vld [vmem:[%s1 + $0x238] sm:$0xff]
      %v350 = vld [vmem:[%s1 + $0x240] sm:$0xff]
      %v351 = vld [vmem:[%s1 + $0x248] sm:$0xff]
      %v352 = vld [vmem:[%s1 + $0x250] sm:$0xff]
      %v353 = vld [vmem:[%s1 + $0x258] sm:$0xff]
      %v354 = vld [vmem:[%s1 + $0x260] sm:$0xff]
      %v355 = vld [vmem:[%s1 + $0x268] sm:$0xff]
      %v356 = vld [vmem:[%s1 + $0x270] sm:$0xff]
      %v357 = vld [vmem:[%s1 + $0x278] sm:$0xff]
      %v358 = vld [vmem:[%s1 + $0x280] sm:$0xff]
      %v359 = vld [vmem:[%s1 + $0x288] sm:$0xff]
      %v360 = vld [vmem:[%s1 + $0x290] sm:$0xff]
      %v361 = vld [vmem:[%s1 + $0x298] sm:$0xff]
      %v362 = vld [vmem:[%s1 + $0x2a0] sm:$0xff]
      %v363 = vld [vmem:[%s1 + $0x2a8] sm:$0xff]
      %v364 = vld [vmem:[%s1 + $0x2b0] sm:$0xff]
      %v365 = vld [vmem:[%s1 + $0x2b8] sm:$0xff]
      %v366 = vld [vmem:[%s1 + $0x2c0] sm:$0xff]
      %v367 = vld [vmem:[%s1 + $0x2c8] sm:$0xff]
      %v368 = vld [vmem:[%s1 + $0x2d0] sm:$0xff]
      %v369 = vld [vmem:[%s1 + $0x2d8] sm:$0xff]
      %v370 = vld [vmem:[%s1 + $0x2e0] sm:$0xff]
      %v371 = vld [vmem:[%s1 + $0x2e8] sm:$0xff]
      %v372 = vld [vmem:[%s1 + $0x2f0] sm:$0xff]
      %v373 = vld [vmem:[%s1 + $0x2f8] sm:$0xff]
      %v374 = vld [vmem:[%s1 + $0x300] sm:$0xff]
      %v375 = vld [vmem:[%s1 + $0x308] sm:$0xff]
      %v376 = vld [vmem:[%s1 + $0x310] sm:$0xff]
      %v377 = vld [vmem:[%s1 + $0x318] sm:$0xff]
      %v378 = vld [vmem:[%s1 + $0x320] sm:$0xff]
      %v379 = vld [vmem:[%s1 + $0x328] sm:$0xff]
      %v380 = vld [vmem:[%s1 + $0x330] sm:$0xff]
      %v381 = vld [vmem:[%s1 + $0x338] sm:$0xff]
      %v382 = vld [vmem:[%s1 + $0x340] sm:$0xff]
      %v383 = vld [vmem:[%s1 + $0x348] sm:$0xff]
      %v384 = vld [vmem:[%s1 + $0x350] sm:$0xff]
      %v385 = vld [vmem:[%s1 + $0x358] sm:$0xff]
      %v386 = vld [vmem:[%s1 + $0x360] sm:$0xff]
      %v387 = vld [vmem:[%s1 + $0x368] sm:$0xff]
      %v388 = vld [vmem:[%s1 + $0x370] sm:$0xff]
      %v389 = vld [vmem:[%s1 + $0x378] sm:$0xff]
      %v390 = vld [vmem:[%s1 + $0x380] sm:$0xff]
      %v391 = vld [vmem:[%s1 + $0x388] sm:$0xff]
      %v392 = vld [vmem:[%s1 + $0x390] sm:$0xff]
      %v393 = vld [vmem:[%s1 + $0x398] sm:$0xff]
      %v394 = vld [vmem:[%s1 + $0x3a0] sm:$0xff]
      %v395 = vld [vmem:[%s1 + $0x3a8] sm:$0xff]
      %v396 = vld [vmem:[%s1 + $0x3b0] sm:$0xff]
      %v397 = vld [vmem:[%s1 + $0x3b8] sm:$0xff]
      %v398 = vld [vmem:[%s1 + $0x3c0] sm:$0xff]
      %v399 = vld [vmem:[%s1 + $0x3c8] sm:$0xff]
      %v400 = vld [vmem:[%s1 + $0x3d0] sm:$0xff]
      %v401 = vld [vmem:[%s1 + $0x3d8] sm:$0xff]
      %v402 = vld [vmem:[%s1 + $0x3e0] sm:$0xff]
      %v403 = vld [vmem:[%s1 + $0x3e8] sm:$0xff]
      %v404 = vld [vmem:[%s1 + $0x3f0] sm:$0xff]
      %v405 = vld [vmem:[%s1 + $0x3f8] sm:$0xff]
      %v406 = vld [vmem:[%s272] sm:$0xf]
      %v407 = vld [vmem:[%s272 + $0x4] sm:$0xf]
      %v408 = vld [vmem:[%s272 + $0x8] sm:$0xf]
      %v409 = vld [vmem:[%s272 + $0xc] sm:$0xf]
      %v410 = vld [vmem:[%s272 + $0x10] sm:$0xf]
      %v411 = vld [vmem:[%s272 + $0x14] sm:$0xf]
      %v412 = vld [vmem:[%s272 + $0x18] sm:$0xf]
      %v413 = vld [vmem:[%s272 + $0x1c] sm:$0xf]
      %v414 = vld [vmem:[%s272 + $0x20] sm:$0xf]
      %v415 = vld [vmem:[%s272 + $0x24] sm:$0xf]
      %v416 = vld [vmem:[%s272 + $0x28] sm:$0xf]
      %v417 = vld [vmem:[%s272 + $0x2c] sm:$0xf]
      %v418 = vld [vmem:[%s272 + $0x30] sm:$0xf]
      %v419 = vld [vmem:[%s272 + $0x34] sm:$0xf]
      %v420 = vld [vmem:[%s272 + $0x38] sm:$0xf]
      %v421 = vld [vmem:[%s272 + $0x3c] sm:$0xf]
      %v422 = vld [vmem:[%s272 + $0x40] sm:$0xf]
      %v423 = vld [vmem:[%s272 + $0x44] sm:$0xf]
      %v424 = vld [vmem:[%s272 + $0x48] sm:$0xf]
      %v425 = vld [vmem:[%s272 + $0x4c] sm:$0xf]
      %v426 = vld [vmem:[%s272 + $0x50] sm:$0xf]
      %v427 = vld [vmem:[%s272 + $0x54] sm:$0xf]
      %v428 = vld [vmem:[%s272 + $0x58] sm:$0xf]
      %v429 = vld [vmem:[%s272 + $0x5c] sm:$0xf]
      %v430 = vld [vmem:[%s272 + $0x60] sm:$0xf]
      %v431 = vld [vmem:[%s272 + $0x64] sm:$0xf]
      %v432 = vld [vmem:[%s272 + $0x68] sm:$0xf]
      %v433 = vld [vmem:[%s272 + $0x6c] sm:$0xf]
      %v434 = vld [vmem:[%s272 + $0x70] sm:$0xf]
      %v435 = vld [vmem:[%s272 + $0x74] sm:$0xf]
      %v436 = vld [vmem:[%s272 + $0x78] sm:$0xf]
      %v437 = vld [vmem:[%s272 + $0x7c] sm:$0xf]
      %v438 = vld [vmem:[%s272 + $0x80] sm:$0xf]
      %v439 = vld [vmem:[%s272 + $0x84] sm:$0xf]
      %v440 = vld [vmem:[%s272 + $0x88] sm:$0xf]
      %v441 = vld [vmem:[%s272 + $0x8c] sm:$0xf]
      %v442 = vld [vmem:[%s272 + $0x90] sm:$0xf]
      %v443 = vld [vmem:[%s272 + $0x94] sm:$0xf]
      %v444 = vld [vmem:[%s272 + $0x98] sm:$0xf]
      %v445 = vld [vmem:[%s272 + $0x9c] sm:$0xf]
      %v446 = vld [vmem:[%s272 + $0xa0] sm:$0xf]
      %v447 = vld [vmem:[%s272 + $0xa4] sm:$0xf]
      %v448 = vld [vmem:[%s272 + $0xa8] sm:$0xf]
      %v449 = vld [vmem:[%s272 + $0xac] sm:$0xf]
      %v450 = vld [vmem:[%s272 + $0xb0] sm:$0xf]
      %v451 = vld [vmem:[%s272 + $0xb4] sm:$0xf]
      %v452 = vld [vmem:[%s272 + $0xb8] sm:$0xf]
      %v453 = vld [vmem:[%s272 + $0xbc] sm:$0xf]
      %v454 = vld [vmem:[%s272 + $0xc0] sm:$0xf]
      %v455 = vld [vmem:[%s272 + $0xc4] sm:$0xf]
      %v456 = vld [vmem:[%s272 + $0xc8] sm:$0xf]
      %v457 = vld [vmem:[%s272 + $0xcc] sm:$0xf]
      %v458 = vld [vmem:[%s272 + $0xd0] sm:$0xf]
      %v459 = vld [vmem:[%s272 + $0xd4] sm:$0xf]
      %v460 = vld [vmem:[%s272 + $0xd8] sm:$0xf]
      %v461 = vld [vmem:[%s272 + $0xdc] sm:$0xf]
      %v462 = vld [vmem:[%s272 + $0xe0] sm:$0xf]
      %v463 = vld [vmem:[%s272 + $0xe4] sm:$0xf]
      %v464 = vld [vmem:[%s272 + $0xe8] sm:$0xf]
      %v465 = vld [vmem:[%s272 + $0xec] sm:$0xf]
      %v466 = vld [vmem:[%s272 + $0xf0] sm:$0xf]
      %v467 = vld [vmem:[%s272 + $0xf4] sm:$0xf]
      %v468 = vld [vmem:[%s272 + $0xf8] sm:$0xf]
      %v469 = vld [vmem:[%s272 + $0xfc] sm:$0xf]
      %v470 = vld [vmem:[%s272 + $0x100] sm:$0xf]
      %v471 = vld [vmem:[%s272 + $0x104] sm:$0xf]
      %v472 = vld [vmem:[%s272 + $0x108] sm:$0xf]
      %v473 = vld [vmem:[%s272 + $0x10c] sm:$0xf]
      %v474 = vld [vmem:[%s272 + $0x110] sm:$0xf]
      %v475 = vld [vmem:[%s272 + $0x114] sm:$0xf]
      %v476 = vld [vmem:[%s272 + $0x118] sm:$0xf]
      %v477 = vld [vmem:[%s272 + $0x11c] sm:$0xf]
      %v478 = vld [vmem:[%s272 + $0x120] sm:$0xf]
      %v479 = vld [vmem:[%s272 + $0x124] sm:$0xf]
      %v480 = vld [vmem:[%s272 + $0x128] sm:$0xf]
      %v481 = vld [vmem:[%s272 + $0x12c] sm:$0xf]
      %v482 = vld [vmem:[%s272 + $0x130] sm:$0xf]
      %v483 = vld [vmem:[%s272 + $0x134] sm:$0xf]
      %v484 = vld [vmem:[%s272 + $0x138] sm:$0xf]
      %v485 = vld [vmem:[%s272 + $0x13c] sm:$0xf]
      %v486 = vld [vmem:[%s272 + $0x140] sm:$0xf]
      %v487 = vld [vmem:[%s272 + $0x144] sm:$0xf]
      %v488 = vld [vmem:[%s272 + $0x148] sm:$0xf]
      %v489 = vld [vmem:[%s272 + $0x14c] sm:$0xf]
      %v490 = vld [vmem:[%s272 + $0x150] sm:$0xf]
      %v491 = vld [vmem:[%s272 + $0x154] sm:$0xf]
      %v492 = vld [vmem:[%s272 + $0x158] sm:$0xf]
      %v493 = vld [vmem:[%s272 + $0x15c] sm:$0xf]
      %v494 = vld [vmem:[%s272 + $0x160] sm:$0xf]
      %v495 = vld [vmem:[%s272 + $0x164] sm:$0xf]
      %v496 = vld [vmem:[%s272 + $0x168] sm:$0xf]
      %v497 = vld [vmem:[%s272 + $0x16c] sm:$0xf]
      %v498 = vld [vmem:[%s272 + $0x170] sm:$0xf]
      %v499 = vld [vmem:[%s272 + $0x174] sm:$0xf]
      %v500 = vld [vmem:[%s272 + $0x178] sm:$0xf]
      %v501 = vld [vmem:[%s272 + $0x17c] sm:$0xf]
      %v502 = vld [vmem:[%s272 + $0x180] sm:$0xf]
      %v503 = vld [vmem:[%s272 + $0x184] sm:$0xf]
      %v504 = vld [vmem:[%s272 + $0x188] sm:$0xf]
      %v505 = vld [vmem:[%s272 + $0x18c] sm:$0xf]
      %v506 = vld [vmem:[%s272 + $0x190] sm:$0xf]
      %v507 = vld [vmem:[%s272 + $0x194] sm:$0xf]
      %v508 = vld [vmem:[%s272 + $0x198] sm:$0xf]
      %v509 = vld [vmem:[%s272 + $0x19c] sm:$0xf]
      %v510 = vld [vmem:[%s272 + $0x1a0] sm:$0xf]
      %v511 = vld [vmem:[%s272 + $0x1a4] sm:$0xf]
      %v512 = vld [vmem:[%s272 + $0x1a8] sm:$0xf]
      %v513 = vld [vmem:[%s272 + $0x1ac] sm:$0xf]
      %v514 = vld [vmem:[%s272 + $0x1b0] sm:$0xf]
      %v515 = vld [vmem:[%s272 + $0x1b4] sm:$0xf]
      %v516 = vld [vmem:[%s272 + $0x1b8] sm:$0xf]
      %v517 = vld [vmem:[%s272 + $0x1bc] sm:$0xf]
      %v518 = vld [vmem:[%s272 + $0x1c0] sm:$0xf]
      %v519 = vld [vmem:[%s272 + $0x1c4] sm:$0xf]
      %v520 = vld [vmem:[%s272 + $0x1c8] sm:$0xf]
      %v521 = vld [vmem:[%s272 + $0x1cc] sm:$0xf]
      %v522 = vld [vmem:[%s272 + $0x1d0] sm:$0xf]
      %v523 = vld [vmem:[%s272 + $0x1d4] sm:$0xf]
      %v524 = vld [vmem:[%s272 + $0x1d8] sm:$0xf]
      %v525 = vld [vmem:[%s272 + $0x1dc] sm:$0xf]
      %v526 = vld [vmem:[%s272 + $0x1e0] sm:$0xf]
      %v527 = vld [vmem:[%s272 + $0x1e4] sm:$0xf]
      %v528 = vld [vmem:[%s272 + $0x1e8] sm:$0xf]
      %v529 = vld [vmem:[%s272 + $0x1ec] sm:$0xf]
      %v530 = vld [vmem:[%s272 + $0x1f0] sm:$0xf]
      %v531 = vld [vmem:[%s272 + $0x1f4] sm:$0xf]
      %v532 = vld [vmem:[%s272 + $0x1f8] sm:$0xf]
      %v533 = vld [vmem:[%s272 + $0x1fc] sm:$0xf]
      %v534 = vld [vmem:[%s272 + $0x200] sm:$0xf]
      %v535 = vld [vmem:[%s272 + $0x204] sm:$0xf]
      %v536 = vld [vmem:[%s272 + $0x208] sm:$0xf]
      %v537 = vld [vmem:[%s272 + $0x20c] sm:$0xf]
      %v538 = vld [vmem:[%s272 + $0x210] sm:$0xf]
      %v539 = vld [vmem:[%s272 + $0x214] sm:$0xf]
      %v540 = vld [vmem:[%s272 + $0x218] sm:$0xf]
      %v541 = vld [vmem:[%s272 + $0x21c] sm:$0xf]
      %v542 = vld [vmem:[%s272 + $0x220] sm:$0xf]
      %v543 = vld [vmem:[%s272 + $0x224] sm:$0xf]
      %v544 = vld [vmem:[%s272 + $0x228] sm:$0xf]
      %v545 = vld [vmem:[%s272 + $0x22c] sm:$0xf]
      %v546 = vld [vmem:[%s272 + $0x230] sm:$0xf]
      %v547 = vld [vmem:[%s272 + $0x234] sm:$0xf]
      %v548 = vld [vmem:[%s272 + $0x238] sm:$0xf]
      %v549 = vld [vmem:[%s272 + $0x23c] sm:$0xf]
      %v550 = vld [vmem:[%s272 + $0x240] sm:$0xf]
      %v551 = vld [vmem:[%s272 + $0x244] sm:$0xf]
      %v552 = vld [vmem:[%s272 + $0x248] sm:$0xf]
      %v553 = vld [vmem:[%s272 + $0x24c] sm:$0xf]
      %v554 = vld [vmem:[%s272 + $0x250] sm:$0xf]
      %v555 = vld [vmem:[%s272 + $0x254] sm:$0xf]
      %v556 = vld [vmem:[%s272 + $0x258] sm:$0xf]
      %v557 = vld [vmem:[%s272 + $0x25c] sm:$0xf]
      %v558 = vld [vmem:[%s272 + $0x260] sm:$0xf]
      %v559 = vld [vmem:[%s272 + $0x264] sm:$0xf]
      %v560 = vld [vmem:[%s272 + $0x268] sm:$0xf]
      %v561 = vld [vmem:[%s272 + $0x26c] sm:$0xf]
      %v562 = vld [vmem:[%s272 + $0x270] sm:$0xf]
      %v563 = vld [vmem:[%s272 + $0x274] sm:$0xf]
      %v564 = vld [vmem:[%s272 + $0x278] sm:$0xf]
      %v565 = vld [vmem:[%s272 + $0x27c] sm:$0xf]
      %v566 = vld [vmem:[%s272 + $0x280] sm:$0xf]
      %v567 = vld [vmem:[%s272 + $0x284] sm:$0xf]
      %v568 = vld [vmem:[%s272 + $0x288] sm:$0xf]
      %v569 = vld [vmem:[%s272 + $0x28c] sm:$0xf]
      %v570 = vld [vmem:[%s272 + $0x290] sm:$0xf]
      %v571 = vld [vmem:[%s272 + $0x294] sm:$0xf]
      %v572 = vld [vmem:[%s272 + $0x298] sm:$0xf]
      %v573 = vld [vmem:[%s272 + $0x29c] sm:$0xf]
      %v574 = vld [vmem:[%s272 + $0x2a0] sm:$0xf]
      %v575 = vld [vmem:[%s272 + $0x2a4] sm:$0xf]
      %v576 = vld [vmem:[%s272 + $0x2a8] sm:$0xf]
      %v577 = vld [vmem:[%s272 + $0x2ac] sm:$0xf]
      %v578 = vld [vmem:[%s272 + $0x2b0] sm:$0xf]
      %v579 = vld [vmem:[%s272 + $0x2b4] sm:$0xf]
      %v580 = vld [vmem:[%s272 + $0x2b8] sm:$0xf]
      %v581 = vld [vmem:[%s272 + $0x2bc] sm:$0xf]
      %v582 = vld [vmem:[%s272 + $0x2c0] sm:$0xf]
      %v583 = vld [vmem:[%s272 + $0x2c4] sm:$0xf]
      %v584 = vld [vmem:[%s272 + $0x2c8] sm:$0xf]
      %v585 = vld [vmem:[%s272 + $0x2cc] sm:$0xf]
      %v586 = vld [vmem:[%s272 + $0x2d0] sm:$0xf]
      %v587 = vld [vmem:[%s272 + $0x2d4] sm:$0xf]
      %v588 = vld [vmem:[%s272 + $0x2d8] sm:$0xf]
      %v589 = vld [vmem:[%s272 + $0x2dc] sm:$0xf]
      %v590 = vld [vmem:[%s272 + $0x2e0] sm:$0xf]
      %v591 = vld [vmem:[%s272 + $0x2e4] sm:$0xf]
      %v592 = vld [vmem:[%s272 + $0x2e8] sm:$0xf]
      %v593 = vld [vmem:[%s272 + $0x2ec] sm:$0xf]
      %v594 = vld [vmem:[%s272 + $0x2f0] sm:$0xf]
      %v595 = vld [vmem:[%s272 + $0x2f4] sm:$0xf]
      %v596 = vld [vmem:[%s272 + $0x2f8] sm:$0xf]
      %v597 = vld [vmem:[%s272 + $0x2fc] sm:$0xf]
      %v598 = vld [vmem:[%s272 + $0x300] sm:$0xf]
      %v599 = vld [vmem:[%s272 + $0x304] sm:$0xf]
      %v600 = vld [vmem:[%s272 + $0x308] sm:$0xf]
      %v601 = vld [vmem:[%s272 + $0x30c] sm:$0xf]
      %v602 = vld [vmem:[%s272 + $0x310] sm:$0xf]
      %v603 = vld [vmem:[%s272 + $0x314] sm:$0xf]
      %v604 = vld [vmem:[%s272 + $0x318] sm:$0xf]
      %v605 = vld [vmem:[%s272 + $0x31c] sm:$0xf]
      %v606 = vld [vmem:[%s272 + $0x320] sm:$0xf]
      %v607 = vld [vmem:[%s272 + $0x324] sm:$0xf]
      %v608 = vld [vmem:[%s272 + $0x328] sm:$0xf]
      %v609 = vld [vmem:[%s272 + $0x32c] sm:$0xf]
      %v610 = vld [vmem:[%s272 + $0x330] sm:$0xf]
      %v611 = vld [vmem:[%s272 + $0x334] sm:$0xf]
      %v612 = vld [vmem:[%s272 + $0x338] sm:$0xf]
      %v613 = vld [vmem:[%s272 + $0x33c] sm:$0xf]
      %v614 = vld [vmem:[%s272 + $0x340] sm:$0xf]
      %v615 = vld [vmem:[%s272 + $0x344] sm:$0xf]
      %v616 = vld [vmem:[%s272 + $0x348] sm:$0xf]
      %v617 = vld [vmem:[%s272 + $0x34c] sm:$0xf]
      %v618 = vld [vmem:[%s272 + $0x350] sm:$0xf]
      %v619 = vld [vmem:[%s272 + $0x354] sm:$0xf]
      %v620 = vld [vmem:[%s272 + $0x358] sm:$0xf]
      %v621 = vld [vmem:[%s272 + $0x35c] sm:$0xf]
      %v622 = vld [vmem:[%s272 + $0x360] sm:$0xf]
      %v623 = vld [vmem:[%s272 + $0x364] sm:$0xf]
      %v624 = vld [vmem:[%s272 + $0x368] sm:$0xf]
      %v625 = vld [vmem:[%s272 + $0x36c] sm:$0xf]
      %v626 = vld [vmem:[%s272 + $0x370] sm:$0xf]
      %v627 = vld [vmem:[%s272 + $0x374] sm:$0xf]
      %v628 = vld [vmem:[%s272 + $0x378] sm:$0xf]
      %v629 = vld [vmem:[%s272 + $0x37c] sm:$0xf]
      %v630 = vld [vmem:[%s272 + $0x380] sm:$0xf]
      %v631 = vld [vmem:[%s272 + $0x384] sm:$0xf]
      %v632 = vld [vmem:[%s272 + $0x388] sm:$0xf]
      %v633 = vld [vmem:[%s272 + $0x38c] sm:$0xf]
      %v634 = vld [vmem:[%s272 + $0x390] sm:$0xf]
      %v635 = vld [vmem:[%s272 + $0x394] sm:$0xf]
      %v636 = vld [vmem:[%s272 + $0x398] sm:$0xf]
      %v637 = vld [vmem:[%s272 + $0x39c] sm:$0xf]
      %v638 = vld [vmem:[%s272 + $0x3a0] sm:$0xf]
      %v639 = vld [vmem:[%s272 + $0x3a4] sm:$0xf]
      %v640 = vld [vmem:[%s272 + $0x3a8] sm:$0xf]
      %v641 = vld [vmem:[%s272 + $0x3ac] sm:$0xf]
      %v642 = vld [vmem:[%s272 + $0x3b0] sm:$0xf]
      %v643 = vld [vmem:[%s272 + $0x3b4] sm:$0xf]
      %v644 = vld [vmem:[%s272 + $0x3b8] sm:$0xf]
      %v645 = vld [vmem:[%s272 + $0x3bc] sm:$0xf]
      %v646 = vld [vmem:[%s272 + $0x3c0] sm:$0xf]
      %v647 = vld [vmem:[%s272 + $0x3c4] sm:$0xf]
      %v648 = vld [vmem:[%s272 + $0x3c8] sm:$0xf]
      %v649 = vld [vmem:[%s272 + $0x3cc] sm:$0xf]
      %v650 = vld [vmem:[%s272 + $0x3d0] sm:$0xf]
      %v651 = vld [vmem:[%s272 + $0x3d4] sm:$0xf]
      %v652 = vld [vmem:[%s272 + $0x3d8] sm:$0xf]
      %v653 = vld [vmem:[%s272 + $0x3dc] sm:$0xf]
      %v654 = vld [vmem:[%s272 + $0x3e0] sm:$0xf]
      %v655 = vld [vmem:[%s272 + $0x3e4] sm:$0xf]
      %v656 = vld [vmem:[%s272 + $0x3e8] sm:$0xf]
      %v657 = vld [vmem:[%s272 + $0x3ec] sm:$0xf]
      %v658 = vld [vmem:[%s272 + $0x3f0] sm:$0xf]
      %v659 = vld [vmem:[%s272 + $0x3f4] sm:$0xf]
      %v660 = vld [vmem:[%s272 + $0x3f8] sm:$0xf]
      %v661 = vld [vmem:[%s272 + $0x3fc] sm:$0xf]
      %v662 = vld [vmem:[%s2] sm:$0xff]
      %v663 = vld [vmem:[%s2 + $0x8] sm:$0xff]
      %v664 = vld [vmem:[%s2 + $0x10] sm:$0xff]
      %v665 = vld [vmem:[%s2 + $0x18] sm:$0xff]
      %v666 = vld [vmem:[%s2 + $0x20] sm:$0xff]
      %v667 = vld [vmem:[%s2 + $0x28] sm:$0xff]
      %v668 = vld [vmem:[%s2 + $0x30] sm:$0xff]
      %v669 = vld [vmem:[%s2 + $0x38] sm:$0xff]
      %v670 = vld [vmem:[%s2 + $0x40] sm:$0xff]
      %v671 = vld [vmem:[%s2 + $0x48] sm:$0xff]
      %v672 = vld [vmem:[%s2 + $0x50] sm:$0xff]
      %v673 = vld [vmem:[%s2 + $0x58] sm:$0xff]
      %v674 = vld [vmem:[%s2 + $0x60] sm:$0xff]
      %v675 = vld [vmem:[%s2 + $0x68] sm:$0xff]
      %v676 = vld [vmem:[%s2 + $0x70] sm:$0xff]
      %v677 = vld [vmem:[%s2 + $0x78] sm:$0xff]
      %679 = vset.pattern.permute.xlu0 0
      %680 = vperm.xlu0 %679, %v662
      %v681 = vpop.permute.xlu0 %680
      %684 = vset.pattern.permute.xlu0 0
      %685 = vperm.xlu0 %684, %v663
      %v686 = vpop.permute.xlu0 %685
      %689 = vset.pattern.permute.xlu0 0
      %690 = vperm.xlu0 %689, %v664
      %v691 = vpop.permute.xlu0 %690
      %693 = vset.pattern.permute.xlu0 0
      %694 = vperm.xlu0 %693, %v665
      %v695 = vpop.permute.xlu0 %694
      %697 = vset.pattern.permute.xlu0 0
      %698 = vperm.xlu0 %697, %v666
      %v699 = vpop.permute.xlu0 %698
      %701 = vset.pattern.permute.xlu0 0
      %702 = vperm.xlu0 %701, %v667
      %v703 = vpop.permute.xlu0 %702
      %705 = vset.pattern.permute.xlu0 0
      %706 = vperm.xlu0 %705, %v668
      %v707 = vpop.permute.xlu0 %706
      %709 = vset.pattern.permute.xlu0 0
      %710 = vperm.xlu0 %709, %v669
      %v711 = vpop.permute.xlu0 %710
      %713 = vset.pattern.permute.xlu0 0
      %714 = vperm.xlu0 %713, %v670
      %v715 = vpop.permute.xlu0 %714
      %717 = vset.pattern.permute.xlu0 0
      %718 = vperm.xlu0 %717, %v671
      %v719 = vpop.permute.xlu0 %718
      %721 = vset.pattern.permute.xlu0 0
      %722 = vperm.xlu0 %721, %v672
      %v723 = vpop.permute.xlu0 %722
      %725 = vset.pattern.permute.xlu0 0
      %726 = vperm.xlu0 %725, %v673
      %v727 = vpop.permute.xlu0 %726
      %729 = vset.pattern.permute.xlu0 0
      %730 = vperm.xlu0 %729, %v674
      %v731 = vpop.permute.xlu0 %730
      %733 = vset.pattern.permute.xlu0 0
      %734 = vperm.xlu0 %733, %v675
      %v735 = vpop.permute.xlu0 %734
      %737 = vset.pattern.permute.xlu0 0
      %738 = vperm.xlu0 %737, %v676
      %v739 = vpop.permute.xlu0 %738
      %741 = vset.pattern.permute.xlu0 0
      %742 = vperm.xlu0 %741, %v677
      %v743 = vpop.permute.xlu0 %742
      %v872 = vunpack.c.l.b16 %v278
      %v873 = vunpack.c.h.b16 %v278
      %v874 = vunpack.c.l.b16 %v279
      %v875 = vunpack.c.h.b16 %v279
      %v876 = vunpack.c.l.b16 %v280
      %v877 = vunpack.c.h.b16 %v280
      %v878 = vunpack.c.l.b16 %v281
      %v879 = vunpack.c.h.b16 %v281
      %v880 = vunpack.c.l.b16 %v282
      %v881 = vunpack.c.h.b16 %v282
      %v882 = vunpack.c.l.b16 %v283
      %v883 = vunpack.c.h.b16 %v283
      %v884 = vunpack.c.l.b16 %v284
      %v885 = vunpack.c.h.b16 %v284
      %v886 = vunpack.c.l.b16 %v285
      %v887 = vunpack.c.h.b16 %v285
      %v888 = vunpack.c.l.b16 %v286
      %v889 = vunpack.c.h.b16 %v286
      %v890 = vunpack.c.l.b16 %v287
      %v891 = vunpack.c.h.b16 %v287
      %v892 = vunpack.c.l.b16 %v288
      %v893 = vunpack.c.h.b16 %v288
      %v894 = vunpack.c.l.b16 %v289
      %v895 = vunpack.c.h.b16 %v289
      %v896 = vunpack.c.l.b16 %v290
      %v897 = vunpack.c.h.b16 %v290
      %v898 = vunpack.c.l.b16 %v291
      %v899 = vunpack.c.h.b16 %v291
      %v900 = vunpack.c.l.b16 %v292
      %v901 = vunpack.c.h.b16 %v292
      %v902 = vunpack.c.l.b16 %v293
      %v903 = vunpack.c.h.b16 %v293
      %v904 = vunpack.c.l.b16 %v294
      %v905 = vunpack.c.h.b16 %v294
      %v906 = vunpack.c.l.b16 %v295
      %v907 = vunpack.c.h.b16 %v295
      %v908 = vunpack.c.l.b16 %v296
      %v909 = vunpack.c.h.b16 %v296
      %v910 = vunpack.c.l.b16 %v297
      %v911 = vunpack.c.h.b16 %v297
      %v912 = vunpack.c.l.b16 %v298
      %v913 = vunpack.c.h.b16 %v298
      %v914 = vunpack.c.l.b16 %v299
      %v915 = vunpack.c.h.b16 %v299
      %v916 = vunpack.c.l.b16 %v300
      %v917 = vunpack.c.h.b16 %v300
      %v918 = vunpack.c.l.b16 %v301
      %v919 = vunpack.c.h.b16 %v301
      %v920 = vunpack.c.l.b16 %v302
      %v921 = vunpack.c.h.b16 %v302
      %v922 = vunpack.c.l.b16 %v303
      %v923 = vunpack.c.h.b16 %v303
      %v924 = vunpack.c.l.b16 %v304
      %v925 = vunpack.c.h.b16 %v304
      %v926 = vunpack.c.l.b16 %v305
      %v927 = vunpack.c.h.b16 %v305
      %v928 = vunpack.c.l.b16 %v306
      %v929 = vunpack.c.h.b16 %v306
      %v930 = vunpack.c.l.b16 %v307
      %v931 = vunpack.c.h.b16 %v307
      %v932 = vunpack.c.l.b16 %v308
      %v933 = vunpack.c.h.b16 %v308
      %v934 = vunpack.c.l.b16 %v309
      %v935 = vunpack.c.h.b16 %v309
      %v936 = vunpack.c.l.b16 %v310
      %v937 = vunpack.c.h.b16 %v310
      %v938 = vunpack.c.l.b16 %v311
      %v939 = vunpack.c.h.b16 %v311
      %v940 = vunpack.c.l.b16 %v312
      %v941 = vunpack.c.h.b16 %v312
      %v942 = vunpack.c.l.b16 %v313
      %v943 = vunpack.c.h.b16 %v313
      %v944 = vunpack.c.l.b16 %v314
      %v945 = vunpack.c.h.b16 %v314
      %v946 = vunpack.c.l.b16 %v315
      %v947 = vunpack.c.h.b16 %v315
      %v948 = vunpack.c.l.b16 %v316
      %v949 = vunpack.c.h.b16 %v316
      %v950 = vunpack.c.l.b16 %v317
      %v951 = vunpack.c.h.b16 %v317
      %v952 = vunpack.c.l.b16 %v318
      %v953 = vunpack.c.h.b16 %v318
      %v954 = vunpack.c.l.b16 %v319
      %v955 = vunpack.c.h.b16 %v319
      %v956 = vunpack.c.l.b16 %v320
      %v957 = vunpack.c.h.b16 %v320
      %v958 = vunpack.c.l.b16 %v321
      %v959 = vunpack.c.h.b16 %v321
      %v960 = vunpack.c.l.b16 %v322
      %v961 = vunpack.c.h.b16 %v322
      %v962 = vunpack.c.l.b16 %v323
      %v963 = vunpack.c.h.b16 %v323
      %v964 = vunpack.c.l.b16 %v324
      %v965 = vunpack.c.h.b16 %v324
      %v966 = vunpack.c.l.b16 %v325
      %v967 = vunpack.c.h.b16 %v325
      %v968 = vunpack.c.l.b16 %v326
      %v969 = vunpack.c.h.b16 %v326
      %v970 = vunpack.c.l.b16 %v327
      %v971 = vunpack.c.h.b16 %v327
      %v972 = vunpack.c.l.b16 %v328
      %v973 = vunpack.c.h.b16 %v328
      %v974 = vunpack.c.l.b16 %v329
      %v975 = vunpack.c.h.b16 %v329
      %v976 = vunpack.c.l.b16 %v330
      %v977 = vunpack.c.h.b16 %v330
      %v978 = vunpack.c.l.b16 %v331
      %v979 = vunpack.c.h.b16 %v331
      %v980 = vunpack.c.l.b16 %v332
      %v981 = vunpack.c.h.b16 %v332
      %v982 = vunpack.c.l.b16 %v333
      %v983 = vunpack.c.h.b16 %v333
      %v984 = vunpack.c.l.b16 %v334
      %v985 = vunpack.c.h.b16 %v334
      %v986 = vunpack.c.l.b16 %v335
      %v987 = vunpack.c.h.b16 %v335
      %v988 = vunpack.c.l.b16 %v336
      %v989 = vunpack.c.h.b16 %v336
      %v990 = vunpack.c.l.b16 %v337
      %v991 = vunpack.c.h.b16 %v337
      %v992 = vunpack.c.l.b16 %v338
      %v993 = vunpack.c.h.b16 %v338
      %v994 = vunpack.c.l.b16 %v339
      %v995 = vunpack.c.h.b16 %v339
      %v996 = vunpack.c.l.b16 %v340
      %v997 = vunpack.c.h.b16 %v340
      %v998 = vunpack.c.l.b16 %v341
      %v999 = vunpack.c.h.b16 %v341
      %v1000 = vunpack.c.l.b16 %v342
      %v1001 = vunpack.c.h.b16 %v342
      %v1002 = vunpack.c.l.b16 %v343
      %v1003 = vunpack.c.h.b16 %v343
      %v1004 = vunpack.c.l.b16 %v344
      %v1005 = vunpack.c.h.b16 %v344
      %v1006 = vunpack.c.l.b16 %v345
      %v1007 = vunpack.c.h.b16 %v345
      %v1008 = vunpack.c.l.b16 %v346
      %v1009 = vunpack.c.h.b16 %v346
      %v1010 = vunpack.c.l.b16 %v347
      %v1011 = vunpack.c.h.b16 %v347
      %v1012 = vunpack.c.l.b16 %v348
      %v1013 = vunpack.c.h.b16 %v348
      %v1014 = vunpack.c.l.b16 %v349
      %v1015 = vunpack.c.h.b16 %v349
      %v1016 = vunpack.c.l.b16 %v350
      %v1017 = vunpack.c.h.b16 %v350
      %v1018 = vunpack.c.l.b16 %v351
      %v1019 = vunpack.c.h.b16 %v351
      %v1020 = vunpack.c.l.b16 %v352
      %v1021 = vunpack.c.h.b16 %v352
      %v1022 = vunpack.c.l.b16 %v353
      %v1023 = vunpack.c.h.b16 %v353
      %v1024 = vunpack.c.l.b16 %v354
      %v1025 = vunpack.c.h.b16 %v354
      %v1026 = vunpack.c.l.b16 %v355
      %v1027 = vunpack.c.h.b16 %v355
      %v1028 = vunpack.c.l.b16 %v356
      %v1029 = vunpack.c.h.b16 %v356
      %v1030 = vunpack.c.l.b16 %v357
      %v1031 = vunpack.c.h.b16 %v357
      %v1032 = vunpack.c.l.b16 %v358
      %v1033 = vunpack.c.h.b16 %v358
      %v1034 = vunpack.c.l.b16 %v359
      %v1035 = vunpack.c.h.b16 %v359
      %v1036 = vunpack.c.l.b16 %v360
      %v1037 = vunpack.c.h.b16 %v360
      %v1038 = vunpack.c.l.b16 %v361
      %v1039 = vunpack.c.h.b16 %v361
      %v1040 = vunpack.c.l.b16 %v362
      %v1041 = vunpack.c.h.b16 %v362
      %v1042 = vunpack.c.l.b16 %v363
      %v1043 = vunpack.c.h.b16 %v363
      %v1044 = vunpack.c.l.b16 %v364
      %v1045 = vunpack.c.h.b16 %v364
      %v1046 = vunpack.c.l.b16 %v365
      %v1047 = vunpack.c.h.b16 %v365
      %v1048 = vunpack.c.l.b16 %v366
      %v1049 = vunpack.c.h.b16 %v366
      %v1050 = vunpack.c.l.b16 %v367
      %v1051 = vunpack.c.h.b16 %v367
      %v1052 = vunpack.c.l.b16 %v368
      %v1053 = vunpack.c.h.b16 %v368
      %v1054 = vunpack.c.l.b16 %v369
      %v1055 = vunpack.c.h.b16 %v369
      %v1056 = vunpack.c.l.b16 %v370
      %v1057 = vunpack.c.h.b16 %v370
      %v1058 = vunpack.c.l.b16 %v371
      %v1059 = vunpack.c.h.b16 %v371
      %v1060 = vunpack.c.l.b16 %v372
      %v1061 = vunpack.c.h.b16 %v372
      %v1062 = vunpack.c.l.b16 %v373
      %v1063 = vunpack.c.h.b16 %v373
      %v1064 = vunpack.c.l.b16 %v374
      %v1065 = vunpack.c.h.b16 %v374
      %v1066 = vunpack.c.l.b16 %v375
      %v1067 = vunpack.c.h.b16 %v375
      %v1068 = vunpack.c.l.b16 %v376
      %v1069 = vunpack.c.h.b16 %v376
      %v1070 = vunpack.c.l.b16 %v377
      %v1071 = vunpack.c.h.b16 %v377
      %v1072 = vunpack.c.l.b16 %v378
      %v1073 = vunpack.c.h.b16 %v378
      %v1074 = vunpack.c.l.b16 %v379
      %v1075 = vunpack.c.h.b16 %v379
      %v1076 = vunpack.c.l.b16 %v380
      %v1077 = vunpack.c.h.b16 %v380
      %v1078 = vunpack.c.l.b16 %v381
      %v1079 = vunpack.c.h.b16 %v381
      %v1080 = vunpack.c.l.b16 %v382
      %v1081 = vunpack.c.h.b16 %v382
      %v1082 = vunpack.c.l.b16 %v383
      %v1083 = vunpack.c.h.b16 %v383
      %v1084 = vunpack.c.l.b16 %v384
      %v1085 = vunpack.c.h.b16 %v384
      %v1086 = vunpack.c.l.b16 %v385
      %v1087 = vunpack.c.h.b16 %v385
      %v1088 = vunpack.c.l.b16 %v386
      %v1089 = vunpack.c.h.b16 %v386
      %v1090 = vunpack.c.l.b16 %v387
      %v1091 = vunpack.c.h.b16 %v387
      %v1092 = vunpack.c.l.b16 %v388
      %v1093 = vunpack.c.h.b16 %v388
      %v1094 = vunpack.c.l.b16 %v389
      %v1095 = vunpack.c.h.b16 %v389
      %v1096 = vunpack.c.l.b16 %v390
      %v1097 = vunpack.c.h.b16 %v390
      %v1098 = vunpack.c.l.b16 %v391
      %v1099 = vunpack.c.h.b16 %v391
      %v1100 = vunpack.c.l.b16 %v392
      %v1101 = vunpack.c.h.b16 %v392
      %v1102 = vunpack.c.l.b16 %v393
      %v1103 = vunpack.c.h.b16 %v393
      %v1104 = vunpack.c.l.b16 %v394
      %v1105 = vunpack.c.h.b16 %v394
      %v1106 = vunpack.c.l.b16 %v395
      %v1107 = vunpack.c.h.b16 %v395
      %v1108 = vunpack.c.l.b16 %v396
      %v1109 = vunpack.c.h.b16 %v396
      %v1110 = vunpack.c.l.b16 %v397
      %v1111 = vunpack.c.h.b16 %v397
      %v1112 = vunpack.c.l.b16 %v398
      %v1113 = vunpack.c.h.b16 %v398
      %v1114 = vunpack.c.l.b16 %v399
      %v1115 = vunpack.c.h.b16 %v399
      %v1116 = vunpack.c.l.b16 %v400
      %v1117 = vunpack.c.h.b16 %v400
      %v1118 = vunpack.c.l.b16 %v401
      %v1119 = vunpack.c.h.b16 %v401
      %v1120 = vunpack.c.l.b16 %v402
      %v1121 = vunpack.c.h.b16 %v402
      %v1122 = vunpack.c.l.b16 %v403
      %v1123 = vunpack.c.h.b16 %v403
      %v1124 = vunpack.c.l.b16 %v404
      %v1125 = vunpack.c.h.b16 %v404
      %v1126 = vunpack.c.l.b16 %v405
      %v1127 = vunpack.c.h.b16 %v405
      %v1128 = vpack.c.b16 %v888, %v872
      %v1129 = vpack.c.b16 %v889, %v873
      %v1130 = vpack.c.b16 %v890, %v874
      %v1131 = vpack.c.b16 %v891, %v875
      %v1132 = vpack.c.b16 %v892, %v876
      %v1133 = vpack.c.b16 %v893, %v877
      %v1134 = vpack.c.b16 %v894, %v878
      %v1135 = vpack.c.b16 %v895, %v879
      %v1136 = vpack.c.b16 %v896, %v880
      %v1137 = vpack.c.b16 %v897, %v881
      %v1138 = vpack.c.b16 %v898, %v882
      %v1139 = vpack.c.b16 %v899, %v883
      %v1140 = vpack.c.b16 %v900, %v884
      %v1141 = vpack.c.b16 %v901, %v885
      %v1142 = vpack.c.b16 %v902, %v886
      %v1143 = vpack.c.b16 %v903, %v887
      %v1144 = vpack.c.b16 %v920, %v904
      %v1145 = vpack.c.b16 %v921, %v905
      %v1146 = vpack.c.b16 %v922, %v906
      %v1147 = vpack.c.b16 %v923, %v907
      %v1148 = vpack.c.b16 %v924, %v908
      %v1149 = vpack.c.b16 %v925, %v909
      %v1150 = vpack.c.b16 %v926, %v910
      %v1151 = vpack.c.b16 %v927, %v911
      %v1152 = vpack.c.b16 %v928, %v912
      %v1153 = vpack.c.b16 %v929, %v913
      %v1154 = vpack.c.b16 %v930, %v914
      %v1155 = vpack.c.b16 %v931, %v915
      %v1156 = vpack.c.b16 %v932, %v916
      %v1157 = vpack.c.b16 %v933, %v917
      %v1158 = vpack.c.b16 %v934, %v918
      %v1159 = vpack.c.b16 %v935, %v919
      %v1160 = vpack.c.b16 %v952, %v936
      %v1161 = vpack.c.b16 %v953, %v937
      %v1162 = vpack.c.b16 %v954, %v938
      %v1163 = vpack.c.b16 %v955, %v939
      %v1164 = vpack.c.b16 %v956, %v940
      %v1165 = vpack.c.b16 %v957, %v941
      %v1166 = vpack.c.b16 %v958, %v942
      %v1167 = vpack.c.b16 %v959, %v943
      %v1168 = vpack.c.b16 %v960, %v944
      %v1169 = vpack.c.b16 %v961, %v945
      %v1170 = vpack.c.b16 %v962, %v946
      %v1171 = vpack.c.b16 %v963, %v947
      %v1172 = vpack.c.b16 %v964, %v948
      %v1173 = vpack.c.b16 %v965, %v949
      %v1174 = vpack.c.b16 %v966, %v950
      %v1175 = vpack.c.b16 %v967, %v951
      %v1176 = vpack.c.b16 %v984, %v968
      %v1177 = vpack.c.b16 %v985, %v969
      %v1178 = vpack.c.b16 %v986, %v970
      %v1179 = vpack.c.b16 %v987, %v971
      %v1180 = vpack.c.b16 %v988, %v972
      %v1181 = vpack.c.b16 %v989, %v973
      %v1182 = vpack.c.b16 %v990, %v974
      %v1183 = vpack.c.b16 %v991, %v975
      %v1184 = vpack.c.b16 %v992, %v976
      %v1185 = vpack.c.b16 %v993, %v977
      %v1186 = vpack.c.b16 %v994, %v978
      %v1187 = vpack.c.b16 %v995, %v979
      %v1188 = vpack.c.b16 %v996, %v980
      %v1189 = vpack.c.b16 %v997, %v981
      %v1190 = vpack.c.b16 %v998, %v982
      %v1191 = vpack.c.b16 %v999, %v983
      %v1192 = vpack.c.b16 %v1016, %v1000
      %v1193 = vpack.c.b16 %v1017, %v1001
      %v1194 = vpack.c.b16 %v1018, %v1002
      %v1195 = vpack.c.b16 %v1019, %v1003
      %v1196 = vpack.c.b16 %v1020, %v1004
      %v1197 = vpack.c.b16 %v1021, %v1005
      %v1198 = vpack.c.b16 %v1022, %v1006
      %v1199 = vpack.c.b16 %v1023, %v1007
      %v1200 = vpack.c.b16 %v1024, %v1008
      %v1201 = vpack.c.b16 %v1025, %v1009
      %v1202 = vpack.c.b16 %v1026, %v1010
      %v1203 = vpack.c.b16 %v1027, %v1011
      %v1204 = vpack.c.b16 %v1028, %v1012
      %v1205 = vpack.c.b16 %v1029, %v1013
      %v1206 = vpack.c.b16 %v1030, %v1014
      %v1207 = vpack.c.b16 %v1031, %v1015
      %v1208 = vpack.c.b16 %v1048, %v1032
      %v1209 = vpack.c.b16 %v1049, %v1033
      %v1210 = vpack.c.b16 %v1050, %v1034
      %v1211 = vpack.c.b16 %v1051, %v1035
      %v1212 = vpack.c.b16 %v1052, %v1036
      %v1213 = vpack.c.b16 %v1053, %v1037
      %v1214 = vpack.c.b16 %v1054, %v1038
      %v1215 = vpack.c.b16 %v1055, %v1039
      %v1216 = vpack.c.b16 %v1056, %v1040
      %v1217 = vpack.c.b16 %v1057, %v1041
      %v1218 = vpack.c.b16 %v1058, %v1042
      %v1219 = vpack.c.b16 %v1059, %v1043
      %v1220 = vpack.c.b16 %v1060, %v1044
      %v1221 = vpack.c.b16 %v1061, %v1045
      %v1222 = vpack.c.b16 %v1062, %v1046
      %v1223 = vpack.c.b16 %v1063, %v1047
      %v1224 = vpack.c.b16 %v1080, %v1064
      %v1225 = vpack.c.b16 %v1081, %v1065
      %v1226 = vpack.c.b16 %v1082, %v1066
      %v1227 = vpack.c.b16 %v1083, %v1067
      %v1228 = vpack.c.b16 %v1084, %v1068
      %v1229 = vpack.c.b16 %v1085, %v1069
      %v1230 = vpack.c.b16 %v1086, %v1070
      %v1231 = vpack.c.b16 %v1087, %v1071
      %v1232 = vpack.c.b16 %v1088, %v1072
      %v1233 = vpack.c.b16 %v1089, %v1073
      %v1234 = vpack.c.b16 %v1090, %v1074
      %v1235 = vpack.c.b16 %v1091, %v1075
      %v1236 = vpack.c.b16 %v1092, %v1076
      %v1237 = vpack.c.b16 %v1093, %v1077
      %v1238 = vpack.c.b16 %v1094, %v1078
      %v1239 = vpack.c.b16 %v1095, %v1079
      %v1240 = vpack.c.b16 %v1112, %v1096
      %v1241 = vpack.c.b16 %v1113, %v1097
      %v1242 = vpack.c.b16 %v1114, %v1098
      %v1243 = vpack.c.b16 %v1115, %v1099
      %v1244 = vpack.c.b16 %v1116, %v1100
      %v1245 = vpack.c.b16 %v1117, %v1101
      %v1246 = vpack.c.b16 %v1118, %v1102
      %v1247 = vpack.c.b16 %v1119, %v1103
      %v1248 = vpack.c.b16 %v1120, %v1104
      %v1249 = vpack.c.b16 %v1121, %v1105
      %v1250 = vpack.c.b16 %v1122, %v1106
      %v1251 = vpack.c.b16 %v1123, %v1107
      %v1252 = vpack.c.b16 %v1124, %v1108
      %v1253 = vpack.c.b16 %v1125, %v1109
      %v1254 = vpack.c.b16 %v1126, %v1110
      %v1255 = vpack.c.b16 %v1127, %v1111
      %v1640 = vunpack.c.l.b16 %v406
      %v1641 = vunpack.c.l.b16 %v407
      %v1642 = vunpack.c.l.b16 %v408
      %v1643 = vunpack.c.l.b16 %v409
      %v1644 = vunpack.c.l.b16 %v410
      %v1645 = vunpack.c.l.b16 %v411
      %v1646 = vunpack.c.l.b16 %v412
      %v1647 = vunpack.c.l.b16 %v413
      %v1648 = vunpack.c.l.b16 %v414
      %v1649 = vunpack.c.l.b16 %v415
      %v1650 = vunpack.c.l.b16 %v416
      %v1651 = vunpack.c.l.b16 %v417
      %v1652 = vunpack.c.l.b16 %v418
      %v1653 = vunpack.c.l.b16 %v419
      %v1654 = vunpack.c.l.b16 %v420
      %v1655 = vunpack.c.l.b16 %v421
      %v1656 = vunpack.c.l.b16 %v422
      %v1657 = vunpack.c.l.b16 %v423
      %v1658 = vunpack.c.l.b16 %v424
      %v1659 = vunpack.c.l.b16 %v425
      %v1660 = vunpack.c.l.b16 %v426
      %v1661 = vunpack.c.l.b16 %v427
      %v1662 = vunpack.c.l.b16 %v428
      %v1663 = vunpack.c.l.b16 %v429
      %v1664 = vunpack.c.l.b16 %v430
      %v1665 = vunpack.c.l.b16 %v431
      %v1666 = vunpack.c.l.b16 %v432
      %v1667 = vunpack.c.l.b16 %v433
      %v1668 = vunpack.c.l.b16 %v434
      %v1669 = vunpack.c.l.b16 %v435
      %v1670 = vunpack.c.l.b16 %v436
      %v1671 = vunpack.c.l.b16 %v437
      %v1672 = vunpack.c.l.b16 %v438
      %v1673 = vunpack.c.l.b16 %v439
      %v1674 = vunpack.c.l.b16 %v440
      %v1675 = vunpack.c.l.b16 %v441
      %v1676 = vunpack.c.l.b16 %v442
      %v1677 = vunpack.c.l.b16 %v443
      %v1678 = vunpack.c.l.b16 %v444
      %v1679 = vunpack.c.l.b16 %v445
      %v1680 = vunpack.c.l.b16 %v446
      %v1681 = vunpack.c.l.b16 %v447
      %v1682 = vunpack.c.l.b16 %v448
      %v1683 = vunpack.c.l.b16 %v449
      %v1684 = vunpack.c.l.b16 %v450
      %v1685 = vunpack.c.l.b16 %v451
      %v1686 = vunpack.c.l.b16 %v452
      %v1687 = vunpack.c.l.b16 %v453
      %v1688 = vunpack.c.l.b16 %v454
      %v1689 = vunpack.c.l.b16 %v455
      %v1690 = vunpack.c.l.b16 %v456
      %v1691 = vunpack.c.l.b16 %v457
      %v1692 = vunpack.c.l.b16 %v458
      %v1693 = vunpack.c.l.b16 %v459
      %v1694 = vunpack.c.l.b16 %v460
      %v1695 = vunpack.c.l.b16 %v461
      %v1696 = vunpack.c.l.b16 %v462
      %v1697 = vunpack.c.l.b16 %v463
      %v1698 = vunpack.c.l.b16 %v464
      %v1699 = vunpack.c.l.b16 %v465
      %v1700 = vunpack.c.l.b16 %v466
      %v1701 = vunpack.c.l.b16 %v467
      %v1702 = vunpack.c.l.b16 %v468
      %v1703 = vunpack.c.l.b16 %v469
      %v1704 = vunpack.c.l.b16 %v470
      %v1705 = vunpack.c.l.b16 %v471
      %v1706 = vunpack.c.l.b16 %v472
      %v1707 = vunpack.c.l.b16 %v473
      %v1708 = vunpack.c.l.b16 %v474
      %v1709 = vunpack.c.l.b16 %v475
      %v1710 = vunpack.c.l.b16 %v476
      %v1711 = vunpack.c.l.b16 %v477
      %v1712 = vunpack.c.l.b16 %v478
      %v1713 = vunpack.c.l.b16 %v479
      %v1714 = vunpack.c.l.b16 %v480
      %v1715 = vunpack.c.l.b16 %v481
      %v1716 = vunpack.c.l.b16 %v482
      %v1717 = vunpack.c.l.b16 %v483
      %v1718 = vunpack.c.l.b16 %v484
      %v1719 = vunpack.c.l.b16 %v485
      %v1720 = vunpack.c.l.b16 %v486
      %v1721 = vunpack.c.l.b16 %v487
      %v1722 = vunpack.c.l.b16 %v488
      %v1723 = vunpack.c.l.b16 %v489
      %v1724 = vunpack.c.l.b16 %v490
      %v1725 = vunpack.c.l.b16 %v491
      %v1726 = vunpack.c.l.b16 %v492
      %v1727 = vunpack.c.l.b16 %v493
      %v1728 = vunpack.c.l.b16 %v494
      %v1729 = vunpack.c.l.b16 %v495
      %v1730 = vunpack.c.l.b16 %v496
      %v1731 = vunpack.c.l.b16 %v497
      %v1732 = vunpack.c.l.b16 %v498
      %v1733 = vunpack.c.l.b16 %v499
      %v1734 = vunpack.c.l.b16 %v500
      %v1735 = vunpack.c.l.b16 %v501
      %v1736 = vunpack.c.l.b16 %v502
      %v1737 = vunpack.c.l.b16 %v503
      %v1738 = vunpack.c.l.b16 %v504
      %v1739 = vunpack.c.l.b16 %v505
      %v1740 = vunpack.c.l.b16 %v506
      %v1741 = vunpack.c.l.b16 %v507
      %v1742 = vunpack.c.l.b16 %v508
      %v1743 = vunpack.c.l.b16 %v509
      %v1744 = vunpack.c.l.b16 %v510
      %v1745 = vunpack.c.l.b16 %v511
      %v1746 = vunpack.c.l.b16 %v512
      %v1747 = vunpack.c.l.b16 %v513
      %v1748 = vunpack.c.l.b16 %v514
      %v1749 = vunpack.c.l.b16 %v515
      %v1750 = vunpack.c.l.b16 %v516
      %v1751 = vunpack.c.l.b16 %v517
      %v1752 = vunpack.c.l.b16 %v518
      %v1753 = vunpack.c.l.b16 %v519
      %v1754 = vunpack.c.l.b16 %v520
      %v1755 = vunpack.c.l.b16 %v521
      %v1756 = vunpack.c.l.b16 %v522
      %v1757 = vunpack.c.l.b16 %v523
      %v1758 = vunpack.c.l.b16 %v524
      %v1759 = vunpack.c.l.b16 %v525
      %v1760 = vunpack.c.l.b16 %v526
      %v1761 = vunpack.c.l.b16 %v527
      %v1762 = vunpack.c.l.b16 %v528
      %v1763 = vunpack.c.l.b16 %v529
      %v1764 = vunpack.c.l.b16 %v530
      %v1765 = vunpack.c.l.b16 %v531
      %v1766 = vunpack.c.l.b16 %v532
      %v1767 = vunpack.c.l.b16 %v533
      %v1768 = vunpack.c.l.b16 %v534
      %v1769 = vunpack.c.l.b16 %v535
      %v1770 = vunpack.c.l.b16 %v536
      %v1771 = vunpack.c.l.b16 %v537
      %v1772 = vunpack.c.l.b16 %v538
      %v1773 = vunpack.c.l.b16 %v539
      %v1774 = vunpack.c.l.b16 %v540
      %v1775 = vunpack.c.l.b16 %v541
      %v1776 = vunpack.c.l.b16 %v542
      %v1777 = vunpack.c.l.b16 %v543
      %v1778 = vunpack.c.l.b16 %v544
      %v1779 = vunpack.c.l.b16 %v545
      %v1780 = vunpack.c.l.b16 %v546
      %v1781 = vunpack.c.l.b16 %v547
      %v1782 = vunpack.c.l.b16 %v548
      %v1783 = vunpack.c.l.b16 %v549
      %v1784 = vunpack.c.l.b16 %v550
      %v1785 = vunpack.c.l.b16 %v551
      %v1786 = vunpack.c.l.b16 %v552
      %v1787 = vunpack.c.l.b16 %v553
      %v1788 = vunpack.c.l.b16 %v554
      %v1789 = vunpack.c.l.b16 %v555
      %v1790 = vunpack.c.l.b16 %v556
      %v1791 = vunpack.c.l.b16 %v557
      %v1792 = vunpack.c.l.b16 %v558
      %v1793 = vunpack.c.l.b16 %v559
      %v1794 = vunpack.c.l.b16 %v560
      %v1795 = vunpack.c.l.b16 %v561
      %v1796 = vunpack.c.l.b16 %v562
      %v1797 = vunpack.c.l.b16 %v563
      %v1798 = vunpack.c.l.b16 %v564
      %v1799 = vunpack.c.l.b16 %v565
      %v1800 = vunpack.c.l.b16 %v566
      %v1801 = vunpack.c.l.b16 %v567
      %v1802 = vunpack.c.l.b16 %v568
      %v1803 = vunpack.c.l.b16 %v569
      %v1804 = vunpack.c.l.b16 %v570
      %v1805 = vunpack.c.l.b16 %v571
      %v1806 = vunpack.c.l.b16 %v572
      %v1807 = vunpack.c.l.b16 %v573
      %v1808 = vunpack.c.l.b16 %v574
      %v1809 = vunpack.c.l.b16 %v575
      %v1810 = vunpack.c.l.b16 %v576
      %v1811 = vunpack.c.l.b16 %v577
      %v1812 = vunpack.c.l.b16 %v578
      %v1813 = vunpack.c.l.b16 %v579
      %v1814 = vunpack.c.l.b16 %v580
      %v1815 = vunpack.c.l.b16 %v581
      %v1816 = vunpack.c.l.b16 %v582
      %v1817 = vunpack.c.l.b16 %v583
      %v1818 = vunpack.c.l.b16 %v584
      %v1819 = vunpack.c.l.b16 %v585
      %v1820 = vunpack.c.l.b16 %v586
      %v1821 = vunpack.c.l.b16 %v587
      %v1822 = vunpack.c.l.b16 %v588
      %v1823 = vunpack.c.l.b16 %v589
      %v1824 = vunpack.c.l.b16 %v590
      %v1825 = vunpack.c.l.b16 %v591
      %v1826 = vunpack.c.l.b16 %v592
      %v1827 = vunpack.c.l.b16 %v593
      %v1828 = vunpack.c.l.b16 %v594
      %v1829 = vunpack.c.l.b16 %v595
      %v1830 = vunpack.c.l.b16 %v596
      %v1831 = vunpack.c.l.b16 %v597
      %v1832 = vunpack.c.l.b16 %v598
      %v1833 = vunpack.c.l.b16 %v599
      %v1834 = vunpack.c.l.b16 %v600
      %v1835 = vunpack.c.l.b16 %v601
      %v1836 = vunpack.c.l.b16 %v602
      %v1837 = vunpack.c.l.b16 %v603
      %v1838 = vunpack.c.l.b16 %v604
      %v1839 = vunpack.c.l.b16 %v605
      %v1840 = vunpack.c.l.b16 %v606
      %v1841 = vunpack.c.l.b16 %v607
      %v1842 = vunpack.c.l.b16 %v608
      %v1843 = vunpack.c.l.b16 %v609
      %v1844 = vunpack.c.l.b16 %v610
      %v1845 = vunpack.c.l.b16 %v611
      %v1846 = vunpack.c.l.b16 %v612
      %v1847 = vunpack.c.l.b16 %v613
      %v1848 = vunpack.c.l.b16 %v614
      %v1849 = vunpack.c.l.b16 %v615
      %v1850 = vunpack.c.l.b16 %v616
      %v1851 = vunpack.c.l.b16 %v617
      %v1852 = vunpack.c.l.b16 %v618
      %v1853 = vunpack.c.l.b16 %v619
      %v1854 = vunpack.c.l.b16 %v620
      %v1855 = vunpack.c.l.b16 %v621
      %v1856 = vunpack.c.l.b16 %v622
      %v1857 = vunpack.c.l.b16 %v623
      %v1858 = vunpack.c.l.b16 %v624
      %v1859 = vunpack.c.l.b16 %v625
      %v1860 = vunpack.c.l.b16 %v626
      %v1861 = vunpack.c.l.b16 %v627
      %v1862 = vunpack.c.l.b16 %v628
      %v1863 = vunpack.c.l.b16 %v629
      %v1864 = vunpack.c.l.b16 %v630
      %v1865 = vunpack.c.l.b16 %v631
      %v1866 = vunpack.c.l.b16 %v632
      %v1867 = vunpack.c.l.b16 %v633
      %v1868 = vunpack.c.l.b16 %v634
      %v1869 = vunpack.c.l.b16 %v635
      %v1870 = vunpack.c.l.b16 %v636
      %v1871 = vunpack.c.l.b16 %v637
      %v1872 = vunpack.c.l.b16 %v638
      %v1873 = vunpack.c.l.b16 %v639
      %v1874 = vunpack.c.l.b16 %v640
      %v1875 = vunpack.c.l.b16 %v641
      %v1876 = vunpack.c.l.b16 %v642
      %v1877 = vunpack.c.l.b16 %v643
      %v1878 = vunpack.c.l.b16 %v644
      %v1879 = vunpack.c.l.b16 %v645
      %v1880 = vunpack.c.l.b16 %v646
      %v1881 = vunpack.c.l.b16 %v647
      %v1882 = vunpack.c.l.b16 %v648
      %v1883 = vunpack.c.l.b16 %v649
      %v1884 = vunpack.c.l.b16 %v650
      %v1885 = vunpack.c.l.b16 %v651
      %v1886 = vunpack.c.l.b16 %v652
      %v1887 = vunpack.c.l.b16 %v653
      %v1888 = vunpack.c.l.b16 %v654
      %v1889 = vunpack.c.l.b16 %v655
      %v1890 = vunpack.c.l.b16 %v656
      %v1891 = vunpack.c.l.b16 %v657
      %v1892 = vunpack.c.l.b16 %v658
      %v1893 = vunpack.c.l.b16 %v659
      %v1894 = vunpack.c.l.b16 %v660
      %v1895 = vunpack.c.l.b16 %v661
      %v1896 = vpack.c.b16 %v1641, %v1640
      %v1897 = vpack.c.b16 %v1643, %v1642
      %v1898 = vpack.c.b16 %v1645, %v1644
      %v1899 = vpack.c.b16 %v1647, %v1646
      %v1900 = vpack.c.b16 %v1649, %v1648
      %v1901 = vpack.c.b16 %v1651, %v1650
      %v1902 = vpack.c.b16 %v1653, %v1652
      %v1903 = vpack.c.b16 %v1655, %v1654
      %v1904 = vpack.c.b16 %v1657, %v1656
      %v1905 = vpack.c.b16 %v1659, %v1658
      %v1906 = vpack.c.b16 %v1661, %v1660
      %v1907 = vpack.c.b16 %v1663, %v1662
      %v1908 = vpack.c.b16 %v1665, %v1664
      %v1909 = vpack.c.b16 %v1667, %v1666
      %v1910 = vpack.c.b16 %v1669, %v1668
      %v1911 = vpack.c.b16 %v1671, %v1670
      %v1912 = vpack.c.b16 %v1673, %v1672
      %v1913 = vpack.c.b16 %v1675, %v1674
      %v1914 = vpack.c.b16 %v1677, %v1676
      %v1915 = vpack.c.b16 %v1679, %v1678
      %v1916 = vpack.c.b16 %v1681, %v1680
      %v1917 = vpack.c.b16 %v1683, %v1682
      %v1918 = vpack.c.b16 %v1685, %v1684
      %v1919 = vpack.c.b16 %v1687, %v1686
      %v1920 = vpack.c.b16 %v1689, %v1688
      %v1921 = vpack.c.b16 %v1691, %v1690
      %v1922 = vpack.c.b16 %v1693, %v1692
      %v1923 = vpack.c.b16 %v1695, %v1694
      %v1924 = vpack.c.b16 %v1697, %v1696
      %v1925 = vpack.c.b16 %v1699, %v1698
      %v1926 = vpack.c.b16 %v1701, %v1700
      %v1927 = vpack.c.b16 %v1703, %v1702
      %v1928 = vpack.c.b16 %v1705, %v1704
      %v1929 = vpack.c.b16 %v1707, %v1706
      %v1930 = vpack.c.b16 %v1709, %v1708
      %v1931 = vpack.c.b16 %v1711, %v1710
      %v1932 = vpack.c.b16 %v1713, %v1712
      %v1933 = vpack.c.b16 %v1715, %v1714
      %v1934 = vpack.c.b16 %v1717, %v1716
      %v1935 = vpack.c.b16 %v1719, %v1718
      %v1936 = vpack.c.b16 %v1721, %v1720
      %v1937 = vpack.c.b16 %v1723, %v1722
      %v1938 = vpack.c.b16 %v1725, %v1724
      %v1939 = vpack.c.b16 %v1727, %v1726
      %v1940 = vpack.c.b16 %v1729, %v1728
      %v1941 = vpack.c.b16 %v1731, %v1730
      %v1942 = vpack.c.b16 %v1733, %v1732
      %v1943 = vpack.c.b16 %v1735, %v1734
      %v1944 = vpack.c.b16 %v1737, %v1736
      %v1945 = vpack.c.b16 %v1739, %v1738
      %v1946 = vpack.c.b16 %v1741, %v1740
      %v1947 = vpack.c.b16 %v1743, %v1742
      %v1948 = vpack.c.b16 %v1745, %v1744
      %v1949 = vpack.c.b16 %v1747, %v1746
      %v1950 = vpack.c.b16 %v1749, %v1748
      %v1951 = vpack.c.b16 %v1751, %v1750
      %v1952 = vpack.c.b16 %v1753, %v1752
      %v1953 = vpack.c.b16 %v1755, %v1754
      %v1954 = vpack.c.b16 %v1757, %v1756
      %v1955 = vpack.c.b16 %v1759, %v1758
      %v1956 = vpack.c.b16 %v1761, %v1760
      %v1957 = vpack.c.b16 %v1763, %v1762
      %v1958 = vpack.c.b16 %v1765, %v1764
      %v1959 = vpack.c.b16 %v1767, %v1766
      %v1960 = vpack.c.b16 %v1769, %v1768
      %v1961 = vpack.c.b16 %v1771, %v1770
      %v1962 = vpack.c.b16 %v1773, %v1772
      %v1963 = vpack.c.b16 %v1775, %v1774
      %v1964 = vpack.c.b16 %v1777, %v1776
      %v1965 = vpack.c.b16 %v1779, %v1778
      %v1966 = vpack.c.b16 %v1781, %v1780
      %v1967 = vpack.c.b16 %v1783, %v1782
      %v1968 = vpack.c.b16 %v1785, %v1784
      %v1969 = vpack.c.b16 %v1787, %v1786
      %v1970 = vpack.c.b16 %v1789, %v1788
      %v1971 = vpack.c.b16 %v1791, %v1790
      %v1972 = vpack.c.b16 %v1793, %v1792
      %v1973 = vpack.c.b16 %v1795, %v1794
      %v1974 = vpack.c.b16 %v1797, %v1796
      %v1975 = vpack.c.b16 %v1799, %v1798
      %v1976 = vpack.c.b16 %v1801, %v1800
      %v1977 = vpack.c.b16 %v1803, %v1802
      %v1978 = vpack.c.b16 %v1805, %v1804
      %v1979 = vpack.c.b16 %v1807, %v1806
      %v1980 = vpack.c.b16 %v1809, %v1808
      %v1981 = vpack.c.b16 %v1811, %v1810
      %v1982 = vpack.c.b16 %v1813, %v1812
      %v1983 = vpack.c.b16 %v1815, %v1814
      %v1984 = vpack.c.b16 %v1817, %v1816
      %v1985 = vpack.c.b16 %v1819, %v1818
      %v1986 = vpack.c.b16 %v1821, %v1820
      %v1987 = vpack.c.b16 %v1823, %v1822
      %v1988 = vpack.c.b16 %v1825, %v1824
      %v1989 = vpack.c.b16 %v1827, %v1826
      %v1990 = vpack.c.b16 %v1829, %v1828
      %v1991 = vpack.c.b16 %v1831, %v1830
      %v1992 = vpack.c.b16 %v1833, %v1832
      %v1993 = vpack.c.b16 %v1835, %v1834
      %v1994 = vpack.c.b16 %v1837, %v1836
      %v1995 = vpack.c.b16 %v1839, %v1838
      %v1996 = vpack.c.b16 %v1841, %v1840
      %v1997 = vpack.c.b16 %v1843, %v1842
      %v1998 = vpack.c.b16 %v1845, %v1844
      %v1999 = vpack.c.b16 %v1847, %v1846
      %v2000 = vpack.c.b16 %v1849, %v1848
      %v2001 = vpack.c.b16 %v1851, %v1850
      %v2002 = vpack.c.b16 %v1853, %v1852
      %v2003 = vpack.c.b16 %v1855, %v1854
      %v2004 = vpack.c.b16 %v1857, %v1856
      %v2005 = vpack.c.b16 %v1859, %v1858
      %v2006 = vpack.c.b16 %v1861, %v1860
      %v2007 = vpack.c.b16 %v1863, %v1862
      %v2008 = vpack.c.b16 %v1865, %v1864
      %v2009 = vpack.c.b16 %v1867, %v1866
      %v2010 = vpack.c.b16 %v1869, %v1868
      %v2011 = vpack.c.b16 %v1871, %v1870
      %v2012 = vpack.c.b16 %v1873, %v1872
      %v2013 = vpack.c.b16 %v1875, %v1874
      %v2014 = vpack.c.b16 %v1877, %v1876
      %v2015 = vpack.c.b16 %v1879, %v1878
      %v2016 = vpack.c.b16 %v1881, %v1880
      %v2017 = vpack.c.b16 %v1883, %v1882
      %v2018 = vpack.c.b16 %v1885, %v1884
      %v2019 = vpack.c.b16 %v1887, %v1886
      %v2020 = vpack.c.b16 %v1889, %v1888
      %v2021 = vpack.c.b16 %v1891, %v1890
      %v2022 = vpack.c.b16 %v1893, %v1892
      %v2023 = vpack.c.b16 %v1895, %v1894
      %2152 = vmatprep.subr.bf16.mxu0 0
      %2153 = vmatpush1.bf16.msra.mxu0 %v1896
      %2154 = vmatprep.subr.bf16.mxu0 0
      %2155 = vmatpush1.bf16.msra.mxu0 %v1897
      %2156 = vmatprep.subr.bf16.mxu0 0
      %2157 = vmatpush1.bf16.msra.mxu0 %v1898
      %2158 = vmatprep.subr.bf16.mxu0 0
      %2159 = vmatpush1.bf16.msra.mxu0 %v1899
      %2160 = vmatprep.subr.bf16.mxu0 0
      %2161 = vmatpush1.bf16.msra.mxu0 %v1900
      %2162 = vmatprep.subr.bf16.mxu0 0
      %2163 = vmatpush1.bf16.msra.mxu0 %v1901
      %2164 = vmatprep.subr.bf16.mxu0 0
      %2165 = vmatpush1.bf16.msra.mxu0 %v1902
      %2166 = vmatprep.subr.bf16.mxu0 0
      %2167 = vmatpush1.bf16.msra.mxu0 %v1903
      %2168 = vmatprep.subr.bf16.mxu0 0
      %2169 = vmatpush1.bf16.msra.mxu0 %v1904
      %2170 = vmatprep.subr.bf16.mxu0 0
      %2171 = vmatpush1.bf16.msra.mxu0 %v1905
      %2172 = vmatprep.subr.bf16.mxu0 0
      %2173 = vmatpush1.bf16.msra.mxu0 %v1906
      %2174 = vmatprep.subr.bf16.mxu0 0
      %2175 = vmatpush1.bf16.msra.mxu0 %v1907
      %2176 = vmatprep.subr.bf16.mxu0 0
      %2177 = vmatpush1.bf16.msra.mxu0 %v1908
      %2178 = vmatprep.subr.bf16.mxu0 0
      %2179 = vmatpush1.bf16.msra.mxu0 %v1909
      %2180 = vmatprep.subr.bf16.mxu0 0
      %2181 = vmatpush1.bf16.msra.mxu0 %v1910
      %2182 = vmatprep.subr.bf16.mxu0 0
      %2183 = vmatpush1.bf16.msra.mxu0 %v1911
      %2184 = vmatprep.mubr.bf16.mxu0 %v1129
      %2185 = vmatmul.mubr.bf16.gmra.mrb[0].mxu0 %v1128
      %v2186 = vpop.f32.mrb[0].mxu0
      %v2187 = vadd.f32 %v681, %v2186
      %v2188 = vpop.f32.mrb[0].mxu0
      %v2189 = vpop.f32.mrb[0].mxu0
      %v2190 = vadd.f32 %v686, %v2189
      %v2191 = vpop.f32.mrb[0].mxu0
      %2192 = vmatprep.mubr.bf16.mxu0 %v1145
      %2193 = vmatmul.mubr.bf16.gmra.mrb[0].mxu0 %v1144
      %v2194 = vpop.f32.mrb[0].mxu0
      %v2195 = vpop.f32.mrb[0].mxu0
      %v2196 = vpop.f32.mrb[0].mxu0
      %v2197 = vpop.f32.mrb[0].mxu0
      %2198 = vmatprep.mubr.bf16.mxu0 %v1161
      %2199 = vmatmul.mubr.bf16.gmra.mrb[0].mxu0 %v1160
      %v2200 = vpop.f32.mrb[0].mxu0
      %v2201 = vpop.f32.mrb[0].mxu0
      %v2202 = vpop.f32.mrb[0].mxu0
      %v2203 = vpop.f32.mrb[0].mxu0
      %2204 = vmatprep.mubr.bf16.mxu0 %v1177
      %2205 = vmatmul.mubr.bf16.gmra.mrb[0].mxu0 %v1176
      %v2206 = vpop.f32.mrb[0].mxu0
      %v2207 = vpop.f32.mrb[0].mxu0
      %v2208 = vpop.f32.mrb[0].mxu0
      %v2209 = vpop.f32.mrb[0].mxu0
      %2210 = vmatprep.mubr.bf16.mxu0 %v1193
      %2211 = vmatmul.mubr.bf16.gmra.mrb[0].mxu0 %v1192
      %v2212 = vpop.f32.mrb[0].mxu0
      %v2213 = vpop.f32.mrb[0].mxu0
      %v2214 = vpop.f32.mrb[0].mxu0
      %v2215 = vpop.f32.mrb[0].mxu0
      %2216 = vmatprep.mubr.bf16.mxu0 %v1209
      %2217 = vmatmul.mubr.bf16.gmra.mrb[0].mxu0 %v1208
      %v2218 = vpop.f32.mrb[0].mxu0
      %v2219 = vpop.f32.mrb[0].mxu0
      %v2220 = vpop.f32.mrb[0].mxu0
      %v2221 = vpop.f32.mrb[0].mxu0
      %2222 = vmatprep.mubr.bf16.mxu0 %v1225
      %2223 = vmatmul.mubr.bf16.gmra.mrb[0].mxu0 %v1224
      %v2224 = vpop.f32.mrb[0].mxu0
      %v2225 = vpop.f32.mrb[0].mxu0
      %v2226 = vpop.f32.mrb[0].mxu0
      %v2227 = vpop.f32.mrb[0].mxu0
      %2228 = vmatprep.mubr.bf16.mxu0 %v1241
      %2229 = vmatmul.mubr.bf16.gmra.mrb[0].mxu0 %v1240
      %v2230 = vpop.f32.mrb[0].mxu0
      %v2231 = vpop.f32.mrb[0].mxu0
      %v2232 = vpop.f32.mrb[0].mxu0
      %v2233 = vpop.f32.mrb[0].mxu0
      %2234 = vdwg.mxu0
      %2235 = vmatprep.subr.bf16.mxu0 0
      %2236 = vmatpush1.bf16.msra.mxu0 %v1912
      %2237 = vmatprep.subr.bf16.mxu0 0
      %2238 = vmatpush1.bf16.msra.mxu0 %v1913
      %2239 = vmatprep.subr.bf16.mxu0 0
      %2240 = vmatpush1.bf16.msra.mxu0 %v1914
      %2241 = vmatprep.subr.bf16.mxu0 0
      %2242 = vmatpush1.bf16.msra.mxu0 %v1915
      %2243 = vmatprep.subr.bf16.mxu0 0
      %2244 = vmatpush1.bf16.msra.mxu0 %v1916
      %2245 = vmatprep.subr.bf16.mxu0 0
      %2246 = vmatpush1.bf16.msra.mxu0 %v1917
      %2247 = vmatprep.subr.bf16.mxu0 0
      %2248 = vmatpush1.bf16.msra.mxu0 %v1918
      %2249 = vmatprep.subr.bf16.mxu0 0
      %2250 = vmatpush1.bf16.msra.mxu0 %v1919
      %2251 = vmatprep.subr.bf16.mxu0 0
      %2252 = vmatpush1.bf16.msra.mxu0 %v1920
      %2253 = vmatprep.subr.bf16.mxu0 0
      %2254 = vmatpush1.bf16.msra.mxu0 %v1921
      %2255 = vmatprep.subr.bf16.mxu0 0
      %2256 = vmatpush1.bf16.msra.mxu0 %v1922
      %2257 = vmatprep.subr.bf16.mxu0 0
      %2258 = vmatpush1.bf16.msra.mxu0 %v1923
      %2259 = vmatprep.subr.bf16.mxu0 0
      %2260 = vmatpush1.bf16.msra.mxu0 %v1924
      %2261 = vmatprep.subr.bf16.mxu0 0
      %2262 = vmatpush1.bf16.msra.mxu0 %v1925
      %2263 = vmatprep.subr.bf16.mxu0 0
      %2264 = vmatpush1.bf16.msra.mxu0 %v1926
      %2265 = vmatprep.subr.bf16.mxu0 0
      %2266 = vmatpush1.bf16.msra.mxu0 %v1927
      %2267 = vmatprep.mubr.bf16.mxu0 %v1131
      %2268 = vmatmul.mubr.bf16.gmra.mrb[0].mxu0 %v1130
      %v2269 = vpop.f32.mrb[0].mxu0
      %v2270 = vadd.f32 %v2187, %v2269
      %v2271 = vpop.f32.mrb[0].mxu0
      %v2272 = vpop.f32.mrb[0].mxu0
      %v2273 = vadd.f32 %v2190, %v2272
      %v2274 = vpop.f32.mrb[0].mxu0
      %2275 = vmatprep.mubr.bf16.mxu0 %v1147
      %2276 = vmatmul.mubr.bf16.gmra.mrb[0].mxu0 %v1146
      %v2277 = vpop.f32.mrb[0].mxu0
      %v2278 = vpop.f32.mrb[0].mxu0
      %v2279 = vpop.f32.mrb[0].mxu0
      %v2280 = vpop.f32.mrb[0].mxu0
      %2281 = vmatprep.mubr.bf16.mxu0 %v1163
      %2282 = vmatmul.mubr.bf16.gmra.mrb[0].mxu0 %v1162
      %v2283 = vpop.f32.mrb[0].mxu0
      %v2284 = vpop.f32.mrb[0].mxu0
      %v2285 = vpop.f32.mrb[0].mxu0
      %v2286 = vpop.f32.mrb[0].mxu0
      %2287 = vmatprep.mubr.bf16.mxu0 %v1179
      %2288 = vmatmul.mubr.bf16.gmra.mrb[0].mxu0 %v1178
      %v2289 = vpop.f32.mrb[0].mxu0
      %v2290 = vpop.f32.mrb[0].mxu0
      %v2291 = vpop.f32.mrb[0].mxu0
      %v2292 = vpop.f32.mrb[0].mxu0
      %2293 = vmatprep.mubr.bf16.mxu0 %v1195
      %2294 = vmatmul.mubr.bf16.gmra.mrb[0].mxu0 %v1194
      %v2295 = vpop.f32.mrb[0].mxu0
      %v2296 = vpop.f32.mrb[0].mxu0
      %v2297 = vpop.f32.mrb[0].mxu0
      %v2298 = vpop.f32.mrb[0].mxu0
      %2299 = vmatprep.mubr.bf16.mxu0 %v1211
      %2300 = vmatmul.mubr.bf16.gmra.mrb[0].mxu0 %v1210
      %v2301 = vpop.f32.mrb[0].mxu0
      %v2302 = vpop.f32.mrb[0].mxu0
      %v2303 = vpop.f32.mrb[0].mxu0
      %v2304 = vpop.f32.mrb[0].mxu0
      %2305 = vmatprep.mubr.bf16.mxu0 %v1227
      %2306 = vmatmul.mubr.bf16.gmra.mrb[0].mxu0 %v1226
      %v2307 = vpop.f32.mrb[0].mxu0
      %v2308 = vpop.f32.mrb[0].mxu0
      %v2309 = vpop.f32.mrb[0].mxu0
      %v2310 = vpop.f32.mrb[0].mxu0
      %2311 = vmatprep.mubr.bf16.mxu0 %v1243
      %2312 = vmatmul.mubr.bf16.gmra.mrb[0].mxu0 %v1242
      %v2313 = vpop.f32.mrb[0].mxu0
      %v2314 = vpop.f32.mrb[0].mxu0
      %v2315 = vpop.f32.mrb[0].mxu0
      %v2316 = vpop.f32.mrb[0].mxu0
      %2317 = vdwg.mxu0
      %2318 = vmatprep.subr.bf16.mxu0 0
      %2319 = vmatpush1.bf16.msra.mxu0 %v1928
      %2320 = vmatprep.subr.bf16.mxu0 0
      %2321 = vmatpush1.bf16.msra.mxu0 %v1929
      %2322 = vmatprep.subr.bf16.mxu0 0
      %2323 = vmatpush1.bf16.msra.mxu0 %v1930
      %2324 = vmatprep.subr.bf16.mxu0 0
      %2325 = vmatpush1.bf16.msra.mxu0 %v1931
      %2326 = vmatprep.subr.bf16.mxu0 0
      %2327 = vmatpush1.bf16.msra.mxu0 %v1932
      %2328 = vmatprep.subr.bf16.mxu0 0
      %2329 = vmatpush1.bf16.msra.mxu0 %v1933
      %2330 = vmatprep.subr.bf16.mxu0 0
      %2331 = vmatpush1.bf16.msra.mxu0 %v1934
      %2332 = vmatprep.subr.bf16.mxu0 0
      %2333 = vmatpush1.bf16.msra.mxu0 %v1935
      %2334 = vmatprep.subr.bf16.mxu0 0
      %2335 = vmatpush1.bf16.msra.mxu0 %v1936
      %2336 = vmatprep.subr.bf16.mxu0 0
      %2337 = vmatpush1.bf16.msra.mxu0 %v1937
      %2338 = vmatprep.subr.bf16.mxu0 0
      %2339 = vmatpush1.bf16.msra.mxu0 %v1938
      %2340 = vmatprep.subr.bf16.mxu0 0
      %2341 = vmatpush1.bf16.msra.mxu0 %v1939
      %2342 = vmatprep.subr.bf16.mxu0 0
      %2343 = vmatpush1.bf16.msra.mxu0 %v1940
      %2344 = vmatprep.subr.bf16.mxu0 0
      %2345 = vmatpush1.bf16.msra.mxu0 %v1941
      %2346 = vmatprep.subr.bf16.mxu0 0
      %2347 = vmatpush1.bf16.msra.mxu0 %v1942
      %2348 = vmatprep.subr.bf16.mxu0 0
      %2349 = vmatpush1.bf16.msra.mxu0 %v1943
      %2350 = vmatprep.mubr.bf16.mxu0 %v1133
      %2351 = vmatmul.mubr.bf16.gmra.mrb[0].mxu0 %v1132
      %v2352 = vpop.f32.mrb[0].mxu0
      %v2353 = vadd.f32 %v2270, %v2352
      %v2354 = vpop.f32.mrb[0].mxu0
      %v2355 = vpop.f32.mrb[0].mxu0
      %v2356 = vadd.f32 %v2273, %v2355
      %v2357 = vpop.f32.mrb[0].mxu0
      %2358 = vmatprep.mubr.bf16.mxu0 %v1149
      %2359 = vmatmul.mubr.bf16.gmra.mrb[0].mxu0 %v1148
      %v2360 = vpop.f32.mrb[0].mxu0
      %v2361 = vpop.f32.mrb[0].mxu0
      %v2362 = vpop.f32.mrb[0].mxu0
      %v2363 = vpop.f32.mrb[0].mxu0
      %2364 = vmatprep.mubr.bf16.mxu0 %v1165
      %2365 = vmatmul.mubr.bf16.gmra.mrb[0].mxu0 %v1164
      %v2366 = vpop.f32.mrb[0].mxu0
      %v2367 = vpop.f32.mrb[0].mxu0
      %v2368 = vpop.f32.mrb[0].mxu0
      %v2369 = vpop.f32.mrb[0].mxu0
      %2370 = vmatprep.mubr.bf16.mxu0 %v1181
      %2371 = vmatmul.mubr.bf16.gmra.mrb[0].mxu0 %v1180
      %v2372 = vpop.f32.mrb[0].mxu0
      %v2373 = vpop.f32.mrb[0].mxu0
      %v2374 = vpop.f32.mrb[0].mxu0
      %v2375 = vpop.f32.mrb[0].mxu0
      %2376 = vmatprep.mubr.bf16.mxu0 %v1197
      %2377 = vmatmul.mubr.bf16.gmra.mrb[0].mxu0 %v1196
      %v2378 = vpop.f32.mrb[0].mxu0
      %v2379 = vpop.f32.mrb[0].mxu0
      %v2380 = vpop.f32.mrb[0].mxu0
      %v2381 = vpop.f32.mrb[0].mxu0
      %2382 = vmatprep.mubr.bf16.mxu0 %v1213
      %2383 = vmatmul.mubr.bf16.gmra.mrb[0].mxu0 %v1212
      %v2384 = vpop.f32.mrb[0].mxu0
      %v2385 = vpop.f32.mrb[0].mxu0
      %v2386 = vpop.f32.mrb[0].mxu0
      %v2387 = vpop.f32.mrb[0].mxu0
      %2388 = vmatprep.mubr.bf16.mxu0 %v1229
      %2389 = vmatmul.mubr.bf16.gmra.mrb[0].mxu0 %v1228
      %v2390 = vpop.f32.mrb[0].mxu0
      %v2391 = vpop.f32.mrb[0].mxu0
      %v2392 = vpop.f32.mrb[0].mxu0
      %v2393 = vpop.f32.mrb[0].mxu0
      %2394 = vmatprep.mubr.bf16.mxu0 %v1245
      %2395 = vmatmul.mubr.bf16.gmra.mrb[0].mxu0 %v1244
      %v2396 = vpop.f32.mrb[0].mxu0
      %v2397 = vpop.f32.mrb[0].mxu0
      %v2398 = vpop.f32.mrb[0].mxu0
      %v2399 = vpop.f32.mrb[0].mxu0
      %2400 = vdwg.mxu0
      %2401 = vmatprep.subr.bf16.mxu0 0
      %2402 = vmatpush1.bf16.msra.mxu0 %v1944
      %2403 = vmatprep.subr.bf16.mxu0 0
      %2404 = vmatpush1.bf16.msra.mxu0 %v1945
      %2405 = vmatprep.subr.bf16.mxu0 0
      %2406 = vmatpush1.bf16.msra.mxu0 %v1946
      %2407 = vmatprep.subr.bf16.mxu0 0
      %2408 = vmatpush1.bf16.msra.mxu0 %v1947
      %2409 = vmatprep.subr.bf16.mxu0 0
      %2410 = vmatpush1.bf16.msra.mxu0 %v1948
      %2411 = vmatprep.subr.bf16.mxu0 0
      %2412 = vmatpush1.bf16.msra.mxu0 %v1949
      %2413 = vmatprep.subr.bf16.mxu0 0
      %2414 = vmatpush1.bf16.msra.mxu0 %v1950
      %2415 = vmatprep.subr.bf16.mxu0 0
      %2416 = vmatpush1.bf16.msra.mxu0 %v1951
      %2417 = vmatprep.subr.bf16.mxu0 0
      %2418 = vmatpush1.bf16.msra.mxu0 %v1952
      %2419 = vmatprep.subr.bf16.mxu0 0
      %2420 = vmatpush1.bf16.msra.mxu0 %v1953
      %2421 = vmatprep.subr.bf16.mxu0 0
      %2422 = vmatpush1.bf16.msra.mxu0 %v1954
      %2423 = vmatprep.subr.bf16.mxu0 0
      %2424 = vmatpush1.bf16.msra.mxu0 %v1955
      %2425 = vmatprep.subr.bf16.mxu0 0
      %2426 = vmatpush1.bf16.msra.mxu0 %v1956
      %2427 = vmatprep.subr.bf16.mxu0 0
      %2428 = vmatpush1.bf16.msra.mxu0 %v1957
      %2429 = vmatprep.subr.bf16.mxu0 0
      %2430 = vmatpush1.bf16.msra.mxu0 %v1958
      %2431 = vmatprep.subr.bf16.mxu0 0
      %2432 = vmatpush1.bf16.msra.mxu0 %v1959
      %2433 = vmatprep.mubr.bf16.mxu0 %v1135
      %2434 = vmatmul.mubr.bf16.gmra.mrb[0].mxu0 %v1134
      %v2435 = vpop.f32.mrb[0].mxu0
      %v2436 = vadd.f32 %v2353, %v2435
      %v2437 = vpop.f32.mrb[0].mxu0
      %v2438 = vpop.f32.mrb[0].mxu0
      %v2439 = vadd.f32 %v2356, %v2438
      %v2440 = vpop.f32.mrb[0].mxu0
      %2441 = vmatprep.mubr.bf16.mxu0 %v1151
      %2442 = vmatmul.mubr.bf16.gmra.mrb[0].mxu0 %v1150
      %v2443 = vpop.f32.mrb[0].mxu0
      %v2444 = vpop.f32.mrb[0].mxu0
      %v2445 = vpop.f32.mrb[0].mxu0
      %v2446 = vpop.f32.mrb[0].mxu0
      %2447 = vmatprep.mubr.bf16.mxu0 %v1167
      %2448 = vmatmul.mubr.bf16.gmra.mrb[0].mxu0 %v1166
      %v2449 = vpop.f32.mrb[0].mxu0
      %v2450 = vpop.f32.mrb[0].mxu0
      %v2451 = vpop.f32.mrb[0].mxu0
      %v2452 = vpop.f32.mrb[0].mxu0
      %2453 = vmatprep.mubr.bf16.mxu0 %v1183
      %2454 = vmatmul.mubr.bf16.gmra.mrb[0].mxu0 %v1182
      %v2455 = vpop.f32.mrb[0].mxu0
      %v2456 = vpop.f32.mrb[0].mxu0
      %v2457 = vpop.f32.mrb[0].mxu0
      %v2458 = vpop.f32.mrb[0].mxu0
      %2459 = vmatprep.mubr.bf16.mxu0 %v1199
      %2460 = vmatmul.mubr.bf16.gmra.mrb[0].mxu0 %v1198
      %v2461 = vpop.f32.mrb[0].mxu0
      %v2462 = vpop.f32.mrb[0].mxu0
      %v2463 = vpop.f32.mrb[0].mxu0
      %v2464 = vpop.f32.mrb[0].mxu0
      %2465 = vmatprep.mubr.bf16.mxu0 %v1215
      %2466 = vmatmul.mubr.bf16.gmra.mrb[0].mxu0 %v1214
      %v2467 = vpop.f32.mrb[0].mxu0
      %v2468 = vpop.f32.mrb[0].mxu0
      %v2469 = vpop.f32.mrb[0].mxu0
      %v2470 = vpop.f32.mrb[0].mxu0
      %2471 = vmatprep.mubr.bf16.mxu0 %v1231
      %2472 = vmatmul.mubr.bf16.gmra.mrb[0].mxu0 %v1230
      %v2473 = vpop.f32.mrb[0].mxu0
      %v2474 = vpop.f32.mrb[0].mxu0
      %v2475 = vpop.f32.mrb[0].mxu0
      %v2476 = vpop.f32.mrb[0].mxu0
      %2477 = vmatprep.mubr.bf16.mxu0 %v1247
      %2478 = vmatmul.mubr.bf16.gmra.mrb[0].mxu0 %v1246
      %v2479 = vpop.f32.mrb[0].mxu0
      %v2480 = vpop.f32.mrb[0].mxu0
      %v2481 = vpop.f32.mrb[0].mxu0
      %v2482 = vpop.f32.mrb[0].mxu0
      %2483 = vdwg.mxu0
      %2484 = vmatprep.subr.bf16.mxu0 0
      %2485 = vmatpush1.bf16.msra.mxu0 %v1960
      %2486 = vmatprep.subr.bf16.mxu0 0
      %2487 = vmatpush1.bf16.msra.mxu0 %v1961
      %2488 = vmatprep.subr.bf16.mxu0 0
      %2489 = vmatpush1.bf16.msra.mxu0 %v1962
      %2490 = vmatprep.subr.bf16.mxu0 0
      %2491 = vmatpush1.bf16.msra.mxu0 %v1963
      %2492 = vmatprep.subr.bf16.mxu0 0
      %2493 = vmatpush1.bf16.msra.mxu0 %v1964
      %2494 = vmatprep.subr.bf16.mxu0 0
      %2495 = vmatpush1.bf16.msra.mxu0 %v1965
      %2496 = vmatprep.subr.bf16.mxu0 0
      %2497 = vmatpush1.bf16.msra.mxu0 %v1966
      %2498 = vmatprep.subr.bf16.mxu0 0
      %2499 = vmatpush1.bf16.msra.mxu0 %v1967
      %2500 = vmatprep.subr.bf16.mxu0 0
      %2501 = vmatpush1.bf16.msra.mxu0 %v1968
      %2502 = vmatprep.subr.bf16.mxu0 0
      %2503 = vmatpush1.bf16.msra.mxu0 %v1969
      %2504 = vmatprep.subr.bf16.mxu0 0
      %2505 = vmatpush1.bf16.msra.mxu0 %v1970
      %2506 = vmatprep.subr.bf16.mxu0 0
      %2507 = vmatpush1.bf16.msra.mxu0 %v1971
      %2508 = vmatprep.subr.bf16.mxu0 0
      %2509 = vmatpush1.bf16.msra.mxu0 %v1972
      %2510 = vmatprep.subr.bf16.mxu0 0
      %2511 = vmatpush1.bf16.msra.mxu0 %v1973
      %2512 = vmatprep.subr.bf16.mxu0 0
      %2513 = vmatpush1.bf16.msra.mxu0 %v1974
      %2514 = vmatprep.subr.bf16.mxu0 0
      %2515 = vmatpush1.bf16.msra.mxu0 %v1975
      %2516 = vmatprep.mubr.bf16.mxu0 %v1137
      %2517 = vmatmul.mubr.bf16.gmra.mrb[0].mxu0 %v1136
      %v2518 = vpop.f32.mrb[0].mxu0
      %v2519 = vadd.f32 %v2436, %v2518
      %v2520 = vpop.f32.mrb[0].mxu0
      %v2521 = vpop.f32.mrb[0].mxu0
      %v2522 = vadd.f32 %v2439, %v2521
      %v2523 = vpop.f32.mrb[0].mxu0
      %2524 = vmatprep.mubr.bf16.mxu0 %v1153
      %2525 = vmatmul.mubr.bf16.gmra.mrb[0].mxu0 %v1152
      %v2526 = vpop.f32.mrb[0].mxu0
      %v2527 = vpop.f32.mrb[0].mxu0
      %v2528 = vpop.f32.mrb[0].mxu0
      %v2529 = vpop.f32.mrb[0].mxu0
      %2530 = vmatprep.mubr.bf16.mxu0 %v1169
      %2531 = vmatmul.mubr.bf16.gmra.mrb[0].mxu0 %v1168
      %v2532 = vpop.f32.mrb[0].mxu0
      %v2533 = vpop.f32.mrb[0].mxu0
      %v2534 = vpop.f32.mrb[0].mxu0
      %v2535 = vpop.f32.mrb[0].mxu0
      %2536 = vmatprep.mubr.bf16.mxu0 %v1185
      %2537 = vmatmul.mubr.bf16.gmra.mrb[0].mxu0 %v1184
      %v2538 = vpop.f32.mrb[0].mxu0
      %v2539 = vpop.f32.mrb[0].mxu0
      %v2540 = vpop.f32.mrb[0].mxu0
      %v2541 = vpop.f32.mrb[0].mxu0
      %2542 = vmatprep.mubr.bf16.mxu0 %v1201
      %2543 = vmatmul.mubr.bf16.gmra.mrb[0].mxu0 %v1200
      %v2544 = vpop.f32.mrb[0].mxu0
      %v2545 = vpop.f32.mrb[0].mxu0
      %v2546 = vpop.f32.mrb[0].mxu0
      %v2547 = vpop.f32.mrb[0].mxu0
      %2548 = vmatprep.mubr.bf16.mxu0 %v1217
      %2549 = vmatmul.mubr.bf16.gmra.mrb[0].mxu0 %v1216
      %v2550 = vpop.f32.mrb[0].mxu0
      %v2551 = vpop.f32.mrb[0].mxu0
      %v2552 = vpop.f32.mrb[0].mxu0
      %v2553 = vpop.f32.mrb[0].mxu0
      %2554 = vmatprep.mubr.bf16.mxu0 %v1233
      %2555 = vmatmul.mubr.bf16.gmra.mrb[0].mxu0 %v1232
      %v2556 = vpop.f32.mrb[0].mxu0
      %v2557 = vpop.f32.mrb[0].mxu0
      %v2558 = vpop.f32.mrb[0].mxu0
      %v2559 = vpop.f32.mrb[0].mxu0
      %2560 = vmatprep.mubr.bf16.mxu0 %v1249
      %2561 = vmatmul.mubr.bf16.gmra.mrb[0].mxu0 %v1248
      %v2562 = vpop.f32.mrb[0].mxu0
      %v2563 = vpop.f32.mrb[0].mxu0
      %v2564 = vpop.f32.mrb[0].mxu0
      %v2565 = vpop.f32.mrb[0].mxu0
      %2566 = vdwg.mxu0
      %2567 = vmatprep.subr.bf16.mxu0 0
      %2568 = vmatpush1.bf16.msra.mxu0 %v1976
      %2569 = vmatprep.subr.bf16.mxu0 0
      %2570 = vmatpush1.bf16.msra.mxu0 %v1977
      %2571 = vmatprep.subr.bf16.mxu0 0
      %2572 = vmatpush1.bf16.msra.mxu0 %v1978
      %2573 = vmatprep.subr.bf16.mxu0 0
      %2574 = vmatpush1.bf16.msra.mxu0 %v1979
      %2575 = vmatprep.subr.bf16.mxu0 0
      %2576 = vmatpush1.bf16.msra.mxu0 %v1980
      %2577 = vmatprep.subr.bf16.mxu0 0
      %2578 = vmatpush1.bf16.msra.mxu0 %v1981
      %2579 = vmatprep.subr.bf16.mxu0 0
      %2580 = vmatpush1.bf16.msra.mxu0 %v1982
      %2581 = vmatprep.subr.bf16.mxu0 0
      %2582 = vmatpush1.bf16.msra.mxu0 %v1983
      %2583 = vmatprep.subr.bf16.mxu0 0
      %2584 = vmatpush1.bf16.msra.mxu0 %v1984
      %2585 = vmatprep.subr.bf16.mxu0 0
      %2586 = vmatpush1.bf16.msra.mxu0 %v1985
      %2587 = vmatprep.subr.bf16.mxu0 0
      %2588 = vmatpush1.bf16.msra.mxu0 %v1986
      %2589 = vmatprep.subr.bf16.mxu0 0
      %2590 = vmatpush1.bf16.msra.mxu0 %v1987
      %2591 = vmatprep.subr.bf16.mxu0 0
      %2592 = vmatpush1.bf16.msra.mxu0 %v1988
      %2593 = vmatprep.subr.bf16.mxu0 0
      %2594 = vmatpush1.bf16.msra.mxu0 %v1989
      %2595 = vmatprep.subr.bf16.mxu0 0
      %2596 = vmatpush1.bf16.msra.mxu0 %v1990
      %2597 = vmatprep.subr.bf16.mxu0 0
      %2598 = vmatpush1.bf16.msra.mxu0 %v1991
      %2599 = vmatprep.mubr.bf16.mxu0 %v1139
      %2600 = vmatmul.mubr.bf16.gmra.mrb[0].mxu0 %v1138
      %v2601 = vpop.f32.mrb[0].mxu0
      %v2602 = vadd.f32 %v2519, %v2601
      %v2603 = vpop.f32.mrb[0].mxu0
      %v2604 = vpop.f32.mrb[0].mxu0
      %v2605 = vadd.f32 %v2522, %v2604
      %v2606 = vpop.f32.mrb[0].mxu0
      %2607 = vmatprep.mubr.bf16.mxu0 %v1155
      %2608 = vmatmul.mubr.bf16.gmra.mrb[0].mxu0 %v1154
      %v2609 = vpop.f32.mrb[0].mxu0
      %v2610 = vpop.f32.mrb[0].mxu0
      %v2611 = vpop.f32.mrb[0].mxu0
      %v2612 = vpop.f32.mrb[0].mxu0
      %2613 = vmatprep.mubr.bf16.mxu0 %v1171
      %2614 = vmatmul.mubr.bf16.gmra.mrb[0].mxu0 %v1170
      %v2615 = vpop.f32.mrb[0].mxu0
      %v2616 = vpop.f32.mrb[0].mxu0
      %v2617 = vpop.f32.mrb[0].mxu0
      %v2618 = vpop.f32.mrb[0].mxu0
      %2619 = vmatprep.mubr.bf16.mxu0 %v1187
      %2620 = vmatmul.mubr.bf16.gmra.mrb[0].mxu0 %v1186
      %v2621 = vpop.f32.mrb[0].mxu0
      %v2622 = vpop.f32.mrb[0].mxu0
      %v2623 = vpop.f32.mrb[0].mxu0
      %v2624 = vpop.f32.mrb[0].mxu0
      %2625 = vmatprep.mubr.bf16.mxu0 %v1203
      %2626 = vmatmul.mubr.bf16.gmra.mrb[0].mxu0 %v1202
      %v2627 = vpop.f32.mrb[0].mxu0
      %v2628 = vpop.f32.mrb[0].mxu0
      %v2629 = vpop.f32.mrb[0].mxu0
      %v2630 = vpop.f32.mrb[0].mxu0
      %2631 = vmatprep.mubr.bf16.mxu0 %v1219
      %2632 = vmatmul.mubr.bf16.gmra.mrb[0].mxu0 %v1218
      %v2633 = vpop.f32.mrb[0].mxu0
      %v2634 = vpop.f32.mrb[0].mxu0
      %v2635 = vpop.f32.mrb[0].mxu0
      %v2636 = vpop.f32.mrb[0].mxu0
      %2637 = vmatprep.mubr.bf16.mxu0 %v1235
      %2638 = vmatmul.mubr.bf16.gmra.mrb[0].mxu0 %v1234
      %v2639 = vpop.f32.mrb[0].mxu0
      %v2640 = vpop.f32.mrb[0].mxu0
      %v2641 = vpop.f32.mrb[0].mxu0
      %v2642 = vpop.f32.mrb[0].mxu0
      %2643 = vmatprep.mubr.bf16.mxu0 %v1251
      %2644 = vmatmul.mubr.bf16.gmra.mrb[0].mxu0 %v1250
      %v2645 = vpop.f32.mrb[0].mxu0
      %v2646 = vpop.f32.mrb[0].mxu0
      %v2647 = vpop.f32.mrb[0].mxu0
      %v2648 = vpop.f32.mrb[0].mxu0
      %2649 = vdwg.mxu0
      %2650 = vmatprep.subr.bf16.mxu0 0
      %2651 = vmatpush1.bf16.msra.mxu0 %v1992
      %2652 = vmatprep.subr.bf16.mxu0 0
      %2653 = vmatpush1.bf16.msra.mxu0 %v1993
      %2654 = vmatprep.subr.bf16.mxu0 0
      %2655 = vmatpush1.bf16.msra.mxu0 %v1994
      %2656 = vmatprep.subr.bf16.mxu0 0
      %2657 = vmatpush1.bf16.msra.mxu0 %v1995
      %2658 = vmatprep.subr.bf16.mxu0 0
      %2659 = vmatpush1.bf16.msra.mxu0 %v1996
      %2660 = vmatprep.subr.bf16.mxu0 0
      %2661 = vmatpush1.bf16.msra.mxu0 %v1997
      %2662 = vmatprep.subr.bf16.mxu0 0
      %2663 = vmatpush1.bf16.msra.mxu0 %v1998
      %2664 = vmatprep.subr.bf16.mxu0 0
      %2665 = vmatpush1.bf16.msra.mxu0 %v1999
      %2666 = vmatprep.subr.bf16.mxu0 0
      %2667 = vmatpush1.bf16.msra.mxu0 %v2000
      %2668 = vmatprep.subr.bf16.mxu0 0
      %2669 = vmatpush1.bf16.msra.mxu0 %v2001
      %2670 = vmatprep.subr.bf16.mxu0 0
      %2671 = vmatpush1.bf16.msra.mxu0 %v2002
      %2672 = vmatprep.subr.bf16.mxu0 0
      %2673 = vmatpush1.bf16.msra.mxu0 %v2003
      %2674 = vmatprep.subr.bf16.mxu0 0
      %2675 = vmatpush1.bf16.msra.mxu0 %v2004
      %2676 = vmatprep.subr.bf16.mxu0 0
      %2677 = vmatpush1.bf16.msra.mxu0 %v2005
      %2678 = vmatprep.subr.bf16.mxu0 0
      %2679 = vmatpush1.bf16.msra.mxu0 %v2006
      %2680 = vmatprep.subr.bf16.mxu0 0
      %2681 = vmatpush1.bf16.msra.mxu0 %v2007
      %2682 = vmatprep.mubr.bf16.mxu0 %v1141
      %2683 = vmatmul.mubr.bf16.gmra.mrb[0].mxu0 %v1140
      %v2684 = vpop.f32.mrb[0].mxu0
      %v2685 = vadd.f32 %v2602, %v2684
      %v2686 = vpop.f32.mrb[0].mxu0
      %v2687 = vpop.f32.mrb[0].mxu0
      %v2688 = vadd.f32 %v2605, %v2687
      %v2689 = vpop.f32.mrb[0].mxu0
      %2690 = vmatprep.mubr.bf16.mxu0 %v1157
      %2691 = vmatmul.mubr.bf16.gmra.mrb[0].mxu0 %v1156
      %v2692 = vpop.f32.mrb[0].mxu0
      %v2693 = vpop.f32.mrb[0].mxu0
      %v2694 = vpop.f32.mrb[0].mxu0
      %v2695 = vpop.f32.mrb[0].mxu0
      %2696 = vmatprep.mubr.bf16.mxu0 %v1173
      %2697 = vmatmul.mubr.bf16.gmra.mrb[0].mxu0 %v1172
      %v2698 = vpop.f32.mrb[0].mxu0
      %v2699 = vpop.f32.mrb[0].mxu0
      %v2700 = vpop.f32.mrb[0].mxu0
      %v2701 = vpop.f32.mrb[0].mxu0
      %2702 = vmatprep.mubr.bf16.mxu0 %v1189
      %2703 = vmatmul.mubr.bf16.gmra.mrb[0].mxu0 %v1188
      %v2704 = vpop.f32.mrb[0].mxu0
      %v2705 = vpop.f32.mrb[0].mxu0
      %v2706 = vpop.f32.mrb[0].mxu0
      %v2707 = vpop.f32.mrb[0].mxu0
      %2708 = vmatprep.mubr.bf16.mxu0 %v1205
      %2709 = vmatmul.mubr.bf16.gmra.mrb[0].mxu0 %v1204
      %v2710 = vpop.f32.mrb[0].mxu0
      %v2711 = vpop.f32.mrb[0].mxu0
      %v2712 = vpop.f32.mrb[0].mxu0
      %v2713 = vpop.f32.mrb[0].mxu0
      %2714 = vmatprep.mubr.bf16.mxu0 %v1221
      %2715 = vmatmul.mubr.bf16.gmra.mrb[0].mxu0 %v1220
      %v2716 = vpop.f32.mrb[0].mxu0
      %v2717 = vpop.f32.mrb[0].mxu0
      %v2718 = vpop.f32.mrb[0].mxu0
      %v2719 = vpop.f32.mrb[0].mxu0
      %2720 = vmatprep.mubr.bf16.mxu0 %v1237
      %2721 = vmatmul.mubr.bf16.gmra.mrb[0].mxu0 %v1236
      %v2722 = vpop.f32.mrb[0].mxu0
      %v2723 = vpop.f32.mrb[0].mxu0
      %v2724 = vpop.f32.mrb[0].mxu0
      %v2725 = vpop.f32.mrb[0].mxu0
      %2726 = vmatprep.mubr.bf16.mxu0 %v1253
      %2727 = vmatmul.mubr.bf16.gmra.mrb[0].mxu0 %v1252
      %v2728 = vpop.f32.mrb[0].mxu0
      %v2729 = vpop.f32.mrb[0].mxu0
      %v2730 = vpop.f32.mrb[0].mxu0
      %v2731 = vpop.f32.mrb[0].mxu0
      %2732 = vdwg.mxu0
      %2733 = vmatprep.subr.bf16.mxu0 0
      %2734 = vmatpush1.bf16.msra.mxu0 %v2008
      %2735 = vmatprep.subr.bf16.mxu0 0
      %2736 = vmatpush1.bf16.msra.mxu0 %v2009
      %2737 = vmatprep.subr.bf16.mxu0 0
      %2738 = vmatpush1.bf16.msra.mxu0 %v2010
      %2739 = vmatprep.subr.bf16.mxu0 0
      %2740 = vmatpush1.bf16.msra.mxu0 %v2011
      %2741 = vmatprep.subr.bf16.mxu0 0
      %2742 = vmatpush1.bf16.msra.mxu0 %v2012
      %2743 = vmatprep.subr.bf16.mxu0 0
      %2744 = vmatpush1.bf16.msra.mxu0 %v2013
      %2745 = vmatprep.subr.bf16.mxu0 0
      %2746 = vmatpush1.bf16.msra.mxu0 %v2014
      %2747 = vmatprep.subr.bf16.mxu0 0
      %2748 = vmatpush1.bf16.msra.mxu0 %v2015
      %2749 = vmatprep.subr.bf16.mxu0 0
      %2750 = vmatpush1.bf16.msra.mxu0 %v2016
      %2751 = vmatprep.subr.bf16.mxu0 0
      %2752 = vmatpush1.bf16.msra.mxu0 %v2017
      %2753 = vmatprep.subr.bf16.mxu0 0
      %2754 = vmatpush1.bf16.msra.mxu0 %v2018
      %2755 = vmatprep.subr.bf16.mxu0 0
      %2756 = vmatpush1.bf16.msra.mxu0 %v2019
      %2757 = vmatprep.subr.bf16.mxu0 0
      %2758 = vmatpush1.bf16.msra.mxu0 %v2020
      %2759 = vmatprep.subr.bf16.mxu0 0
      %2760 = vmatpush1.bf16.msra.mxu0 %v2021
      %2761 = vmatprep.subr.bf16.mxu0 0
      %2762 = vmatpush1.bf16.msra.mxu0 %v2022
      %2763 = vmatprep.subr.bf16.mxu0 0
      %2764 = vmatpush1.bf16.msra.mxu0 %v2023
      %2765 = vmatprep.mubr.bf16.mxu0 %v1143
      %2766 = vmatmul.mubr.bf16.gmra.mrb[0].mxu0 %v1142
      %v2767 = vpop.f32.mrb[0].mxu0
      %v2768 = vadd.f32 %v2685, %v2767
      %v2769 = vpop.f32.mrb[0].mxu0
      %v2770 = vpop.f32.mrb[0].mxu0
      %v2771 = vadd.f32 %v2688, %v2770
      %v2772 = vpop.f32.mrb[0].mxu0
      %2773 = vmatprep.mubr.bf16.mxu0 %v1159
      %2774 = vmatmul.mubr.bf16.gmra.mrb[0].mxu0 %v1158
      %v2775 = vpop.f32.mrb[0].mxu0
      %v2776 = vpop.f32.mrb[0].mxu0
      %v2777 = vpop.f32.mrb[0].mxu0
      %v2778 = vpop.f32.mrb[0].mxu0
      %2779 = vmatprep.mubr.bf16.mxu0 %v1175
      %2780 = vmatmul.mubr.bf16.gmra.mrb[0].mxu0 %v1174
      %v2781 = vpop.f32.mrb[0].mxu0
      %v2782 = vpop.f32.mrb[0].mxu0
      %v2783 = vpop.f32.mrb[0].mxu0
      %v2784 = vpop.f32.mrb[0].mxu0
      %2785 = vmatprep.mubr.bf16.mxu0 %v1191
      %2786 = vmatmul.mubr.bf16.gmra.mrb[0].mxu0 %v1190
      %v2787 = vpop.f32.mrb[0].mxu0
      %v2788 = vpop.f32.mrb[0].mxu0
      %v2789 = vpop.f32.mrb[0].mxu0
      %v2790 = vpop.f32.mrb[0].mxu0
      %2791 = vmatprep.mubr.bf16.mxu0 %v1207
      %2792 = vmatmul.mubr.bf16.gmra.mrb[0].mxu0 %v1206
      %v2793 = vpop.f32.mrb[0].mxu0
      %v2794 = vpop.f32.mrb[0].mxu0
      %v2795 = vpop.f32.mrb[0].mxu0
      %v2796 = vpop.f32.mrb[0].mxu0
      %2797 = vmatprep.mubr.bf16.mxu0 %v1223
      %2798 = vmatmul.mubr.bf16.gmra.mrb[0].mxu0 %v1222
      %v2799 = vpop.f32.mrb[0].mxu0
      %v2800 = vpop.f32.mrb[0].mxu0
      %v2801 = vpop.f32.mrb[0].mxu0
      %v2802 = vpop.f32.mrb[0].mxu0
      %2803 = vmatprep.mubr.bf16.mxu0 %v1239
      %2804 = vmatmul.mubr.bf16.gmra.mrb[0].mxu0 %v1238
      %v2805 = vpop.f32.mrb[0].mxu0
      %v2806 = vpop.f32.mrb[0].mxu0
      %v2807 = vpop.f32.mrb[0].mxu0
      %v2808 = vpop.f32.mrb[0].mxu0
      %2809 = vmatprep.mubr.bf16.mxu0 %v1255
      %2810 = vmatmul.mubr.bf16.gmra.mrb[0].mxu0 %v1254
      %v2811 = vpop.f32.mrb[0].mxu0
      %v2812 = vpop.f32.mrb[0].mxu0
      %v2813 = vpop.f32.mrb[0].mxu0
      %v2814 = vpop.f32.mrb[0].mxu0
      %2815 = vdwg.mxu0
      %v2816 = vmax.f32 %v2768, 0.0
      %v2817 = vmax.f32 %v2771, 0.0
      %v2818 = vpack.c.bf16 %v2817, %v2816
      %v2819 = vld [vmem:[%s3] sm:$0xff]
      %v2820 = vld [vmem:[%s3 + $0x8] sm:$0xff]
      %v2821 = vld [vmem:[%s3 + $0x10] sm:$0xff]
      %v2822 = vld [vmem:[%s3 + $0x18] sm:$0xff]
      %v2823 = vld [vmem:[%s3 + $0x20] sm:$0xff]
      %v2824 = vld [vmem:[%s3 + $0x28] sm:$0xff]
      %v2825 = vld [vmem:[%s3 + $0x30] sm:$0xff]
      %v2826 = vld [vmem:[%s3 + $0x38] sm:$0xff]
      %v2827 = vld [vmem:[%s3 + $0x40] sm:$0xff]
      %v2828 = vld [vmem:[%s3 + $0x48] sm:$0xff]
      %v2829 = vld [vmem:[%s3 + $0x50] sm:$0xff]
      %v2830 = vld [vmem:[%s3 + $0x58] sm:$0xff]
      %v2831 = vld [vmem:[%s3 + $0x60] sm:$0xff]
      %v2832 = vld [vmem:[%s3 + $0x68] sm:$0xff]
      %v2833 = vld [vmem:[%s3 + $0x70] sm:$0xff]
      %v2834 = vld [vmem:[%s3 + $0x78] sm:$0xff]
      %s2835 = scalar_lea.vmem %s3, 128
      %v2836 = vld [vmem:[%s2835] sm:$0xff]
      %v2837 = vld [vmem:[%s2835 + $0x8] sm:$0xff]
      %v2838 = vld [vmem:[%s2835 + $0x10] sm:$0xff]
      %v2839 = vld [vmem:[%s2835 + $0x18] sm:$0xff]
      %v2840 = vld [vmem:[%s2835 + $0x20] sm:$0xff]
      %v2841 = vld [vmem:[%s2835 + $0x28] sm:$0xff]
      %v2842 = vld [vmem:[%s2835 + $0x30] sm:$0xff]
      %v2843 = vld [vmem:[%s2835 + $0x38] sm:$0xff]
      %v2844 = vld [vmem:[%s2835 + $0x40] sm:$0xff]
      %v2845 = vld [vmem:[%s2835 + $0x48] sm:$0xff]
      %v2846 = vld [vmem:[%s2835 + $0x50] sm:$0xff]
      %v2847 = vld [vmem:[%s2835 + $0x58] sm:$0xff]
      %v2848 = vld [vmem:[%s2835 + $0x60] sm:$0xff]
      %v2849 = vld [vmem:[%s2835 + $0x68] sm:$0xff]
      %v2850 = vld [vmem:[%s2835 + $0x70] sm:$0xff]
      %v2851 = vld [vmem:[%s2835 + $0x78] sm:$0xff]
      %v2853 = vshrl.u32 %v2818, 16
      %v2872 = vunpack.c.l.b16 %v2836
      %v2873 = vunpack.c.h.b16 %v2836
      %v2874 = vunpack.c.l.b16 %v2837
      %v2875 = vunpack.c.h.b16 %v2837
      %v2876 = vunpack.c.l.b16 %v2838
      %v2877 = vunpack.c.h.b16 %v2838
      %v2878 = vunpack.c.l.b16 %v2839
      %v2879 = vunpack.c.h.b16 %v2839
      %v2880 = vunpack.c.l.b16 %v2840
      %v2881 = vunpack.c.h.b16 %v2840
      %v2882 = vunpack.c.l.b16 %v2841
      %v2883 = vunpack.c.h.b16 %v2841
      %v2884 = vunpack.c.l.b16 %v2842
      %v2885 = vunpack.c.h.b16 %v2842
      %v2886 = vunpack.c.l.b16 %v2843
      %v2887 = vunpack.c.h.b16 %v2843
      %v2888 = vunpack.c.l.b16 %v2844
      %v2889 = vunpack.c.h.b16 %v2844
      %v2890 = vunpack.c.l.b16 %v2845
      %v2891 = vunpack.c.h.b16 %v2845
      %v2892 = vunpack.c.l.b16 %v2846
      %v2893 = vunpack.c.h.b16 %v2846
      %v2894 = vunpack.c.l.b16 %v2847
      %v2895 = vunpack.c.h.b16 %v2847
      %v2896 = vunpack.c.l.b16 %v2848
      %v2897 = vunpack.c.h.b16 %v2848
      %v2898 = vunpack.c.l.b16 %v2849
      %v2899 = vunpack.c.h.b16 %v2849
      %v2900 = vunpack.c.l.b16 %v2850
      %v2901 = vunpack.c.h.b16 %v2850
      %v2902 = vunpack.c.l.b16 %v2851
      %v2903 = vunpack.c.h.b16 %v2851
      %v2904 = vpack.c.b16 %v2874, %v2872
      %v2905 = vpack.c.b16 %v2875, %v2873
      %v2906 = vpack.c.b16 %v2878, %v2876
      %v2907 = vpack.c.b16 %v2879, %v2877
      %v2908 = vpack.c.b16 %v2882, %v2880
      %v2909 = vpack.c.b16 %v2883, %v2881
      %v2910 = vpack.c.b16 %v2886, %v2884
      %v2911 = vpack.c.b16 %v2887, %v2885
      %v2912 = vpack.c.b16 %v2890, %v2888
      %v2913 = vpack.c.b16 %v2891, %v2889
      %v2914 = vpack.c.b16 %v2894, %v2892
      %v2915 = vpack.c.b16 %v2895, %v2893
      %v2916 = vpack.c.b16 %v2898, %v2896
      %v2917 = vpack.c.b16 %v2899, %v2897
      %v2918 = vpack.c.b16 %v2902, %v2900
      %v2919 = vpack.c.b16 %v2903, %v2901
      %2936 = vmatprep.subr.bf16.mxu0 %v2905
      %2937 = vmatpush1.bf16.msra.mxu0 %v2904
      %2938 = vmatprep.subr.bf16.mxu0 %v2907
      %2939 = vmatpush1.bf16.msra.mxu0 %v2906
      %2940 = vmatprep.subr.bf16.mxu0 %v2909
      %2941 = vmatpush1.bf16.msra.mxu0 %v2908
      %2942 = vmatprep.subr.bf16.mxu0 %v2911
      %2943 = vmatpush1.bf16.msra.mxu0 %v2910
      %2944 = vmatprep.subr.bf16.mxu0 %v2913
      %2945 = vmatpush1.bf16.msra.mxu0 %v2912
      %2946 = vmatprep.subr.bf16.mxu0 %v2915
      %2947 = vmatpush1.bf16.msra.mxu0 %v2914
      %2948 = vmatprep.subr.bf16.mxu0 %v2917
      %2949 = vmatpush1.bf16.msra.mxu0 %v2916
      %2950 = vmatprep.subr.bf16.mxu0 %v2919
      %2951 = vmatpush1.bf16.msra.mxu0 %v2918
      %2952 = vmatprep.subr.bf16.mxu0 0
      %2953 = vmatpush1.bf16.msra.mxu0 0
      %2954 = vmatprep.subr.bf16.mxu0 0
      %2955 = vmatpush1.bf16.msra.mxu0 0
      %2956 = vmatprep.subr.bf16.mxu0 0
      %2957 = vmatpush1.bf16.msra.mxu0 0
      %2958 = vmatprep.subr.bf16.mxu0 0
      %2959 = vmatpush1.bf16.msra.mxu0 0
      %2960 = vmatprep.subr.bf16.mxu0 0
      %2961 = vmatpush1.bf16.msra.mxu0 0
      %2962 = vmatprep.subr.bf16.mxu0 0
      %2963 = vmatpush1.bf16.msra.mxu0 0
      %2964 = vmatprep.subr.bf16.mxu0 0
      %2965 = vmatpush1.bf16.msra.mxu0 0
      %2966 = vmatprep.subr.bf16.mxu0 0
      %2967 = vmatpush1.bf16.msra.mxu0 0
      %2968 = vmatprep.mubr.bf16.mxu0 0
      %2969 = vmatmul.mubr.bf16.gmra.mrb[0].mxu0 %v2853
      %v2970 = vpop.f32.mrb[0].mxu0
      %v2971 = vadd.f32 0.0, %v2970
      %v2972 = vpop.f32.mrb[0].mxu0
      %v2973 = vadd.f32 0.0, %v2972
      %v2974 = vpop.f32.mrb[0].mxu0
      %v2975 = vpop.f32.mrb[0].mxu0
      %2976 = vdwg.mxu0
      %v2993 = vunpack.c.l.b16 %v2819
      %v2994 = vunpack.c.h.b16 %v2819
      %v2995 = vunpack.c.l.b16 %v2820
      %v2996 = vunpack.c.h.b16 %v2820
      %v2997 = vunpack.c.l.b16 %v2821
      %v2998 = vunpack.c.h.b16 %v2821
      %v2999 = vunpack.c.l.b16 %v2822
      %v3000 = vunpack.c.h.b16 %v2822
      %v3001 = vunpack.c.l.b16 %v2823
      %v3002 = vunpack.c.h.b16 %v2823
      %v3003 = vunpack.c.l.b16 %v2824
      %v3004 = vunpack.c.h.b16 %v2824
      %v3005 = vunpack.c.l.b16 %v2825
      %v3006 = vunpack.c.h.b16 %v2825
      %v3007 = vunpack.c.l.b16 %v2826
      %v3008 = vunpack.c.h.b16 %v2826
      %v3009 = vunpack.c.l.b16 %v2827
      %v3010 = vunpack.c.h.b16 %v2827
      %v3011 = vunpack.c.l.b16 %v2828
      %v3012 = vunpack.c.h.b16 %v2828
      %v3013 = vunpack.c.l.b16 %v2829
      %v3014 = vunpack.c.h.b16 %v2829
      %v3015 = vunpack.c.l.b16 %v2830
      %v3016 = vunpack.c.h.b16 %v2830
      %v3017 = vunpack.c.l.b16 %v2831
      %v3018 = vunpack.c.h.b16 %v2831
      %v3019 = vunpack.c.l.b16 %v2832
      %v3020 = vunpack.c.h.b16 %v2832
      %v3021 = vunpack.c.l.b16 %v2833
      %v3022 = vunpack.c.h.b16 %v2833
      %v3023 = vunpack.c.l.b16 %v2834
      %v3024 = vunpack.c.h.b16 %v2834
      %v3025 = vpack.c.b16 %v2995, %v2993
      %v3026 = vpack.c.b16 %v2996, %v2994
      %v3027 = vpack.c.b16 %v2999, %v2997
      %v3028 = vpack.c.b16 %v3000, %v2998
      %v3029 = vpack.c.b16 %v3003, %v3001
      %v3030 = vpack.c.b16 %v3004, %v3002
      %v3031 = vpack.c.b16 %v3007, %v3005
      %v3032 = vpack.c.b16 %v3008, %v3006
      %v3033 = vpack.c.b16 %v3011, %v3009
      %v3034 = vpack.c.b16 %v3012, %v3010
      %v3035 = vpack.c.b16 %v3015, %v3013
      %v3036 = vpack.c.b16 %v3016, %v3014
      %v3037 = vpack.c.b16 %v3019, %v3017
      %v3038 = vpack.c.b16 %v3020, %v3018
      %v3039 = vpack.c.b16 %v3023, %v3021
      %v3040 = vpack.c.b16 %v3024, %v3022
      %3057 = vmatprep.subr.bf16.mxu0 %v3026
      %3058 = vmatpush1.bf16.msra.mxu0 %v3025
      %3059 = vmatprep.subr.bf16.mxu0 %v3028
      %3060 = vmatpush1.bf16.msra.mxu0 %v3027
      %3061 = vmatprep.subr.bf16.mxu0 %v3030
      %3062 = vmatpush1.bf16.msra.mxu0 %v3029
      %3063 = vmatprep.subr.bf16.mxu0 %v3032
      %3064 = vmatpush1.bf16.msra.mxu0 %v3031
      %3065 = vmatprep.subr.bf16.mxu0 %v3034
      %3066 = vmatpush1.bf16.msra.mxu0 %v3033
      %3067 = vmatprep.subr.bf16.mxu0 %v3036
      %3068 = vmatpush1.bf16.msra.mxu0 %v3035
      %3069 = vmatprep.subr.bf16.mxu0 %v3038
      %3070 = vmatpush1.bf16.msra.mxu0 %v3037
      %3071 = vmatprep.subr.bf16.mxu0 %v3040
      %3072 = vmatpush1.bf16.msra.mxu0 %v3039
      %3073 = vmatprep.subr.bf16.mxu0 0
      %3074 = vmatpush1.bf16.msra.mxu0 0
      %3075 = vmatprep.subr.bf16.mxu0 0
      %3076 = vmatpush1.bf16.msra.mxu0 0
      %3077 = vmatprep.subr.bf16.mxu0 0
      %3078 = vmatpush1.bf16.msra.mxu0 0
      %3079 = vmatprep.subr.bf16.mxu0 0
      %3080 = vmatpush1.bf16.msra.mxu0 0
      %3081 = vmatprep.subr.bf16.mxu0 0
      %3082 = vmatpush1.bf16.msra.mxu0 0
      %3083 = vmatprep.subr.bf16.mxu0 0
      %3084 = vmatpush1.bf16.msra.mxu0 0
      %3085 = vmatprep.subr.bf16.mxu0 0
      %3086 = vmatpush1.bf16.msra.mxu0 0
      %3087 = vmatprep.subr.bf16.mxu0 0
      %3088 = vmatpush1.bf16.msra.mxu0 0
      %3089 = vmatprep.mubr.bf16.mxu0 0
      %3090 = vmatmul.mubr.bf16.gmra.mrb[0].mxu0 %v2818
      %v3091 = vpop.f32.mrb[0].mxu0
      %v3092 = vadd.f32 %v2971, %v3091
      %v3093 = vpop.f32.mrb[0].mxu0
      %v3094 = vadd.f32 %v2973, %v3093
      %v3095 = vpop.f32.mrb[0].mxu0
      %v3096 = vpop.f32.mrb[0].mxu0
      %3097 = vdwg.mxu0
      %s3098 = scalar_lea.vmem %s3, 256
      %v3099 = vld [vmem:[%s3098] sm:$0xff]
      %v3100 = vld [vmem:[%s3098 + $0x8] sm:$0xff]
      %v3101 = vld [vmem:[%s3098 + $0x10] sm:$0xff]
      %v3102 = vld [vmem:[%s3098 + $0x18] sm:$0xff]
      %v3103 = vld [vmem:[%s3098 + $0x20] sm:$0xff]
      %v3104 = vld [vmem:[%s3098 + $0x28] sm:$0xff]
      %v3105 = vld [vmem:[%s3098 + $0x30] sm:$0xff]
      %v3106 = vld [vmem:[%s3098 + $0x38] sm:$0xff]
      %v3107 = vld [vmem:[%s3098 + $0x40] sm:$0xff]
      %v3108 = vld [vmem:[%s3098 + $0x48] sm:$0xff]
      %v3109 = vld [vmem:[%s3098 + $0x50] sm:$0xff]
      %v3110 = vld [vmem:[%s3098 + $0x58] sm:$0xff]
      %v3111 = vld [vmem:[%s3098 + $0x60] sm:$0xff]
      %v3112 = vld [vmem:[%s3098 + $0x68] sm:$0xff]
      %v3113 = vld [vmem:[%s3098 + $0x70] sm:$0xff]
      %v3114 = vld [vmem:[%s3098 + $0x78] sm:$0xff]
      %v3116 = vrot.slane %v2818, 1
      %v3134 = vunpack.c.l.b16 %v3099
      %v3135 = vunpack.c.h.b16 %v3099
      %v3136 = vunpack.c.l.b16 %v3100
      %v3137 = vunpack.c.h.b16 %v3100
      %v3138 = vunpack.c.l.b16 %v3101
      %v3139 = vunpack.c.h.b16 %v3101
      %v3140 = vunpack.c.l.b16 %v3102
      %v3141 = vunpack.c.h.b16 %v3102
      %v3142 = vunpack.c.l.b16 %v3103
      %v3143 = vunpack.c.h.b16 %v3103
      %v3144 = vunpack.c.l.b16 %v3104
      %v3145 = vunpack.c.h.b16 %v3104
      %v3146 = vunpack.c.l.b16 %v3105
      %v3147 = vunpack.c.h.b16 %v3105
      %v3148 = vunpack.c.l.b16 %v3106
      %v3149 = vunpack.c.h.b16 %v3106
      %v3150 = vunpack.c.l.b16 %v3107
      %v3151 = vunpack.c.h.b16 %v3107
      %v3152 = vunpack.c.l.b16 %v3108
      %v3153 = vunpack.c.h.b16 %v3108
      %v3154 = vunpack.c.l.b16 %v3109
      %v3155 = vunpack.c.h.b16 %v3109
      %v3156 = vunpack.c.l.b16 %v3110
      %v3157 = vunpack.c.h.b16 %v3110
      %v3158 = vunpack.c.l.b16 %v3111
      %v3159 = vunpack.c.h.b16 %v3111
      %v3160 = vunpack.c.l.b16 %v3112
      %v3161 = vunpack.c.h.b16 %v3112
      %v3162 = vunpack.c.l.b16 %v3113
      %v3163 = vunpack.c.h.b16 %v3113
      %v3164 = vunpack.c.l.b16 %v3114
      %v3165 = vunpack.c.h.b16 %v3114
      %v3166 = vpack.c.b16 %v3136, %v3134
      %v3167 = vpack.c.b16 %v3137, %v3135
      %v3168 = vpack.c.b16 %v3140, %v3138
      %v3169 = vpack.c.b16 %v3141, %v3139
      %v3170 = vpack.c.b16 %v3144, %v3142
      %v3171 = vpack.c.b16 %v3145, %v3143
      %v3172 = vpack.c.b16 %v3148, %v3146
      %v3173 = vpack.c.b16 %v3149, %v3147
      %v3174 = vpack.c.b16 %v3152, %v3150
      %v3175 = vpack.c.b16 %v3153, %v3151
      %v3176 = vpack.c.b16 %v3156, %v3154
      %v3177 = vpack.c.b16 %v3157, %v3155
      %v3178 = vpack.c.b16 %v3160, %v3158
      %v3179 = vpack.c.b16 %v3161, %v3159
      %v3180 = vpack.c.b16 %v3164, %v3162
      %v3181 = vpack.c.b16 %v3165, %v3163
      %3198 = vmatprep.subr.bf16.mxu0 %v3167
      %3199 = vmatpush1.bf16.msra.mxu0 %v3166
      %3200 = vmatprep.subr.bf16.mxu0 %v3169
      %3201 = vmatpush1.bf16.msra.mxu0 %v3168
      %3202 = vmatprep.subr.bf16.mxu0 %v3171
      %3203 = vmatpush1.bf16.msra.mxu0 %v3170
      %3204 = vmatprep.subr.bf16.mxu0 %v3173
      %3205 = vmatpush1.bf16.msra.mxu0 %v3172
      %3206 = vmatprep.subr.bf16.mxu0 %v3175
      %3207 = vmatpush1.bf16.msra.mxu0 %v3174
      %3208 = vmatprep.subr.bf16.mxu0 %v3177
      %3209 = vmatpush1.bf16.msra.mxu0 %v3176
      %3210 = vmatprep.subr.bf16.mxu0 %v3179
      %3211 = vmatpush1.bf16.msra.mxu0 %v3178
      %3212 = vmatprep.subr.bf16.mxu0 %v3181
      %3213 = vmatpush1.bf16.msra.mxu0 %v3180
      %3214 = vmatprep.subr.bf16.mxu0 0
      %3215 = vmatpush1.bf16.msra.mxu0 0
      %3216 = vmatprep.subr.bf16.mxu0 0
      %3217 = vmatpush1.bf16.msra.mxu0 0
      %3218 = vmatprep.subr.bf16.mxu0 0
      %3219 = vmatpush1.bf16.msra.mxu0 0
      %3220 = vmatprep.subr.bf16.mxu0 0
      %3221 = vmatpush1.bf16.msra.mxu0 0
      %3222 = vmatprep.subr.bf16.mxu0 0
      %3223 = vmatpush1.bf16.msra.mxu0 0
      %3224 = vmatprep.subr.bf16.mxu0 0
      %3225 = vmatpush1.bf16.msra.mxu0 0
      %3226 = vmatprep.subr.bf16.mxu0 0
      %3227 = vmatpush1.bf16.msra.mxu0 0
      %3228 = vmatprep.subr.bf16.mxu0 0
      %3229 = vmatpush1.bf16.msra.mxu0 0
      %3230 = vmatprep.mubr.bf16.mxu0 0
      %3231 = vmatmul.mubr.bf16.gmra.mrb[0].mxu0 %v3116
      %v3232 = vpop.f32.mrb[0].mxu0
      %v3233 = vadd.f32 0.0, %v3232
      %v3234 = vpop.f32.mrb[0].mxu0
      %v3235 = vadd.f32 0.0, %v3234
      %v3236 = vpop.f32.mrb[0].mxu0
      %v3237 = vpop.f32.mrb[0].mxu0
      %3238 = vdwg.mxu0
      %v3239 = vadd.f32 %v3092, %v3233
      %v3240 = vadd.f32 %v3094, %v3235
      %s3241 = scalar_lea.vmem %s3, 384
      %v3242 = vld [vmem:[%s3241] sm:$0xff]
      %v3243 = vld [vmem:[%s3241 + $0x8] sm:$0xff]
      %v3244 = vld [vmem:[%s3241 + $0x10] sm:$0xff]
      %v3245 = vld [vmem:[%s3241 + $0x18] sm:$0xff]
      %v3246 = vld [vmem:[%s3241 + $0x20] sm:$0xff]
      %v3247 = vld [vmem:[%s3241 + $0x28] sm:$0xff]
      %v3248 = vld [vmem:[%s3241 + $0x30] sm:$0xff]
      %v3249 = vld [vmem:[%s3241 + $0x38] sm:$0xff]
      %v3250 = vld [vmem:[%s3241 + $0x40] sm:$0xff]
      %v3251 = vld [vmem:[%s3241 + $0x48] sm:$0xff]
      %v3252 = vld [vmem:[%s3241 + $0x50] sm:$0xff]
      %v3253 = vld [vmem:[%s3241 + $0x58] sm:$0xff]
      %v3254 = vld [vmem:[%s3241 + $0x60] sm:$0xff]
      %v3255 = vld [vmem:[%s3241 + $0x68] sm:$0xff]
      %v3256 = vld [vmem:[%s3241 + $0x70] sm:$0xff]
      %v3257 = vld [vmem:[%s3241 + $0x78] sm:$0xff]
      %v3258 = vrot.slane %v2853, 1
      %v3276 = vunpack.c.l.b16 %v3242
      %v3277 = vunpack.c.h.b16 %v3242
      %v3278 = vunpack.c.l.b16 %v3243
      %v3279 = vunpack.c.h.b16 %v3243
      %v3280 = vunpack.c.l.b16 %v3244
      %v3281 = vunpack.c.h.b16 %v3244
      %v3282 = vunpack.c.l.b16 %v3245
      %v3283 = vunpack.c.h.b16 %v3245
      %v3284 = vunpack.c.l.b16 %v3246
      %v3285 = vunpack.c.h.b16 %v3246
      %v3286 = vunpack.c.l.b16 %v3247
      %v3287 = vunpack.c.h.b16 %v3247
      %v3288 = vunpack.c.l.b16 %v3248
      %v3289 = vunpack.c.h.b16 %v3248
      %v3290 = vunpack.c.l.b16 %v3249
      %v3291 = vunpack.c.h.b16 %v3249
      %v3292 = vunpack.c.l.b16 %v3250
      %v3293 = vunpack.c.h.b16 %v3250
      %v3294 = vunpack.c.l.b16 %v3251
      %v3295 = vunpack.c.h.b16 %v3251
      %v3296 = vunpack.c.l.b16 %v3252
      %v3297 = vunpack.c.h.b16 %v3252
      %v3298 = vunpack.c.l.b16 %v3253
      %v3299 = vunpack.c.h.b16 %v3253
      %v3300 = vunpack.c.l.b16 %v3254
      %v3301 = vunpack.c.h.b16 %v3254
      %v3302 = vunpack.c.l.b16 %v3255
      %v3303 = vunpack.c.h.b16 %v3255
      %v3304 = vunpack.c.l.b16 %v3256
      %v3305 = vunpack.c.h.b16 %v3256
      %v3306 = vunpack.c.l.b16 %v3257
      %v3307 = vunpack.c.h.b16 %v3257
      %v3308 = vpack.c.b16 %v3278, %v3276
      %v3309 = vpack.c.b16 %v3279, %v3277
      %v3310 = vpack.c.b16 %v3282, %v3280
      %v3311 = vpack.c.b16 %v3283, %v3281
      %v3312 = vpack.c.b16 %v3286, %v3284
      %v3313 = vpack.c.b16 %v3287, %v3285
      %v3314 = vpack.c.b16 %v3290, %v3288
      %v3315 = vpack.c.b16 %v3291, %v3289
      %v3316 = vpack.c.b16 %v3294, %v3292
      %v3317 = vpack.c.b16 %v3295, %v3293
      %v3318 = vpack.c.b16 %v3298, %v3296
      %v3319 = vpack.c.b16 %v3299, %v3297
      %v3320 = vpack.c.b16 %v3302, %v3300
      %v3321 = vpack.c.b16 %v3303, %v3301
      %v3322 = vpack.c.b16 %v3306, %v3304
      %v3323 = vpack.c.b16 %v3307, %v3305
      %3340 = vmatprep.subr.bf16.mxu0 %v3309
      %3341 = vmatpush1.bf16.msra.mxu0 %v3308
      %3342 = vmatprep.subr.bf16.mxu0 %v3311
      %3343 = vmatpush1.bf16.msra.mxu0 %v3310
      %3344 = vmatprep.subr.bf16.mxu0 %v3313
      %3345 = vmatpush1.bf16.msra.mxu0 %v3312
      %3346 = vmatprep.subr.bf16.mxu0 %v3315
      %3347 = vmatpush1.bf16.msra.mxu0 %v3314
      %3348 = vmatprep.subr.bf16.mxu0 %v3317
      %3349 = vmatpush1.bf16.msra.mxu0 %v3316
      %3350 = vmatprep.subr.bf16.mxu0 %v3319
      %3351 = vmatpush1.bf16.msra.mxu0 %v3318
      %3352 = vmatprep.subr.bf16.mxu0 %v3321
      %3353 = vmatpush1.bf16.msra.mxu0 %v3320
      %3354 = vmatprep.subr.bf16.mxu0 %v3323
      %3355 = vmatpush1.bf16.msra.mxu0 %v3322
      %3356 = vmatprep.subr.bf16.mxu0 0
      %3357 = vmatpush1.bf16.msra.mxu0 0
      %3358 = vmatprep.subr.bf16.mxu0 0
      %3359 = vmatpush1.bf16.msra.mxu0 0
      %3360 = vmatprep.subr.bf16.mxu0 0
      %3361 = vmatpush1.bf16.msra.mxu0 0
      %3362 = vmatprep.subr.bf16.mxu0 0
      %3363 = vmatpush1.bf16.msra.mxu0 0
      %3364 = vmatprep.subr.bf16.mxu0 0
      %3365 = vmatpush1.bf16.msra.mxu0 0
      %3366 = vmatprep.subr.bf16.mxu0 0
      %3367 = vmatpush1.bf16.msra.mxu0 0
      %3368 = vmatprep.subr.bf16.mxu0 0
      %3369 = vmatpush1.bf16.msra.mxu0 0
      %3370 = vmatprep.subr.bf16.mxu0 0
      %3371 = vmatpush1.bf16.msra.mxu0 0
      %3372 = vmatprep.mubr.bf16.mxu0 0
      %3373 = vmatmul.mubr.bf16.gmra.mrb[0].mxu0 %v3258
      %v3374 = vpop.f32.mrb[0].mxu0
      %v3375 = vadd.f32 0.0, %v3374
      %v3376 = vpop.f32.mrb[0].mxu0
      %v3377 = vadd.f32 0.0, %v3376
      %v3378 = vpop.f32.mrb[0].mxu0
      %v3379 = vpop.f32.mrb[0].mxu0
      %3380 = vdwg.mxu0
      %v3381 = vadd.f32 %v3239, %v3375
      %v3382 = vadd.f32 %v3240, %v3377
      %s3383 = scalar_lea.vmem %s3, 512
      %v3384 = vld [vmem:[%s3383] sm:$0xff]
      %v3385 = vld [vmem:[%s3383 + $0x8] sm:$0xff]
      %v3386 = vld [vmem:[%s3383 + $0x10] sm:$0xff]
      %v3387 = vld [vmem:[%s3383 + $0x18] sm:$0xff]
      %v3388 = vld [vmem:[%s3383 + $0x20] sm:$0xff]
      %v3389 = vld [vmem:[%s3383 + $0x28] sm:$0xff]
      %v3390 = vld [vmem:[%s3383 + $0x30] sm:$0xff]
      %v3391 = vld [vmem:[%s3383 + $0x38] sm:$0xff]
      %v3392 = vld [vmem:[%s3383 + $0x40] sm:$0xff]
      %v3393 = vld [vmem:[%s3383 + $0x48] sm:$0xff]
      %v3394 = vld [vmem:[%s3383 + $0x50] sm:$0xff]
      %v3395 = vld [vmem:[%s3383 + $0x58] sm:$0xff]
      %v3396 = vld [vmem:[%s3383 + $0x60] sm:$0xff]
      %v3397 = vld [vmem:[%s3383 + $0x68] sm:$0xff]
      %v3398 = vld [vmem:[%s3383 + $0x70] sm:$0xff]
      %v3399 = vld [vmem:[%s3383 + $0x78] sm:$0xff]
      %v3400 = vrot.slane %v2818, 2
      %v3418 = vunpack.c.l.b16 %v3384
      %v3419 = vunpack.c.h.b16 %v3384
      %v3420 = vunpack.c.l.b16 %v3385
      %v3421 = vunpack.c.h.b16 %v3385
      %v3422 = vunpack.c.l.b16 %v3386
      %v3423 = vunpack.c.h.b16 %v3386
      %v3424 = vunpack.c.l.b16 %v3387
      %v3425 = vunpack.c.h.b16 %v3387
      %v3426 = vunpack.c.l.b16 %v3388
      %v3427 = vunpack.c.h.b16 %v3388
      %v3428 = vunpack.c.l.b16 %v3389
      %v3429 = vunpack.c.h.b16 %v3389
      %v3430 = vunpack.c.l.b16 %v3390
      %v3431 = vunpack.c.h.b16 %v3390
      %v3432 = vunpack.c.l.b16 %v3391
      %v3433 = vunpack.c.h.b16 %v3391
      %v3434 = vunpack.c.l.b16 %v3392
      %v3435 = vunpack.c.h.b16 %v3392
      %v3436 = vunpack.c.l.b16 %v3393
      %v3437 = vunpack.c.h.b16 %v3393
      %v3438 = vunpack.c.l.b16 %v3394
      %v3439 = vunpack.c.h.b16 %v3394
      %v3440 = vunpack.c.l.b16 %v3395
      %v3441 = vunpack.c.h.b16 %v3395
      %v3442 = vunpack.c.l.b16 %v3396
      %v3443 = vunpack.c.h.b16 %v3396
      %v3444 = vunpack.c.l.b16 %v3397
      %v3445 = vunpack.c.h.b16 %v3397
      %v3446 = vunpack.c.l.b16 %v3398
      %v3447 = vunpack.c.h.b16 %v3398
      %v3448 = vunpack.c.l.b16 %v3399
      %v3449 = vunpack.c.h.b16 %v3399
      %v3450 = vpack.c.b16 %v3420, %v3418
      %v3451 = vpack.c.b16 %v3421, %v3419
      %v3452 = vpack.c.b16 %v3424, %v3422
      %v3453 = vpack.c.b16 %v3425, %v3423
      %v3454 = vpack.c.b16 %v3428, %v3426
      %v3455 = vpack.c.b16 %v3429, %v3427
      %v3456 = vpack.c.b16 %v3432, %v3430
      %v3457 = vpack.c.b16 %v3433, %v3431
      %v3458 = vpack.c.b16 %v3436, %v3434
      %v3459 = vpack.c.b16 %v3437, %v3435
      %v3460 = vpack.c.b16 %v3440, %v3438
      %v3461 = vpack.c.b16 %v3441, %v3439
      %v3462 = vpack.c.b16 %v3444, %v3442
      %v3463 = vpack.c.b16 %v3445, %v3443
      %v3464 = vpack.c.b16 %v3448, %v3446
      %v3465 = vpack.c.b16 %v3449, %v3447
      %3482 = vmatprep.subr.bf16.mxu0 %v3451
      %3483 = vmatpush1.bf16.msra.mxu0 %v3450
      %3484 = vmatprep.subr.bf16.mxu0 %v3453
      %3485 = vmatpush1.bf16.msra.mxu0 %v3452
      %3486 = vmatprep.subr.bf16.mxu0 %v3455
      %3487 = vmatpush1.bf16.msra.mxu0 %v3454
      %3488 = vmatprep.subr.bf16.mxu0 %v3457
      %3489 = vmatpush1.bf16.msra.mxu0 %v3456
      %3490 = vmatprep.subr.bf16.mxu0 %v3459
      %3491 = vmatpush1.bf16.msra.mxu0 %v3458
      %3492 = vmatprep.subr.bf16.mxu0 %v3461
      %3493 = vmatpush1.bf16.msra.mxu0 %v3460
      %3494 = vmatprep.subr.bf16.mxu0 %v3463
      %3495 = vmatpush1.bf16.msra.mxu0 %v3462
      %3496 = vmatprep.subr.bf16.mxu0 %v3465
      %3497 = vmatpush1.bf16.msra.mxu0 %v3464
      %3498 = vmatprep.subr.bf16.mxu0 0
      %3499 = vmatpush1.bf16.msra.mxu0 0
      %3500 = vmatprep.subr.bf16.mxu0 0
      %3501 = vmatpush1.bf16.msra.mxu0 0
      %3502 = vmatprep.subr.bf16.mxu0 0
      %3503 = vmatpush1.bf16.msra.mxu0 0
      %3504 = vmatprep.subr.bf16.mxu0 0
      %3505 = vmatpush1.bf16.msra.mxu0 0
      %3506 = vmatprep.subr.bf16.mxu0 0
      %3507 = vmatpush1.bf16.msra.mxu0 0
      %3508 = vmatprep.subr.bf16.mxu0 0
      %3509 = vmatpush1.bf16.msra.mxu0 0
      %3510 = vmatprep.subr.bf16.mxu0 0
      %3511 = vmatpush1.bf16.msra.mxu0 0
      %3512 = vmatprep.subr.bf16.mxu0 0
      %3513 = vmatpush1.bf16.msra.mxu0 0
      %3514 = vmatprep.mubr.bf16.mxu0 0
      %3515 = vmatmul.mubr.bf16.gmra.mrb[0].mxu0 %v3400
      %v3516 = vpop.f32.mrb[0].mxu0
      %v3517 = vadd.f32 0.0, %v3516
      %v3518 = vpop.f32.mrb[0].mxu0
      %v3519 = vadd.f32 0.0, %v3518
      %v3520 = vpop.f32.mrb[0].mxu0
      %v3521 = vpop.f32.mrb[0].mxu0
      %3522 = vdwg.mxu0
      %v3523 = vadd.f32 %v3381, %v3517
      %v3524 = vadd.f32 %v3382, %v3519
      %s3525 = scalar_lea.vmem %s3, 640
      %v3526 = vld [vmem:[%s3525] sm:$0xff]
      %v3527 = vld [vmem:[%s3525 + $0x8] sm:$0xff]
      %v3528 = vld [vmem:[%s3525 + $0x10] sm:$0xff]
      %v3529 = vld [vmem:[%s3525 + $0x18] sm:$0xff]
      %v3530 = vld [vmem:[%s3525 + $0x20] sm:$0xff]
      %v3531 = vld [vmem:[%s3525 + $0x28] sm:$0xff]
      %v3532 = vld [vmem:[%s3525 + $0x30] sm:$0xff]
      %v3533 = vld [vmem:[%s3525 + $0x38] sm:$0xff]
      %v3534 = vld [vmem:[%s3525 + $0x40] sm:$0xff]
      %v3535 = vld [vmem:[%s3525 + $0x48] sm:$0xff]
      %v3536 = vld [vmem:[%s3525 + $0x50] sm:$0xff]
      %v3537 = vld [vmem:[%s3525 + $0x58] sm:$0xff]
      %v3538 = vld [vmem:[%s3525 + $0x60] sm:$0xff]
      %v3539 = vld [vmem:[%s3525 + $0x68] sm:$0xff]
      %v3540 = vld [vmem:[%s3525 + $0x70] sm:$0xff]
      %v3541 = vld [vmem:[%s3525 + $0x78] sm:$0xff]
      %v3542 = vrot.slane %v2853, 2
      %v3560 = vunpack.c.l.b16 %v3526
      %v3561 = vunpack.c.h.b16 %v3526
      %v3562 = vunpack.c.l.b16 %v3527
      %v3563 = vunpack.c.h.b16 %v3527
      %v3564 = vunpack.c.l.b16 %v3528
      %v3565 = vunpack.c.h.b16 %v3528
      %v3566 = vunpack.c.l.b16 %v3529
      %v3567 = vunpack.c.h.b16 %v3529
      %v3568 = vunpack.c.l.b16 %v3530
      %v3569 = vunpack.c.h.b16 %v3530
      %v3570 = vunpack.c.l.b16 %v3531
      %v3571 = vunpack.c.h.b16 %v3531
      %v3572 = vunpack.c.l.b16 %v3532
      %v3573 = vunpack.c.h.b16 %v3532
      %v3574 = vunpack.c.l.b16 %v3533
      %v3575 = vunpack.c.h.b16 %v3533
      %v3576 = vunpack.c.l.b16 %v3534
      %v3577 = vunpack.c.h.b16 %v3534
      %v3578 = vunpack.c.l.b16 %v3535
      %v3579 = vunpack.c.h.b16 %v3535
      %v3580 = vunpack.c.l.b16 %v3536
      %v3581 = vunpack.c.h.b16 %v3536
      %v3582 = vunpack.c.l.b16 %v3537
      %v3583 = vunpack.c.h.b16 %v3537
      %v3584 = vunpack.c.l.b16 %v3538
      %v3585 = vunpack.c.h.b16 %v3538
      %v3586 = vunpack.c.l.b16 %v3539
      %v3587 = vunpack.c.h.b16 %v3539
      %v3588 = vunpack.c.l.b16 %v3540
      %v3589 = vunpack.c.h.b16 %v3540
      %v3590 = vunpack.c.l.b16 %v3541
      %v3591 = vunpack.c.h.b16 %v3541
      %v3592 = vpack.c.b16 %v3562, %v3560
      %v3593 = vpack.c.b16 %v3563, %v3561
      %v3594 = vpack.c.b16 %v3566, %v3564
      %v3595 = vpack.c.b16 %v3567, %v3565
      %v3596 = vpack.c.b16 %v3570, %v3568
      %v3597 = vpack.c.b16 %v3571, %v3569
      %v3598 = vpack.c.b16 %v3574, %v3572
      %v3599 = vpack.c.b16 %v3575, %v3573
      %v3600 = vpack.c.b16 %v3578, %v3576
      %v3601 = vpack.c.b16 %v3579, %v3577
      %v3602 = vpack.c.b16 %v3582, %v3580
      %v3603 = vpack.c.b16 %v3583, %v3581
      %v3604 = vpack.c.b16 %v3586, %v3584
      %v3605 = vpack.c.b16 %v3587, %v3585
      %v3606 = vpack.c.b16 %v3590, %v3588
      %v3607 = vpack.c.b16 %v3591, %v3589
      %3624 = vmatprep.subr.bf16.mxu0 %v3593
      %3625 = vmatpush1.bf16.msra.mxu0 %v3592
      %3626 = vmatprep.subr.bf16.mxu0 %v3595
      %3627 = vmatpush1.bf16.msra.mxu0 %v3594
      %3628 = vmatprep.subr.bf16.mxu0 %v3597
      %3629 = vmatpush1.bf16.msra.mxu0 %v3596
      %3630 = vmatprep.subr.bf16.mxu0 %v3599
      %3631 = vmatpush1.bf16.msra.mxu0 %v3598
      %3632 = vmatprep.subr.bf16.mxu0 %v3601
      %3633 = vmatpush1.bf16.msra.mxu0 %v3600
      %3634 = vmatprep.subr.bf16.mxu0 %v3603
      %3635 = vmatpush1.bf16.msra.mxu0 %v3602
      %3636 = vmatprep.subr.bf16.mxu0 %v3605
      %3637 = vmatpush1.bf16.msra.mxu0 %v3604
      %3638 = vmatprep.subr.bf16.mxu0 %v3607
      %3639 = vmatpush1.bf16.msra.mxu0 %v3606
      %3640 = vmatprep.subr.bf16.mxu0 0
      %3641 = vmatpush1.bf16.msra.mxu0 0
      %3642 = vmatprep.subr.bf16.mxu0 0
      %3643 = vmatpush1.bf16.msra.mxu0 0
      %3644 = vmatprep.subr.bf16.mxu0 0
      %3645 = vmatpush1.bf16.msra.mxu0 0
      %3646 = vmatprep.subr.bf16.mxu0 0
      %3647 = vmatpush1.bf16.msra.mxu0 0
      %3648 = vmatprep.subr.bf16.mxu0 0
      %3649 = vmatpush1.bf16.msra.mxu0 0
      %3650 = vmatprep.subr.bf16.mxu0 0
      %3651 = vmatpush1.bf16.msra.mxu0 0
      %3652 = vmatprep.subr.bf16.mxu0 0
      %3653 = vmatpush1.bf16.msra.mxu0 0
      %3654 = vmatprep.subr.bf16.mxu0 0
      %3655 = vmatpush1.bf16.msra.mxu0 0
      %3656 = vmatprep.mubr.bf16.mxu0 0
      %3657 = vmatmul.mubr.bf16.gmra.mrb[0].mxu0 %v3542
      %v3658 = vpop.f32.mrb[0].mxu0
      %v3659 = vadd.f32 0.0, %v3658
      %v3660 = vpop.f32.mrb[0].mxu0
      %v3661 = vadd.f32 0.0, %v3660
      %v3662 = vpop.f32.mrb[0].mxu0
      %v3663 = vpop.f32.mrb[0].mxu0
      %3664 = vdwg.mxu0
      %v3665 = vadd.f32 %v3523, %v3659
      %v3666 = vadd.f32 %v3524, %v3661
      %s3667 = scalar_lea.vmem %s3, 768
      %v3668 = vld [vmem:[%s3667] sm:$0xff]
      %v3669 = vld [vmem:[%s3667 + $0x8] sm:$0xff]
      %v3670 = vld [vmem:[%s3667 + $0x10] sm:$0xff]
      %v3671 = vld [vmem:[%s3667 + $0x18] sm:$0xff]
      %v3672 = vld [vmem:[%s3667 + $0x20] sm:$0xff]
      %v3673 = vld [vmem:[%s3667 + $0x28] sm:$0xff]
      %v3674 = vld [vmem:[%s3667 + $0x30] sm:$0xff]
      %v3675 = vld [vmem:[%s3667 + $0x38] sm:$0xff]
      %v3676 = vld [vmem:[%s3667 + $0x40] sm:$0xff]
      %v3677 = vld [vmem:[%s3667 + $0x48] sm:$0xff]
      %v3678 = vld [vmem:[%s3667 + $0x50] sm:$0xff]
      %v3679 = vld [vmem:[%s3667 + $0x58] sm:$0xff]
      %v3680 = vld [vmem:[%s3667 + $0x60] sm:$0xff]
      %v3681 = vld [vmem:[%s3667 + $0x68] sm:$0xff]
      %v3682 = vld [vmem:[%s3667 + $0x70] sm:$0xff]
      %v3683 = vld [vmem:[%s3667 + $0x78] sm:$0xff]
      %v3684 = vrot.slane %v2818, 3
      %v3702 = vunpack.c.l.b16 %v3668
      %v3703 = vunpack.c.h.b16 %v3668
      %v3704 = vunpack.c.l.b16 %v3669
      %v3705 = vunpack.c.h.b16 %v3669
      %v3706 = vunpack.c.l.b16 %v3670
      %v3707 = vunpack.c.h.b16 %v3670
      %v3708 = vunpack.c.l.b16 %v3671
      %v3709 = vunpack.c.h.b16 %v3671
      %v3710 = vunpack.c.l.b16 %v3672
      %v3711 = vunpack.c.h.b16 %v3672
      %v3712 = vunpack.c.l.b16 %v3673
      %v3713 = vunpack.c.h.b16 %v3673
      %v3714 = vunpack.c.l.b16 %v3674
      %v3715 = vunpack.c.h.b16 %v3674
      %v3716 = vunpack.c.l.b16 %v3675
      %v3717 = vunpack.c.h.b16 %v3675
      %v3718 = vunpack.c.l.b16 %v3676
      %v3719 = vunpack.c.h.b16 %v3676
      %v3720 = vunpack.c.l.b16 %v3677
      %v3721 = vunpack.c.h.b16 %v3677
      %v3722 = vunpack.c.l.b16 %v3678
      %v3723 = vunpack.c.h.b16 %v3678
      %v3724 = vunpack.c.l.b16 %v3679
      %v3725 = vunpack.c.h.b16 %v3679
      %v3726 = vunpack.c.l.b16 %v3680
      %v3727 = vunpack.c.h.b16 %v3680
      %v3728 = vunpack.c.l.b16 %v3681
      %v3729 = vunpack.c.h.b16 %v3681
      %v3730 = vunpack.c.l.b16 %v3682
      %v3731 = vunpack.c.h.b16 %v3682
      %v3732 = vunpack.c.l.b16 %v3683
      %v3733 = vunpack.c.h.b16 %v3683
      %v3734 = vpack.c.b16 %v3704, %v3702
      %v3735 = vpack.c.b16 %v3705, %v3703
      %v3736 = vpack.c.b16 %v3708, %v3706
      %v3737 = vpack.c.b16 %v3709, %v3707
      %v3738 = vpack.c.b16 %v3712, %v3710
      %v3739 = vpack.c.b16 %v3713, %v3711
      %v3740 = vpack.c.b16 %v3716, %v3714
      %v3741 = vpack.c.b16 %v3717, %v3715
      %v3742 = vpack.c.b16 %v3720, %v3718
      %v3743 = vpack.c.b16 %v3721, %v3719
      %v3744 = vpack.c.b16 %v3724, %v3722
      %v3745 = vpack.c.b16 %v3725, %v3723
      %v3746 = vpack.c.b16 %v3728, %v3726
      %v3747 = vpack.c.b16 %v3729, %v3727
      %v3748 = vpack.c.b16 %v3732, %v3730
      %v3749 = vpack.c.b16 %v3733, %v3731
      %3766 = vmatprep.subr.bf16.mxu0 %v3735
      %3767 = vmatpush1.bf16.msra.mxu0 %v3734
      %3768 = vmatprep.subr.bf16.mxu0 %v3737
      %3769 = vmatpush1.bf16.msra.mxu0 %v3736
      %3770 = vmatprep.subr.bf16.mxu0 %v3739
      %3771 = vmatpush1.bf16.msra.mxu0 %v3738
      %3772 = vmatprep.subr.bf16.mxu0 %v3741
      %3773 = vmatpush1.bf16.msra.mxu0 %v3740
      %3774 = vmatprep.subr.bf16.mxu0 %v3743
      %3775 = vmatpush1.bf16.msra.mxu0 %v3742
      %3776 = vmatprep.subr.bf16.mxu0 %v3745
      %3777 = vmatpush1.bf16.msra.mxu0 %v3744
      %3778 = vmatprep.subr.bf16.mxu0 %v3747
      %3779 = vmatpush1.bf16.msra.mxu0 %v3746
      %3780 = vmatprep.subr.bf16.mxu0 %v3749
      %3781 = vmatpush1.bf16.msra.mxu0 %v3748
      %3782 = vmatprep.subr.bf16.mxu0 0
      %3783 = vmatpush1.bf16.msra.mxu0 0
      %3784 = vmatprep.subr.bf16.mxu0 0
      %3785 = vmatpush1.bf16.msra.mxu0 0
      %3786 = vmatprep.subr.bf16.mxu0 0
      %3787 = vmatpush1.bf16.msra.mxu0 0
      %3788 = vmatprep.subr.bf16.mxu0 0
      %3789 = vmatpush1.bf16.msra.mxu0 0
      %3790 = vmatprep.subr.bf16.mxu0 0
      %3791 = vmatpush1.bf16.msra.mxu0 0
      %3792 = vmatprep.subr.bf16.mxu0 0
      %3793 = vmatpush1.bf16.msra.mxu0 0
      %3794 = vmatprep.subr.bf16.mxu0 0
      %3795 = vmatpush1.bf16.msra.mxu0 0
      %3796 = vmatprep.subr.bf16.mxu0 0
      %3797 = vmatpush1.bf16.msra.mxu0 0
      %3798 = vmatprep.mubr.bf16.mxu0 0
      %3799 = vmatmul.mubr.bf16.gmra.mrb[0].mxu0 %v3684
      %v3800 = vpop.f32.mrb[0].mxu0
      %v3801 = vadd.f32 0.0, %v3800
      %v3802 = vpop.f32.mrb[0].mxu0
      %v3803 = vadd.f32 0.0, %v3802
      %v3804 = vpop.f32.mrb[0].mxu0
      %v3805 = vpop.f32.mrb[0].mxu0
      %3806 = vdwg.mxu0
      %v3807 = vadd.f32 %v3665, %v3801
      %v3808 = vadd.f32 %v3666, %v3803
      %s3809 = scalar_lea.vmem %s3, 896
      %v3810 = vld [vmem:[%s3809] sm:$0xff]
      %v3811 = vld [vmem:[%s3809 + $0x8] sm:$0xff]
      %v3812 = vld [vmem:[%s3809 + $0x10] sm:$0xff]
      %v3813 = vld [vmem:[%s3809 + $0x18] sm:$0xff]
      %v3814 = vld [vmem:[%s3809 + $0x20] sm:$0xff]
      %v3815 = vld [vmem:[%s3809 + $0x28] sm:$0xff]
      %v3816 = vld [vmem:[%s3809 + $0x30] sm:$0xff]
      %v3817 = vld [vmem:[%s3809 + $0x38] sm:$0xff]
      %v3818 = vld [vmem:[%s3809 + $0x40] sm:$0xff]
      %v3819 = vld [vmem:[%s3809 + $0x48] sm:$0xff]
      %v3820 = vld [vmem:[%s3809 + $0x50] sm:$0xff]
      %v3821 = vld [vmem:[%s3809 + $0x58] sm:$0xff]
      %v3822 = vld [vmem:[%s3809 + $0x60] sm:$0xff]
      %v3823 = vld [vmem:[%s3809 + $0x68] sm:$0xff]
      %v3824 = vld [vmem:[%s3809 + $0x70] sm:$0xff]
      %v3825 = vld [vmem:[%s3809 + $0x78] sm:$0xff]
      %v3826 = vrot.slane %v2853, 3
      %v3844 = vunpack.c.l.b16 %v3810
      %v3845 = vunpack.c.h.b16 %v3810
      %v3846 = vunpack.c.l.b16 %v3811
      %v3847 = vunpack.c.h.b16 %v3811
      %v3848 = vunpack.c.l.b16 %v3812
      %v3849 = vunpack.c.h.b16 %v3812
      %v3850 = vunpack.c.l.b16 %v3813
      %v3851 = vunpack.c.h.b16 %v3813
      %v3852 = vunpack.c.l.b16 %v3814
      %v3853 = vunpack.c.h.b16 %v3814
      %v3854 = vunpack.c.l.b16 %v3815
      %v3855 = vunpack.c.h.b16 %v3815
      %v3856 = vunpack.c.l.b16 %v3816
      %v3857 = vunpack.c.h.b16 %v3816
      %v3858 = vunpack.c.l.b16 %v3817
      %v3859 = vunpack.c.h.b16 %v3817
      %v3860 = vunpack.c.l.b16 %v3818
      %v3861 = vunpack.c.h.b16 %v3818
      %v3862 = vunpack.c.l.b16 %v3819
      %v3863 = vunpack.c.h.b16 %v3819
      %v3864 = vunpack.c.l.b16 %v3820
      %v3865 = vunpack.c.h.b16 %v3820
      %v3866 = vunpack.c.l.b16 %v3821
      %v3867 = vunpack.c.h.b16 %v3821
      %v3868 = vunpack.c.l.b16 %v3822
      %v3869 = vunpack.c.h.b16 %v3822
      %v3870 = vunpack.c.l.b16 %v3823
      %v3871 = vunpack.c.h.b16 %v3823
      %v3872 = vunpack.c.l.b16 %v3824
      %v3873 = vunpack.c.h.b16 %v3824
      %v3874 = vunpack.c.l.b16 %v3825
      %v3875 = vunpack.c.h.b16 %v3825
      %v3876 = vpack.c.b16 %v3846, %v3844
      %v3877 = vpack.c.b16 %v3847, %v3845
      %v3878 = vpack.c.b16 %v3850, %v3848
      %v3879 = vpack.c.b16 %v3851, %v3849
      %v3880 = vpack.c.b16 %v3854, %v3852
      %v3881 = vpack.c.b16 %v3855, %v3853
      %v3882 = vpack.c.b16 %v3858, %v3856
      %v3883 = vpack.c.b16 %v3859, %v3857
      %v3884 = vpack.c.b16 %v3862, %v3860
      %v3885 = vpack.c.b16 %v3863, %v3861
      %v3886 = vpack.c.b16 %v3866, %v3864
      %v3887 = vpack.c.b16 %v3867, %v3865
      %v3888 = vpack.c.b16 %v3870, %v3868
      %v3889 = vpack.c.b16 %v3871, %v3869
      %v3890 = vpack.c.b16 %v3874, %v3872
      %v3891 = vpack.c.b16 %v3875, %v3873
      %3908 = vmatprep.subr.bf16.mxu0 %v3877
      %3909 = vmatpush1.bf16.msra.mxu0 %v3876
      %3910 = vmatprep.subr.bf16.mxu0 %v3879
      %3911 = vmatpush1.bf16.msra.mxu0 %v3878
      %3912 = vmatprep.subr.bf16.mxu0 %v3881
      %3913 = vmatpush1.bf16.msra.mxu0 %v3880
      %3914 = vmatprep.subr.bf16.mxu0 %v3883
      %3915 = vmatpush1.bf16.msra.mxu0 %v3882
      %3916 = vmatprep.subr.bf16.mxu0 %v3885
      %3917 = vmatpush1.bf16.msra.mxu0 %v3884
      %3918 = vmatprep.subr.bf16.mxu0 %v3887
      %3919 = vmatpush1.bf16.msra.mxu0 %v3886
      %3920 = vmatprep.subr.bf16.mxu0 %v3889
      %3921 = vmatpush1.bf16.msra.mxu0 %v3888
      %3922 = vmatprep.subr.bf16.mxu0 %v3891
      %3923 = vmatpush1.bf16.msra.mxu0 %v3890
      %3924 = vmatprep.subr.bf16.mxu0 0
      %3925 = vmatpush1.bf16.msra.mxu0 0
      %3926 = vmatprep.subr.bf16.mxu0 0
      %3927 = vmatpush1.bf16.msra.mxu0 0
      %3928 = vmatprep.subr.bf16.mxu0 0
      %3929 = vmatpush1.bf16.msra.mxu0 0
      %3930 = vmatprep.subr.bf16.mxu0 0
      %3931 = vmatpush1.bf16.msra.mxu0 0
      %3932 = vmatprep.subr.bf16.mxu0 0
      %3933 = vmatpush1.bf16.msra.mxu0 0
      %3934 = vmatprep.subr.bf16.mxu0 0
      %3935 = vmatpush1.bf16.msra.mxu0 0
      %3936 = vmatprep.subr.bf16.mxu0 0
      %3937 = vmatpush1.bf16.msra.mxu0 0
      %3938 = vmatprep.subr.bf16.mxu0 0
      %3939 = vmatpush1.bf16.msra.mxu0 0
      %3940 = vmatprep.mubr.bf16.mxu0 0
      %3941 = vmatmul.mubr.bf16.gmra.mrb[0].mxu0 %v3826
      %v3942 = vpop.f32.mrb[0].mxu0
      %v3943 = vadd.f32 0.0, %v3942
      %v3944 = vpop.f32.mrb[0].mxu0
      %v3945 = vadd.f32 0.0, %v3944
      %v3946 = vpop.f32.mrb[0].mxu0
      %v3947 = vpop.f32.mrb[0].mxu0
      %3948 = vdwg.mxu0
      %v3949 = vadd.f32 %v3807, %v3943
      %v3950 = vadd.f32 %v3808, %v3945
      %s3951 = scalar_lea.vmem %s3, 1024
      %v3952 = vld [vmem:[%s3951] sm:$0xff]
      %v3953 = vld [vmem:[%s3951 + $0x8] sm:$0xff]
      %v3954 = vld [vmem:[%s3951 + $0x10] sm:$0xff]
      %v3955 = vld [vmem:[%s3951 + $0x18] sm:$0xff]
      %v3956 = vld [vmem:[%s3951 + $0x20] sm:$0xff]
      %v3957 = vld [vmem:[%s3951 + $0x28] sm:$0xff]
      %v3958 = vld [vmem:[%s3951 + $0x30] sm:$0xff]
      %v3959 = vld [vmem:[%s3951 + $0x38] sm:$0xff]
      %v3960 = vld [vmem:[%s3951 + $0x40] sm:$0xff]
      %v3961 = vld [vmem:[%s3951 + $0x48] sm:$0xff]
      %v3962 = vld [vmem:[%s3951 + $0x50] sm:$0xff]
      %v3963 = vld [vmem:[%s3951 + $0x58] sm:$0xff]
      %v3964 = vld [vmem:[%s3951 + $0x60] sm:$0xff]
      %v3965 = vld [vmem:[%s3951 + $0x68] sm:$0xff]
      %v3966 = vld [vmem:[%s3951 + $0x70] sm:$0xff]
      %v3967 = vld [vmem:[%s3951 + $0x78] sm:$0xff]
      %v3968 = vrot.slane %v2818, 4
      %v3986 = vunpack.c.l.b16 %v3952
      %v3987 = vunpack.c.h.b16 %v3952
      %v3988 = vunpack.c.l.b16 %v3953
      %v3989 = vunpack.c.h.b16 %v3953
      %v3990 = vunpack.c.l.b16 %v3954
      %v3991 = vunpack.c.h.b16 %v3954
      %v3992 = vunpack.c.l.b16 %v3955
      %v3993 = vunpack.c.h.b16 %v3955
      %v3994 = vunpack.c.l.b16 %v3956
      %v3995 = vunpack.c.h.b16 %v3956
      %v3996 = vunpack.c.l.b16 %v3957
      %v3997 = vunpack.c.h.b16 %v3957
      %v3998 = vunpack.c.l.b16 %v3958
      %v3999 = vunpack.c.h.b16 %v3958
      %v4000 = vunpack.c.l.b16 %v3959
      %v4001 = vunpack.c.h.b16 %v3959
      %v4002 = vunpack.c.l.b16 %v3960
      %v4003 = vunpack.c.h.b16 %v3960
      %v4004 = vunpack.c.l.b16 %v3961
      %v4005 = vunpack.c.h.b16 %v3961
      %v4006 = vunpack.c.l.b16 %v3962
      %v4007 = vunpack.c.h.b16 %v3962
      %v4008 = vunpack.c.l.b16 %v3963
      %v4009 = vunpack.c.h.b16 %v3963
      %v4010 = vunpack.c.l.b16 %v3964
      %v4011 = vunpack.c.h.b16 %v3964
      %v4012 = vunpack.c.l.b16 %v3965
      %v4013 = vunpack.c.h.b16 %v3965
      %v4014 = vunpack.c.l.b16 %v3966
      %v4015 = vunpack.c.h.b16 %v3966
      %v4016 = vunpack.c.l.b16 %v3967
      %v4017 = vunpack.c.h.b16 %v3967
      %v4018 = vpack.c.b16 %v3988, %v3986
      %v4019 = vpack.c.b16 %v3989, %v3987
      %v4020 = vpack.c.b16 %v3992, %v3990
      %v4021 = vpack.c.b16 %v3993, %v3991
      %v4022 = vpack.c.b16 %v3996, %v3994
      %v4023 = vpack.c.b16 %v3997, %v3995
      %v4024 = vpack.c.b16 %v4000, %v3998
      %v4025 = vpack.c.b16 %v4001, %v3999
      %v4026 = vpack.c.b16 %v4004, %v4002
      %v4027 = vpack.c.b16 %v4005, %v4003
      %v4028 = vpack.c.b16 %v4008, %v4006
      %v4029 = vpack.c.b16 %v4009, %v4007
      %v4030 = vpack.c.b16 %v4012, %v4010
      %v4031 = vpack.c.b16 %v4013, %v4011
      %v4032 = vpack.c.b16 %v4016, %v4014
      %v4033 = vpack.c.b16 %v4017, %v4015
      %4050 = vmatprep.subr.bf16.mxu0 %v4019
      %4051 = vmatpush1.bf16.msra.mxu0 %v4018
      %4052 = vmatprep.subr.bf16.mxu0 %v4021
      %4053 = vmatpush1.bf16.msra.mxu0 %v4020
      %4054 = vmatprep.subr.bf16.mxu0 %v4023
      %4055 = vmatpush1.bf16.msra.mxu0 %v4022
      %4056 = vmatprep.subr.bf16.mxu0 %v4025
      %4057 = vmatpush1.bf16.msra.mxu0 %v4024
      %4058 = vmatprep.subr.bf16.mxu0 %v4027
      %4059 = vmatpush1.bf16.msra.mxu0 %v4026
      %4060 = vmatprep.subr.bf16.mxu0 %v4029
      %4061 = vmatpush1.bf16.msra.mxu0 %v4028
      %4062 = vmatprep.subr.bf16.mxu0 %v4031
      %4063 = vmatpush1.bf16.msra.mxu0 %v4030
      %4064 = vmatprep.subr.bf16.mxu0 %v4033
      %4065 = vmatpush1.bf16.msra.mxu0 %v4032
      %4066 = vmatprep.subr.bf16.mxu0 0
      %4067 = vmatpush1.bf16.msra.mxu0 0
      %4068 = vmatprep.subr.bf16.mxu0 0
      %4069 = vmatpush1.bf16.msra.mxu0 0
      %4070 = vmatprep.subr.bf16.mxu0 0
      %4071 = vmatpush1.bf16.msra.mxu0 0
      %4072 = vmatprep.subr.bf16.mxu0 0
      %4073 = vmatpush1.bf16.msra.mxu0 0
      %4074 = vmatprep.subr.bf16.mxu0 0
      %4075 = vmatpush1.bf16.msra.mxu0 0
      %4076 = vmatprep.subr.bf16.mxu0 0
      %4077 = vmatpush1.bf16.msra.mxu0 0
      %4078 = vmatprep.subr.bf16.mxu0 0
      %4079 = vmatpush1.bf16.msra.mxu0 0
      %4080 = vmatprep.subr.bf16.mxu0 0
      %4081 = vmatpush1.bf16.msra.mxu0 0
      %4082 = vmatprep.mubr.bf16.mxu0 0
      %4083 = vmatmul.mubr.bf16.gmra.mrb[0].mxu0 %v3968
      %v4084 = vpop.f32.mrb[0].mxu0
      %v4085 = vadd.f32 0.0, %v4084
      %v4086 = vpop.f32.mrb[0].mxu0
      %v4087 = vadd.f32 0.0, %v4086
      %v4088 = vpop.f32.mrb[0].mxu0
      %v4089 = vpop.f32.mrb[0].mxu0
      %4090 = vdwg.mxu0
      %v4091 = vadd.f32 %v3949, %v4085
      %v4092 = vadd.f32 %v3950, %v4087
      %s4093 = scalar_lea.vmem %s3, 1152
      %v4094 = vld [vmem:[%s4093] sm:$0xff]
      %v4095 = vld [vmem:[%s4093 + $0x8] sm:$0xff]
      %v4096 = vld [vmem:[%s4093 + $0x10] sm:$0xff]
      %v4097 = vld [vmem:[%s4093 + $0x18] sm:$0xff]
      %v4098 = vld [vmem:[%s4093 + $0x20] sm:$0xff]
      %v4099 = vld [vmem:[%s4093 + $0x28] sm:$0xff]
      %v4100 = vld [vmem:[%s4093 + $0x30] sm:$0xff]
      %v4101 = vld [vmem:[%s4093 + $0x38] sm:$0xff]
      %v4102 = vld [vmem:[%s4093 + $0x40] sm:$0xff]
      %v4103 = vld [vmem:[%s4093 + $0x48] sm:$0xff]
      %v4104 = vld [vmem:[%s4093 + $0x50] sm:$0xff]
      %v4105 = vld [vmem:[%s4093 + $0x58] sm:$0xff]
      %v4106 = vld [vmem:[%s4093 + $0x60] sm:$0xff]
      %v4107 = vld [vmem:[%s4093 + $0x68] sm:$0xff]
      %v4108 = vld [vmem:[%s4093 + $0x70] sm:$0xff]
      %v4109 = vld [vmem:[%s4093 + $0x78] sm:$0xff]
      %v4110 = vrot.slane %v2853, 4
      %v4128 = vunpack.c.l.b16 %v4094
      %v4129 = vunpack.c.h.b16 %v4094
      %v4130 = vunpack.c.l.b16 %v4095
      %v4131 = vunpack.c.h.b16 %v4095
      %v4132 = vunpack.c.l.b16 %v4096
      %v4133 = vunpack.c.h.b16 %v4096
      %v4134 = vunpack.c.l.b16 %v4097
      %v4135 = vunpack.c.h.b16 %v4097
      %v4136 = vunpack.c.l.b16 %v4098
      %v4137 = vunpack.c.h.b16 %v4098
      %v4138 = vunpack.c.l.b16 %v4099
      %v4139 = vunpack.c.h.b16 %v4099
      %v4140 = vunpack.c.l.b16 %v4100
      %v4141 = vunpack.c.h.b16 %v4100
      %v4142 = vunpack.c.l.b16 %v4101
      %v4143 = vunpack.c.h.b16 %v4101
      %v4144 = vunpack.c.l.b16 %v4102
      %v4145 = vunpack.c.h.b16 %v4102
      %v4146 = vunpack.c.l.b16 %v4103
      %v4147 = vunpack.c.h.b16 %v4103
      %v4148 = vunpack.c.l.b16 %v4104
      %v4149 = vunpack.c.h.b16 %v4104
      %v4150 = vunpack.c.l.b16 %v4105
      %v4151 = vunpack.c.h.b16 %v4105
      %v4152 = vunpack.c.l.b16 %v4106
      %v4153 = vunpack.c.h.b16 %v4106
      %v4154 = vunpack.c.l.b16 %v4107
      %v4155 = vunpack.c.h.b16 %v4107
      %v4156 = vunpack.c.l.b16 %v4108
      %v4157 = vunpack.c.h.b16 %v4108
      %v4158 = vunpack.c.l.b16 %v4109
      %v4159 = vunpack.c.h.b16 %v4109
      %v4160 = vpack.c.b16 %v4130, %v4128
      %v4161 = vpack.c.b16 %v4131, %v4129
      %v4162 = vpack.c.b16 %v4134, %v4132
      %v4163 = vpack.c.b16 %v4135, %v4133
      %v4164 = vpack.c.b16 %v4138, %v4136
      %v4165 = vpack.c.b16 %v4139, %v4137
      %v4166 = vpack.c.b16 %v4142, %v4140
      %v4167 = vpack.c.b16 %v4143, %v4141
      %v4168 = vpack.c.b16 %v4146, %v4144
      %v4169 = vpack.c.b16 %v4147, %v4145
      %v4170 = vpack.c.b16 %v4150, %v4148
      %v4171 = vpack.c.b16 %v4151, %v4149
      %v4172 = vpack.c.b16 %v4154, %v4152
      %v4173 = vpack.c.b16 %v4155, %v4153
      %v4174 = vpack.c.b16 %v4158, %v4156
      %v4175 = vpack.c.b16 %v4159, %v4157
      %4192 = vmatprep.subr.bf16.mxu0 %v4161
      %4193 = vmatpush1.bf16.msra.mxu0 %v4160
      %4194 = vmatprep.subr.bf16.mxu0 %v4163
      %4195 = vmatpush1.bf16.msra.mxu0 %v4162
      %4196 = vmatprep.subr.bf16.mxu0 %v4165
      %4197 = vmatpush1.bf16.msra.mxu0 %v4164
      %4198 = vmatprep.subr.bf16.mxu0 %v4167
      %4199 = vmatpush1.bf16.msra.mxu0 %v4166
      %4200 = vmatprep.subr.bf16.mxu0 %v4169
      %4201 = vmatpush1.bf16.msra.mxu0 %v4168
      %4202 = vmatprep.subr.bf16.mxu0 %v4171
      %4203 = vmatpush1.bf16.msra.mxu0 %v4170
      %4204 = vmatprep.subr.bf16.mxu0 %v4173
      %4205 = vmatpush1.bf16.msra.mxu0 %v4172
      %4206 = vmatprep.subr.bf16.mxu0 %v4175
      %4207 = vmatpush1.bf16.msra.mxu0 %v4174
      %4208 = vmatprep.subr.bf16.mxu0 0
      %4209 = vmatpush1.bf16.msra.mxu0 0
      %4210 = vmatprep.subr.bf16.mxu0 0
      %4211 = vmatpush1.bf16.msra.mxu0 0
      %4212 = vmatprep.subr.bf16.mxu0 0
      %4213 = vmatpush1.bf16.msra.mxu0 0
      %4214 = vmatprep.subr.bf16.mxu0 0
      %4215 = vmatpush1.bf16.msra.mxu0 0
      %4216 = vmatprep.subr.bf16.mxu0 0
      %4217 = vmatpush1.bf16.msra.mxu0 0
      %4218 = vmatprep.subr.bf16.mxu0 0
      %4219 = vmatpush1.bf16.msra.mxu0 0
      %4220 = vmatprep.subr.bf16.mxu0 0
      %4221 = vmatpush1.bf16.msra.mxu0 0
      %4222 = vmatprep.subr.bf16.mxu0 0
      %4223 = vmatpush1.bf16.msra.mxu0 0
      %4224 = vmatprep.mubr.bf16.mxu0 0
      %4225 = vmatmul.mubr.bf16.gmra.mrb[0].mxu0 %v4110
      %v4226 = vpop.f32.mrb[0].mxu0
      %v4227 = vadd.f32 0.0, %v4226
      %v4228 = vpop.f32.mrb[0].mxu0
      %v4229 = vadd.f32 0.0, %v4228
      %v4230 = vpop.f32.mrb[0].mxu0
      %v4231 = vpop.f32.mrb[0].mxu0
      %4232 = vdwg.mxu0
      %v4233 = vadd.f32 %v4091, %v4227
      %v4234 = vadd.f32 %v4092, %v4229
      %s4235 = scalar_lea.vmem %s3, 1280
      %v4236 = vld [vmem:[%s4235] sm:$0xff]
      %v4237 = vld [vmem:[%s4235 + $0x8] sm:$0xff]
      %v4238 = vld [vmem:[%s4235 + $0x10] sm:$0xff]
      %v4239 = vld [vmem:[%s4235 + $0x18] sm:$0xff]
      %v4240 = vld [vmem:[%s4235 + $0x20] sm:$0xff]
      %v4241 = vld [vmem:[%s4235 + $0x28] sm:$0xff]
      %v4242 = vld [vmem:[%s4235 + $0x30] sm:$0xff]
      %v4243 = vld [vmem:[%s4235 + $0x38] sm:$0xff]
      %v4244 = vld [vmem:[%s4235 + $0x40] sm:$0xff]
      %v4245 = vld [vmem:[%s4235 + $0x48] sm:$0xff]
      %v4246 = vld [vmem:[%s4235 + $0x50] sm:$0xff]
      %v4247 = vld [vmem:[%s4235 + $0x58] sm:$0xff]
      %v4248 = vld [vmem:[%s4235 + $0x60] sm:$0xff]
      %v4249 = vld [vmem:[%s4235 + $0x68] sm:$0xff]
      %v4250 = vld [vmem:[%s4235 + $0x70] sm:$0xff]
      %v4251 = vld [vmem:[%s4235 + $0x78] sm:$0xff]
      %v4252 = vrot.slane %v2818, 5
      %v4270 = vunpack.c.l.b16 %v4236
      %v4271 = vunpack.c.h.b16 %v4236
      %v4272 = vunpack.c.l.b16 %v4237
      %v4273 = vunpack.c.h.b16 %v4237
      %v4274 = vunpack.c.l.b16 %v4238
      %v4275 = vunpack.c.h.b16 %v4238
      %v4276 = vunpack.c.l.b16 %v4239
      %v4277 = vunpack.c.h.b16 %v4239
      %v4278 = vunpack.c.l.b16 %v4240
      %v4279 = vunpack.c.h.b16 %v4240
      %v4280 = vunpack.c.l.b16 %v4241
      %v4281 = vunpack.c.h.b16 %v4241
      %v4282 = vunpack.c.l.b16 %v4242
      %v4283 = vunpack.c.h.b16 %v4242
      %v4284 = vunpack.c.l.b16 %v4243
      %v4285 = vunpack.c.h.b16 %v4243
      %v4286 = vunpack.c.l.b16 %v4244
      %v4287 = vunpack.c.h.b16 %v4244
      %v4288 = vunpack.c.l.b16 %v4245
      %v4289 = vunpack.c.h.b16 %v4245
      %v4290 = vunpack.c.l.b16 %v4246
      %v4291 = vunpack.c.h.b16 %v4246
      %v4292 = vunpack.c.l.b16 %v4247
      %v4293 = vunpack.c.h.b16 %v4247
      %v4294 = vunpack.c.l.b16 %v4248
      %v4295 = vunpack.c.h.b16 %v4248
      %v4296 = vunpack.c.l.b16 %v4249
      %v4297 = vunpack.c.h.b16 %v4249
      %v4298 = vunpack.c.l.b16 %v4250
      %v4299 = vunpack.c.h.b16 %v4250
      %v4300 = vunpack.c.l.b16 %v4251
      %v4301 = vunpack.c.h.b16 %v4251
      %v4302 = vpack.c.b16 %v4272, %v4270
      %v4303 = vpack.c.b16 %v4273, %v4271
      %v4304 = vpack.c.b16 %v4276, %v4274
      %v4305 = vpack.c.b16 %v4277, %v4275
      %v4306 = vpack.c.b16 %v4280, %v4278
      %v4307 = vpack.c.b16 %v4281, %v4279
      %v4308 = vpack.c.b16 %v4284, %v4282
      %v4309 = vpack.c.b16 %v4285, %v4283
      %v4310 = vpack.c.b16 %v4288, %v4286
      %v4311 = vpack.c.b16 %v4289, %v4287
      %v4312 = vpack.c.b16 %v4292, %v4290
      %v4313 = vpack.c.b16 %v4293, %v4291
      %v4314 = vpack.c.b16 %v4296, %v4294
      %v4315 = vpack.c.b16 %v4297, %v4295
      %v4316 = vpack.c.b16 %v4300, %v4298
      %v4317 = vpack.c.b16 %v4301, %v4299
      %4334 = vmatprep.subr.bf16.mxu0 %v4303
      %4335 = vmatpush1.bf16.msra.mxu0 %v4302
      %4336 = vmatprep.subr.bf16.mxu0 %v4305
      %4337 = vmatpush1.bf16.msra.mxu0 %v4304
      %4338 = vmatprep.subr.bf16.mxu0 %v4307
      %4339 = vmatpush1.bf16.msra.mxu0 %v4306
      %4340 = vmatprep.subr.bf16.mxu0 %v4309
      %4341 = vmatpush1.bf16.msra.mxu0 %v4308
      %4342 = vmatprep.subr.bf16.mxu0 %v4311
      %4343 = vmatpush1.bf16.msra.mxu0 %v4310
      %4344 = vmatprep.subr.bf16.mxu0 %v4313
      %4345 = vmatpush1.bf16.msra.mxu0 %v4312
      %4346 = vmatprep.subr.bf16.mxu0 %v4315
      %4347 = vmatpush1.bf16.msra.mxu0 %v4314
      %4348 = vmatprep.subr.bf16.mxu0 %v4317
      %4349 = vmatpush1.bf16.msra.mxu0 %v4316
      %4350 = vmatprep.subr.bf16.mxu0 0
      %4351 = vmatpush1.bf16.msra.mxu0 0
      %4352 = vmatprep.subr.bf16.mxu0 0
      %4353 = vmatpush1.bf16.msra.mxu0 0
      %4354 = vmatprep.subr.bf16.mxu0 0
      %4355 = vmatpush1.bf16.msra.mxu0 0
      %4356 = vmatprep.subr.bf16.mxu0 0
      %4357 = vmatpush1.bf16.msra.mxu0 0
      %4358 = vmatprep.subr.bf16.mxu0 0
      %4359 = vmatpush1.bf16.msra.mxu0 0
      %4360 = vmatprep.subr.bf16.mxu0 0
      %4361 = vmatpush1.bf16.msra.mxu0 0
      %4362 = vmatprep.subr.bf16.mxu0 0
      %4363 = vmatpush1.bf16.msra.mxu0 0
      %4364 = vmatprep.subr.bf16.mxu0 0
      %4365 = vmatpush1.bf16.msra.mxu0 0
      %4366 = vmatprep.mubr.bf16.mxu0 0
      %4367 = vmatmul.mubr.bf16.gmra.mrb[0].mxu0 %v4252
      %v4368 = vpop.f32.mrb[0].mxu0
      %v4369 = vadd.f32 0.0, %v4368
      %v4370 = vpop.f32.mrb[0].mxu0
      %v4371 = vadd.f32 0.0, %v4370
      %v4372 = vpop.f32.mrb[0].mxu0
      %v4373 = vpop.f32.mrb[0].mxu0
      %4374 = vdwg.mxu0
      %v4375 = vadd.f32 %v4233, %v4369
      %v4376 = vadd.f32 %v4234, %v4371
      %s4377 = scalar_lea.vmem %s3, 1408
      %v4378 = vld [vmem:[%s4377] sm:$0xff]
      %v4379 = vld [vmem:[%s4377 + $0x8] sm:$0xff]
      %v4380 = vld [vmem:[%s4377 + $0x10] sm:$0xff]
      %v4381 = vld [vmem:[%s4377 + $0x18] sm:$0xff]
      %v4382 = vld [vmem:[%s4377 + $0x20] sm:$0xff]
      %v4383 = vld [vmem:[%s4377 + $0x28] sm:$0xff]
      %v4384 = vld [vmem:[%s4377 + $0x30] sm:$0xff]
      %v4385 = vld [vmem:[%s4377 + $0x38] sm:$0xff]
      %v4386 = vld [vmem:[%s4377 + $0x40] sm:$0xff]
      %v4387 = vld [vmem:[%s4377 + $0x48] sm:$0xff]
      %v4388 = vld [vmem:[%s4377 + $0x50] sm:$0xff]
      %v4389 = vld [vmem:[%s4377 + $0x58] sm:$0xff]
      %v4390 = vld [vmem:[%s4377 + $0x60] sm:$0xff]
      %v4391 = vld [vmem:[%s4377 + $0x68] sm:$0xff]
      %v4392 = vld [vmem:[%s4377 + $0x70] sm:$0xff]
      %v4393 = vld [vmem:[%s4377 + $0x78] sm:$0xff]
      %v4394 = vrot.slane %v2853, 5
      %v4412 = vunpack.c.l.b16 %v4378
      %v4413 = vunpack.c.h.b16 %v4378
      %v4414 = vunpack.c.l.b16 %v4379
      %v4415 = vunpack.c.h.b16 %v4379
      %v4416 = vunpack.c.l.b16 %v4380
      %v4417 = vunpack.c.h.b16 %v4380
      %v4418 = vunpack.c.l.b16 %v4381
      %v4419 = vunpack.c.h.b16 %v4381
      %v4420 = vunpack.c.l.b16 %v4382
      %v4421 = vunpack.c.h.b16 %v4382
      %v4422 = vunpack.c.l.b16 %v4383
      %v4423 = vunpack.c.h.b16 %v4383
      %v4424 = vunpack.c.l.b16 %v4384
      %v4425 = vunpack.c.h.b16 %v4384
      %v4426 = vunpack.c.l.b16 %v4385
      %v4427 = vunpack.c.h.b16 %v4385
      %v4428 = vunpack.c.l.b16 %v4386
      %v4429 = vunpack.c.h.b16 %v4386
      %v4430 = vunpack.c.l.b16 %v4387
      %v4431 = vunpack.c.h.b16 %v4387
      %v4432 = vunpack.c.l.b16 %v4388
      %v4433 = vunpack.c.h.b16 %v4388
      %v4434 = vunpack.c.l.b16 %v4389
      %v4435 = vunpack.c.h.b16 %v4389
      %v4436 = vunpack.c.l.b16 %v4390
      %v4437 = vunpack.c.h.b16 %v4390
      %v4438 = vunpack.c.l.b16 %v4391
      %v4439 = vunpack.c.h.b16 %v4391
      %v4440 = vunpack.c.l.b16 %v4392
      %v4441 = vunpack.c.h.b16 %v4392
      %v4442 = vunpack.c.l.b16 %v4393
      %v4443 = vunpack.c.h.b16 %v4393
      %v4444 = vpack.c.b16 %v4414, %v4412
      %v4445 = vpack.c.b16 %v4415, %v4413
      %v4446 = vpack.c.b16 %v4418, %v4416
      %v4447 = vpack.c.b16 %v4419, %v4417
      %v4448 = vpack.c.b16 %v4422, %v4420
      %v4449 = vpack.c.b16 %v4423, %v4421
      %v4450 = vpack.c.b16 %v4426, %v4424
      %v4451 = vpack.c.b16 %v4427, %v4425
      %v4452 = vpack.c.b16 %v4430, %v4428
      %v4453 = vpack.c.b16 %v4431, %v4429
      %v4454 = vpack.c.b16 %v4434, %v4432
      %v4455 = vpack.c.b16 %v4435, %v4433
      %v4456 = vpack.c.b16 %v4438, %v4436
      %v4457 = vpack.c.b16 %v4439, %v4437
      %v4458 = vpack.c.b16 %v4442, %v4440
      %v4459 = vpack.c.b16 %v4443, %v4441
      %4476 = vmatprep.subr.bf16.mxu0 %v4445
      %4477 = vmatpush1.bf16.msra.mxu0 %v4444
      %4478 = vmatprep.subr.bf16.mxu0 %v4447
      %4479 = vmatpush1.bf16.msra.mxu0 %v4446
      %4480 = vmatprep.subr.bf16.mxu0 %v4449
      %4481 = vmatpush1.bf16.msra.mxu0 %v4448
      %4482 = vmatprep.subr.bf16.mxu0 %v4451
      %4483 = vmatpush1.bf16.msra.mxu0 %v4450
      %4484 = vmatprep.subr.bf16.mxu0 %v4453
      %4485 = vmatpush1.bf16.msra.mxu0 %v4452
      %4486 = vmatprep.subr.bf16.mxu0 %v4455
      %4487 = vmatpush1.bf16.msra.mxu0 %v4454
      %4488 = vmatprep.subr.bf16.mxu0 %v4457
      %4489 = vmatpush1.bf16.msra.mxu0 %v4456
      %4490 = vmatprep.subr.bf16.mxu0 %v4459
      %4491 = vmatpush1.bf16.msra.mxu0 %v4458
      %4492 = vmatprep.subr.bf16.mxu0 0
      %4493 = vmatpush1.bf16.msra.mxu0 0
      %4494 = vmatprep.subr.bf16.mxu0 0
      %4495 = vmatpush1.bf16.msra.mxu0 0
      %4496 = vmatprep.subr.bf16.mxu0 0
      %4497 = vmatpush1.bf16.msra.mxu0 0
      %4498 = vmatprep.subr.bf16.mxu0 0
      %4499 = vmatpush1.bf16.msra.mxu0 0
      %4500 = vmatprep.subr.bf16.mxu0 0
      %4501 = vmatpush1.bf16.msra.mxu0 0
      %4502 = vmatprep.subr.bf16.mxu0 0
      %4503 = vmatpush1.bf16.msra.mxu0 0
      %4504 = vmatprep.subr.bf16.mxu0 0
      %4505 = vmatpush1.bf16.msra.mxu0 0
      %4506 = vmatprep.subr.bf16.mxu0 0
      %4507 = vmatpush1.bf16.msra.mxu0 0
      %4508 = vmatprep.mubr.bf16.mxu0 0
      %4509 = vmatmul.mubr.bf16.gmra.mrb[0].mxu0 %v4394
      %v4510 = vpop.f32.mrb[0].mxu0
      %v4511 = vadd.f32 0.0, %v4510
      %v4512 = vpop.f32.mrb[0].mxu0
      %v4513 = vadd.f32 0.0, %v4512
      %v4514 = vpop.f32.mrb[0].mxu0
      %v4515 = vpop.f32.mrb[0].mxu0
      %4516 = vdwg.mxu0
      %v4517 = vadd.f32 %v4375, %v4511
      %v4518 = vadd.f32 %v4376, %v4513
      %s4519 = scalar_lea.vmem %s3, 1536
      %v4520 = vld [vmem:[%s4519] sm:$0xff]
      %v4521 = vld [vmem:[%s4519 + $0x8] sm:$0xff]
      %v4522 = vld [vmem:[%s4519 + $0x10] sm:$0xff]
      %v4523 = vld [vmem:[%s4519 + $0x18] sm:$0xff]
      %v4524 = vld [vmem:[%s4519 + $0x20] sm:$0xff]
      %v4525 = vld [vmem:[%s4519 + $0x28] sm:$0xff]
      %v4526 = vld [vmem:[%s4519 + $0x30] sm:$0xff]
      %v4527 = vld [vmem:[%s4519 + $0x38] sm:$0xff]
      %v4528 = vld [vmem:[%s4519 + $0x40] sm:$0xff]
      %v4529 = vld [vmem:[%s4519 + $0x48] sm:$0xff]
      %v4530 = vld [vmem:[%s4519 + $0x50] sm:$0xff]
      %v4531 = vld [vmem:[%s4519 + $0x58] sm:$0xff]
      %v4532 = vld [vmem:[%s4519 + $0x60] sm:$0xff]
      %v4533 = vld [vmem:[%s4519 + $0x68] sm:$0xff]
      %v4534 = vld [vmem:[%s4519 + $0x70] sm:$0xff]
      %v4535 = vld [vmem:[%s4519 + $0x78] sm:$0xff]
      %v4536 = vrot.slane %v2818, 6
      %v4554 = vunpack.c.l.b16 %v4520
      %v4555 = vunpack.c.h.b16 %v4520
      %v4556 = vunpack.c.l.b16 %v4521
      %v4557 = vunpack.c.h.b16 %v4521
      %v4558 = vunpack.c.l.b16 %v4522
      %v4559 = vunpack.c.h.b16 %v4522
      %v4560 = vunpack.c.l.b16 %v4523
      %v4561 = vunpack.c.h.b16 %v4523
      %v4562 = vunpack.c.l.b16 %v4524
      %v4563 = vunpack.c.h.b16 %v4524
      %v4564 = vunpack.c.l.b16 %v4525
      %v4565 = vunpack.c.h.b16 %v4525
      %v4566 = vunpack.c.l.b16 %v4526
      %v4567 = vunpack.c.h.b16 %v4526
      %v4568 = vunpack.c.l.b16 %v4527
      %v4569 = vunpack.c.h.b16 %v4527
      %v4570 = vunpack.c.l.b16 %v4528
      %v4571 = vunpack.c.h.b16 %v4528
      %v4572 = vunpack.c.l.b16 %v4529
      %v4573 = vunpack.c.h.b16 %v4529
      %v4574 = vunpack.c.l.b16 %v4530
      %v4575 = vunpack.c.h.b16 %v4530
      %v4576 = vunpack.c.l.b16 %v4531
      %v4577 = vunpack.c.h.b16 %v4531
      %v4578 = vunpack.c.l.b16 %v4532
      %v4579 = vunpack.c.h.b16 %v4532
      %v4580 = vunpack.c.l.b16 %v4533
      %v4581 = vunpack.c.h.b16 %v4533
      %v4582 = vunpack.c.l.b16 %v4534
      %v4583 = vunpack.c.h.b16 %v4534
      %v4584 = vunpack.c.l.b16 %v4535
      %v4585 = vunpack.c.h.b16 %v4535
      %v4586 = vpack.c.b16 %v4556, %v4554
      %v4587 = vpack.c.b16 %v4557, %v4555
      %v4588 = vpack.c.b16 %v4560, %v4558
      %v4589 = vpack.c.b16 %v4561, %v4559
      %v4590 = vpack.c.b16 %v4564, %v4562
      %v4591 = vpack.c.b16 %v4565, %v4563
      %v4592 = vpack.c.b16 %v4568, %v4566
      %v4593 = vpack.c.b16 %v4569, %v4567
      %v4594 = vpack.c.b16 %v4572, %v4570
      %v4595 = vpack.c.b16 %v4573, %v4571
      %v4596 = vpack.c.b16 %v4576, %v4574
      %v4597 = vpack.c.b16 %v4577, %v4575
      %v4598 = vpack.c.b16 %v4580, %v4578
      %v4599 = vpack.c.b16 %v4581, %v4579
      %v4600 = vpack.c.b16 %v4584, %v4582
      %v4601 = vpack.c.b16 %v4585, %v4583
      %4618 = vmatprep.subr.bf16.mxu0 %v4587
      %4619 = vmatpush1.bf16.msra.mxu0 %v4586
      %4620 = vmatprep.subr.bf16.mxu0 %v4589
      %4621 = vmatpush1.bf16.msra.mxu0 %v4588
      %4622 = vmatprep.subr.bf16.mxu0 %v4591
      %4623 = vmatpush1.bf16.msra.mxu0 %v4590
      %4624 = vmatprep.subr.bf16.mxu0 %v4593
      %4625 = vmatpush1.bf16.msra.mxu0 %v4592
      %4626 = vmatprep.subr.bf16.mxu0 %v4595
      %4627 = vmatpush1.bf16.msra.mxu0 %v4594
      %4628 = vmatprep.subr.bf16.mxu0 %v4597
      %4629 = vmatpush1.bf16.msra.mxu0 %v4596
      %4630 = vmatprep.subr.bf16.mxu0 %v4599
      %4631 = vmatpush1.bf16.msra.mxu0 %v4598
      %4632 = vmatprep.subr.bf16.mxu0 %v4601
      %4633 = vmatpush1.bf16.msra.mxu0 %v4600
      %4634 = vmatprep.subr.bf16.mxu0 0
      %4635 = vmatpush1.bf16.msra.mxu0 0
      %4636 = vmatprep.subr.bf16.mxu0 0
      %4637 = vmatpush1.bf16.msra.mxu0 0
      %4638 = vmatprep.subr.bf16.mxu0 0
      %4639 = vmatpush1.bf16.msra.mxu0 0
      %4640 = vmatprep.subr.bf16.mxu0 0
      %4641 = vmatpush1.bf16.msra.mxu0 0
      %4642 = vmatprep.subr.bf16.mxu0 0
      %4643 = vmatpush1.bf16.msra.mxu0 0
      %4644 = vmatprep.subr.bf16.mxu0 0
      %4645 = vmatpush1.bf16.msra.mxu0 0
      %4646 = vmatprep.subr.bf16.mxu0 0
      %4647 = vmatpush1.bf16.msra.mxu0 0
      %4648 = vmatprep.subr.bf16.mxu0 0
      %4649 = vmatpush1.bf16.msra.mxu0 0
      %4650 = vmatprep.mubr.bf16.mxu0 0
      %4651 = vmatmul.mubr.bf16.gmra.mrb[0].mxu0 %v4536
      %v4652 = vpop.f32.mrb[0].mxu0
      %v4653 = vadd.f32 0.0, %v4652
      %v4654 = vpop.f32.mrb[0].mxu0
      %v4655 = vadd.f32 0.0, %v4654
      %v4656 = vpop.f32.mrb[0].mxu0
      %v4657 = vpop.f32.mrb[0].mxu0
      %4658 = vdwg.mxu0
      %v4659 = vadd.f32 %v4517, %v4653
      %v4660 = vadd.f32 %v4518, %v4655
      %s4661 = scalar_lea.vmem %s3, 1664
      %v4662 = vld [vmem:[%s4661] sm:$0xff]
      %v4663 = vld [vmem:[%s4661 + $0x8] sm:$0xff]
      %v4664 = vld [vmem:[%s4661 + $0x10] sm:$0xff]
      %v4665 = vld [vmem:[%s4661 + $0x18] sm:$0xff]
      %v4666 = vld [vmem:[%s4661 + $0x20] sm:$0xff]
      %v4667 = vld [vmem:[%s4661 + $0x28] sm:$0xff]
      %v4668 = vld [vmem:[%s4661 + $0x30] sm:$0xff]
      %v4669 = vld [vmem:[%s4661 + $0x38] sm:$0xff]
      %v4670 = vld [vmem:[%s4661 + $0x40] sm:$0xff]
      %v4671 = vld [vmem:[%s4661 + $0x48] sm:$0xff]
      %v4672 = vld [vmem:[%s4661 + $0x50] sm:$0xff]
      %v4673 = vld [vmem:[%s4661 + $0x58] sm:$0xff]
      %v4674 = vld [vmem:[%s4661 + $0x60] sm:$0xff]
      %v4675 = vld [vmem:[%s4661 + $0x68] sm:$0xff]
      %v4676 = vld [vmem:[%s4661 + $0x70] sm:$0xff]
      %v4677 = vld [vmem:[%s4661 + $0x78] sm:$0xff]
      %v4678 = vrot.slane %v2853, 6
      %v4696 = vunpack.c.l.b16 %v4662
      %v4697 = vunpack.c.h.b16 %v4662
      %v4698 = vunpack.c.l.b16 %v4663
      %v4699 = vunpack.c.h.b16 %v4663
      %v4700 = vunpack.c.l.b16 %v4664
      %v4701 = vunpack.c.h.b16 %v4664
      %v4702 = vunpack.c.l.b16 %v4665
      %v4703 = vunpack.c.h.b16 %v4665
      %v4704 = vunpack.c.l.b16 %v4666
      %v4705 = vunpack.c.h.b16 %v4666
      %v4706 = vunpack.c.l.b16 %v4667
      %v4707 = vunpack.c.h.b16 %v4667
      %v4708 = vunpack.c.l.b16 %v4668
      %v4709 = vunpack.c.h.b16 %v4668
      %v4710 = vunpack.c.l.b16 %v4669
      %v4711 = vunpack.c.h.b16 %v4669
      %v4712 = vunpack.c.l.b16 %v4670
      %v4713 = vunpack.c.h.b16 %v4670
      %v4714 = vunpack.c.l.b16 %v4671
      %v4715 = vunpack.c.h.b16 %v4671
      %v4716 = vunpack.c.l.b16 %v4672
      %v4717 = vunpack.c.h.b16 %v4672
      %v4718 = vunpack.c.l.b16 %v4673
      %v4719 = vunpack.c.h.b16 %v4673
      %v4720 = vunpack.c.l.b16 %v4674
      %v4721 = vunpack.c.h.b16 %v4674
      %v4722 = vunpack.c.l.b16 %v4675
      %v4723 = vunpack.c.h.b16 %v4675
      %v4724 = vunpack.c.l.b16 %v4676
      %v4725 = vunpack.c.h.b16 %v4676
      %v4726 = vunpack.c.l.b16 %v4677
      %v4727 = vunpack.c.h.b16 %v4677
      %v4728 = vpack.c.b16 %v4698, %v4696
      %v4729 = vpack.c.b16 %v4699, %v4697
      %v4730 = vpack.c.b16 %v4702, %v4700
      %v4731 = vpack.c.b16 %v4703, %v4701
      %v4732 = vpack.c.b16 %v4706, %v4704
      %v4733 = vpack.c.b16 %v4707, %v4705
      %v4734 = vpack.c.b16 %v4710, %v4708
      %v4735 = vpack.c.b16 %v4711, %v4709
      %v4736 = vpack.c.b16 %v4714, %v4712
      %v4737 = vpack.c.b16 %v4715, %v4713
      %v4738 = vpack.c.b16 %v4718, %v4716
      %v4739 = vpack.c.b16 %v4719, %v4717
      %v4740 = vpack.c.b16 %v4722, %v4720
      %v4741 = vpack.c.b16 %v4723, %v4721
      %v4742 = vpack.c.b16 %v4726, %v4724
      %v4743 = vpack.c.b16 %v4727, %v4725
      %4760 = vmatprep.subr.bf16.mxu0 %v4729
      %4761 = vmatpush1.bf16.msra.mxu0 %v4728
      %4762 = vmatprep.subr.bf16.mxu0 %v4731
      %4763 = vmatpush1.bf16.msra.mxu0 %v4730
      %4764 = vmatprep.subr.bf16.mxu0 %v4733
      %4765 = vmatpush1.bf16.msra.mxu0 %v4732
      %4766 = vmatprep.subr.bf16.mxu0 %v4735
      %4767 = vmatpush1.bf16.msra.mxu0 %v4734
      %4768 = vmatprep.subr.bf16.mxu0 %v4737
      %4769 = vmatpush1.bf16.msra.mxu0 %v4736
      %4770 = vmatprep.subr.bf16.mxu0 %v4739
      %4771 = vmatpush1.bf16.msra.mxu0 %v4738
      %4772 = vmatprep.subr.bf16.mxu0 %v4741
      %4773 = vmatpush1.bf16.msra.mxu0 %v4740
      %4774 = vmatprep.subr.bf16.mxu0 %v4743
      %4775 = vmatpush1.bf16.msra.mxu0 %v4742
      %4776 = vmatprep.subr.bf16.mxu0 0
      %4777 = vmatpush1.bf16.msra.mxu0 0
      %4778 = vmatprep.subr.bf16.mxu0 0
      %4779 = vmatpush1.bf16.msra.mxu0 0
      %4780 = vmatprep.subr.bf16.mxu0 0
      %4781 = vmatpush1.bf16.msra.mxu0 0
      %4782 = vmatprep.subr.bf16.mxu0 0
      %4783 = vmatpush1.bf16.msra.mxu0 0
      %4784 = vmatprep.subr.bf16.mxu0 0
      %4785 = vmatpush1.bf16.msra.mxu0 0
      %4786 = vmatprep.subr.bf16.mxu0 0
      %4787 = vmatpush1.bf16.msra.mxu0 0
      %4788 = vmatprep.subr.bf16.mxu0 0
      %4789 = vmatpush1.bf16.msra.mxu0 0
      %4790 = vmatprep.subr.bf16.mxu0 0
      %4791 = vmatpush1.bf16.msra.mxu0 0
      %4792 = vmatprep.mubr.bf16.mxu0 0
      %4793 = vmatmul.mubr.bf16.gmra.mrb[0].mxu0 %v4678
      %v4794 = vpop.f32.mrb[0].mxu0
      %v4795 = vadd.f32 0.0, %v4794
      %v4796 = vpop.f32.mrb[0].mxu0
      %v4797 = vadd.f32 0.0, %v4796
      %v4798 = vpop.f32.mrb[0].mxu0
      %v4799 = vpop.f32.mrb[0].mxu0
      %4800 = vdwg.mxu0
      %v4801 = vadd.f32 %v4659, %v4795
      %v4802 = vadd.f32 %v4660, %v4797
      %s4803 = scalar_lea.vmem %s3, 1792
      %v4804 = vld [vmem:[%s4803] sm:$0xff]
      %v4805 = vld [vmem:[%s4803 + $0x8] sm:$0xff]
      %v4806 = vld [vmem:[%s4803 + $0x10] sm:$0xff]
      %v4807 = vld [vmem:[%s4803 + $0x18] sm:$0xff]
      %v4808 = vld [vmem:[%s4803 + $0x20] sm:$0xff]
      %v4809 = vld [vmem:[%s4803 + $0x28] sm:$0xff]
      %v4810 = vld [vmem:[%s4803 + $0x30] sm:$0xff]
      %v4811 = vld [vmem:[%s4803 + $0x38] sm:$0xff]
      %v4812 = vld [vmem:[%s4803 + $0x40] sm:$0xff]
      %v4813 = vld [vmem:[%s4803 + $0x48] sm:$0xff]
      %v4814 = vld [vmem:[%s4803 + $0x50] sm:$0xff]
      %v4815 = vld [vmem:[%s4803 + $0x58] sm:$0xff]
      %v4816 = vld [vmem:[%s4803 + $0x60] sm:$0xff]
      %v4817 = vld [vmem:[%s4803 + $0x68] sm:$0xff]
      %v4818 = vld [vmem:[%s4803 + $0x70] sm:$0xff]
      %v4819 = vld [vmem:[%s4803 + $0x78] sm:$0xff]
      %v4820 = vrot.slane %v2818, 7
      %v4838 = vunpack.c.l.b16 %v4804
      %v4839 = vunpack.c.h.b16 %v4804
      %v4840 = vunpack.c.l.b16 %v4805
      %v4841 = vunpack.c.h.b16 %v4805
      %v4842 = vunpack.c.l.b16 %v4806
      %v4843 = vunpack.c.h.b16 %v4806
      %v4844 = vunpack.c.l.b16 %v4807
      %v4845 = vunpack.c.h.b16 %v4807
      %v4846 = vunpack.c.l.b16 %v4808
      %v4847 = vunpack.c.h.b16 %v4808
      %v4848 = vunpack.c.l.b16 %v4809
      %v4849 = vunpack.c.h.b16 %v4809
      %v4850 = vunpack.c.l.b16 %v4810
      %v4851 = vunpack.c.h.b16 %v4810
      %v4852 = vunpack.c.l.b16 %v4811
      %v4853 = vunpack.c.h.b16 %v4811
      %v4854 = vunpack.c.l.b16 %v4812
      %v4855 = vunpack.c.h.b16 %v4812
      %v4856 = vunpack.c.l.b16 %v4813
      %v4857 = vunpack.c.h.b16 %v4813
      %v4858 = vunpack.c.l.b16 %v4814
      %v4859 = vunpack.c.h.b16 %v4814
      %v4860 = vunpack.c.l.b16 %v4815
      %v4861 = vunpack.c.h.b16 %v4815
      %v4862 = vunpack.c.l.b16 %v4816
      %v4863 = vunpack.c.h.b16 %v4816
      %v4864 = vunpack.c.l.b16 %v4817
      %v4865 = vunpack.c.h.b16 %v4817
      %v4866 = vunpack.c.l.b16 %v4818
      %v4867 = vunpack.c.h.b16 %v4818
      %v4868 = vunpack.c.l.b16 %v4819
      %v4869 = vunpack.c.h.b16 %v4819
      %v4870 = vpack.c.b16 %v4840, %v4838
      %v4871 = vpack.c.b16 %v4841, %v4839
      %v4872 = vpack.c.b16 %v4844, %v4842
      %v4873 = vpack.c.b16 %v4845, %v4843
      %v4874 = vpack.c.b16 %v4848, %v4846
      %v4875 = vpack.c.b16 %v4849, %v4847
      %v4876 = vpack.c.b16 %v4852, %v4850
      %v4877 = vpack.c.b16 %v4853, %v4851
      %v4878 = vpack.c.b16 %v4856, %v4854
      %v4879 = vpack.c.b16 %v4857, %v4855
      %v4880 = vpack.c.b16 %v4860, %v4858
      %v4881 = vpack.c.b16 %v4861, %v4859
      %v4882 = vpack.c.b16 %v4864, %v4862
      %v4883 = vpack.c.b16 %v4865, %v4863
      %v4884 = vpack.c.b16 %v4868, %v4866
      %v4885 = vpack.c.b16 %v4869, %v4867
      %4902 = vmatprep.subr.bf16.mxu0 %v4871
      %4903 = vmatpush1.bf16.msra.mxu0 %v4870
      %4904 = vmatprep.subr.bf16.mxu0 %v4873
      %4905 = vmatpush1.bf16.msra.mxu0 %v4872
      %4906 = vmatprep.subr.bf16.mxu0 %v4875
      %4907 = vmatpush1.bf16.msra.mxu0 %v4874
      %4908 = vmatprep.subr.bf16.mxu0 %v4877
      %4909 = vmatpush1.bf16.msra.mxu0 %v4876
      %4910 = vmatprep.subr.bf16.mxu0 %v4879
      %4911 = vmatpush1.bf16.msra.mxu0 %v4878
      %4912 = vmatprep.subr.bf16.mxu0 %v4881
      %4913 = vmatpush1.bf16.msra.mxu0 %v4880
      %4914 = vmatprep.subr.bf16.mxu0 %v4883
      %4915 = vmatpush1.bf16.msra.mxu0 %v4882
      %4916 = vmatprep.subr.bf16.mxu0 %v4885
      %4917 = vmatpush1.bf16.msra.mxu0 %v4884
      %4918 = vmatprep.subr.bf16.mxu0 0
      %4919 = vmatpush1.bf16.msra.mxu0 0
      %4920 = vmatprep.subr.bf16.mxu0 0
      %4921 = vmatpush1.bf16.msra.mxu0 0
      %4922 = vmatprep.subr.bf16.mxu0 0
      %4923 = vmatpush1.bf16.msra.mxu0 0
      %4924 = vmatprep.subr.bf16.mxu0 0
      %4925 = vmatpush1.bf16.msra.mxu0 0
      %4926 = vmatprep.subr.bf16.mxu0 0
      %4927 = vmatpush1.bf16.msra.mxu0 0
      %4928 = vmatprep.subr.bf16.mxu0 0
      %4929 = vmatpush1.bf16.msra.mxu0 0
      %4930 = vmatprep.subr.bf16.mxu0 0
      %4931 = vmatpush1.bf16.msra.mxu0 0
      %4932 = vmatprep.subr.bf16.mxu0 0
      %4933 = vmatpush1.bf16.msra.mxu0 0
      %4934 = vmatprep.mubr.bf16.mxu0 0
      %4935 = vmatmul.mubr.bf16.gmra.mrb[0].mxu0 %v4820
      %v4936 = vpop.f32.mrb[0].mxu0
      %v4937 = vadd.f32 0.0, %v4936
      %v4938 = vpop.f32.mrb[0].mxu0
      %v4939 = vadd.f32 0.0, %v4938
      %v4940 = vpop.f32.mrb[0].mxu0
      %v4941 = vpop.f32.mrb[0].mxu0
      %4942 = vdwg.mxu0
      %v4943 = vadd.f32 %v4801, %v4937
      %v4944 = vadd.f32 %v4802, %v4939
      %s4945 = scalar_lea.vmem %s3, 1920
      %v4946 = vld [vmem:[%s4945] sm:$0xff]
      %v4947 = vld [vmem:[%s4945 + $0x8] sm:$0xff]
      %v4948 = vld [vmem:[%s4945 + $0x10] sm:$0xff]
      %v4949 = vld [vmem:[%s4945 + $0x18] sm:$0xff]
      %v4950 = vld [vmem:[%s4945 + $0x20] sm:$0xff]
      %v4951 = vld [vmem:[%s4945 + $0x28] sm:$0xff]
      %v4952 = vld [vmem:[%s4945 + $0x30] sm:$0xff]
      %v4953 = vld [vmem:[%s4945 + $0x38] sm:$0xff]
      %v4954 = vld [vmem:[%s4945 + $0x40] sm:$0xff]
      %v4955 = vld [vmem:[%s4945 + $0x48] sm:$0xff]
      %v4956 = vld [vmem:[%s4945 + $0x50] sm:$0xff]
      %v4957 = vld [vmem:[%s4945 + $0x58] sm:$0xff]
      %v4958 = vld [vmem:[%s4945 + $0x60] sm:$0xff]
      %v4959 = vld [vmem:[%s4945 + $0x68] sm:$0xff]
      %v4960 = vld [vmem:[%s4945 + $0x70] sm:$0xff]
      %v4961 = vld [vmem:[%s4945 + $0x78] sm:$0xff]
      %v4962 = vrot.slane %v2853, 7
      %v4980 = vunpack.c.l.b16 %v4946
      %v4981 = vunpack.c.h.b16 %v4946
      %v4982 = vunpack.c.l.b16 %v4947
      %v4983 = vunpack.c.h.b16 %v4947
      %v4984 = vunpack.c.l.b16 %v4948
      %v4985 = vunpack.c.h.b16 %v4948
      %v4986 = vunpack.c.l.b16 %v4949
      %v4987 = vunpack.c.h.b16 %v4949
      %v4988 = vunpack.c.l.b16 %v4950
      %v4989 = vunpack.c.h.b16 %v4950
      %v4990 = vunpack.c.l.b16 %v4951
      %v4991 = vunpack.c.h.b16 %v4951
      %v4992 = vunpack.c.l.b16 %v4952
      %v4993 = vunpack.c.h.b16 %v4952
      %v4994 = vunpack.c.l.b16 %v4953
      %v4995 = vunpack.c.h.b16 %v4953
      %v4996 = vunpack.c.l.b16 %v4954
      %v4997 = vunpack.c.h.b16 %v4954
      %v4998 = vunpack.c.l.b16 %v4955
      %v4999 = vunpack.c.h.b16 %v4955
      %v5000 = vunpack.c.l.b16 %v4956
      %v5001 = vunpack.c.h.b16 %v4956
      %v5002 = vunpack.c.l.b16 %v4957
      %v5003 = vunpack.c.h.b16 %v4957
      %v5004 = vunpack.c.l.b16 %v4958
      %v5005 = vunpack.c.h.b16 %v4958
      %v5006 = vunpack.c.l.b16 %v4959
      %v5007 = vunpack.c.h.b16 %v4959
      %v5008 = vunpack.c.l.b16 %v4960
      %v5009 = vunpack.c.h.b16 %v4960
      %v5010 = vunpack.c.l.b16 %v4961
      %v5011 = vunpack.c.h.b16 %v4961
      %v5012 = vpack.c.b16 %v4982, %v4980
      %v5013 = vpack.c.b16 %v4983, %v4981
      %v5014 = vpack.c.b16 %v4986, %v4984
      %v5015 = vpack.c.b16 %v4987, %v4985
      %v5016 = vpack.c.b16 %v4990, %v4988
      %v5017 = vpack.c.b16 %v4991, %v4989
      %v5018 = vpack.c.b16 %v4994, %v4992
      %v5019 = vpack.c.b16 %v4995, %v4993
      %v5020 = vpack.c.b16 %v4998, %v4996
      %v5021 = vpack.c.b16 %v4999, %v4997
      %v5022 = vpack.c.b16 %v5002, %v5000
      %v5023 = vpack.c.b16 %v5003, %v5001
      %v5024 = vpack.c.b16 %v5006, %v5004
      %v5025 = vpack.c.b16 %v5007, %v5005
      %v5026 = vpack.c.b16 %v5010, %v5008
      %v5027 = vpack.c.b16 %v5011, %v5009
      %5044 = vmatprep.subr.bf16.mxu0 %v5013
      %5045 = vmatpush1.bf16.msra.mxu0 %v5012
      %5046 = vmatprep.subr.bf16.mxu0 %v5015
      %5047 = vmatpush1.bf16.msra.mxu0 %v5014
      %5048 = vmatprep.subr.bf16.mxu0 %v5017
      %5049 = vmatpush1.bf16.msra.mxu0 %v5016
      %5050 = vmatprep.subr.bf16.mxu0 %v5019
      %5051 = vmatpush1.bf16.msra.mxu0 %v5018
      %5052 = vmatprep.subr.bf16.mxu0 %v5021
      %5053 = vmatpush1.bf16.msra.mxu0 %v5020
      %5054 = vmatprep.subr.bf16.mxu0 %v5023
      %5055 = vmatpush1.bf16.msra.mxu0 %v5022
      %5056 = vmatprep.subr.bf16.mxu0 %v5025
      %5057 = vmatpush1.bf16.msra.mxu0 %v5024
      %5058 = vmatprep.subr.bf16.mxu0 %v5027
      %5059 = vmatpush1.bf16.msra.mxu0 %v5026
      %5060 = vmatprep.subr.bf16.mxu0 0
      %5061 = vmatpush1.bf16.msra.mxu0 0
      %5062 = vmatprep.subr.bf16.mxu0 0
      %5063 = vmatpush1.bf16.msra.mxu0 0
      %5064 = vmatprep.subr.bf16.mxu0 0
      %5065 = vmatpush1.bf16.msra.mxu0 0
      %5066 = vmatprep.subr.bf16.mxu0 0
      %5067 = vmatpush1.bf16.msra.mxu0 0
      %5068 = vmatprep.subr.bf16.mxu0 0
      %5069 = vmatpush1.bf16.msra.mxu0 0
      %5070 = vmatprep.subr.bf16.mxu0 0
      %5071 = vmatpush1.bf16.msra.mxu0 0
      %5072 = vmatprep.subr.bf16.mxu0 0
      %5073 = vmatpush1.bf16.msra.mxu0 0
      %5074 = vmatprep.subr.bf16.mxu0 0
      %5075 = vmatpush1.bf16.msra.mxu0 0
      %5076 = vmatprep.mubr.bf16.mxu0 0
      %5077 = vmatmul.mubr.bf16.gmra.mrb[0].mxu0 %v4962
      %v5078 = vpop.f32.mrb[0].mxu0
      %v5079 = vadd.f32 0.0, %v5078
      %v5080 = vpop.f32.mrb[0].mxu0
      %v5081 = vadd.f32 0.0, %v5080
      %v5082 = vpop.f32.mrb[0].mxu0
      %v5083 = vpop.f32.mrb[0].mxu0
      %5084 = vdwg.mxu0
      %v5085 = vadd.f32 %v4943, %v5079
      %v5086 = vadd.f32 %v4944, %v5081
      %v5087 = vld [vmem:[%s4] sm:$0x3]
      %v5089 = vlaneseq
      %v5090 = vshrl.u32 %v5089, 7
      %v5091 = vsub.s32 0, %v5090
      %v5092 = vrot.slane %v5087, %v5091
      %v5093 = vlaneseq
      %v5094 = vshrl.u32 %v5093, 7
      %v5095 = vsub.s32 1, %v5094
      %v5096 = vrot.slane %v5087, %v5095
      %v5099 = vadd.f32 %v5085, %v5092
      %v5100 = vadd.f32 %v5086, %v5096
      %v5101 = vmax.f32 %v5099, 0.0
      %v5102 = vmax.f32 %v5100, 0.0
      %v5103 = vpack.c.bf16 %v5101, %v5101
      %v5104 = vpack.c.bf16 %v5102, %v5102
      %v5105 = vld [vmem:[%s5] sm:$0xf]
      %v5106 = vld [vmem:[%s5 + $0x4] sm:$0xf]
      %v5107 = vld [vmem:[%s5 + $0x8] sm:$0xf]
      %v5108 = vld [vmem:[%s5 + $0xc] sm:$0xf]
      %v5109 = vld [vmem:[%s5 + $0x10] sm:$0xf]
      %v5110 = vld [vmem:[%s5 + $0x14] sm:$0xf]
      %v5111 = vld [vmem:[%s5 + $0x18] sm:$0xf]
      %v5112 = vld [vmem:[%s5 + $0x1c] sm:$0xf]
      %v5113 = vld [vmem:[%s5 + $0x20] sm:$0xf]
      %v5114 = vld [vmem:[%s5 + $0x24] sm:$0xf]
      %v5115 = vld [vmem:[%s5 + $0x28] sm:$0xf]
      %v5116 = vld [vmem:[%s5 + $0x2c] sm:$0xf]
      %v5117 = vld [vmem:[%s5 + $0x30] sm:$0xf]
      %v5118 = vld [vmem:[%s5 + $0x34] sm:$0xf]
      %v5119 = vld [vmem:[%s5 + $0x38] sm:$0xf]
      %v5120 = vld [vmem:[%s5 + $0x3c] sm:$0xf]
      %v5121 = vld [vmem:[%s5 + $0x40] sm:$0xf]
      %v5122 = vld [vmem:[%s5 + $0x44] sm:$0xf]
      %v5123 = vld [vmem:[%s5 + $0x48] sm:$0xf]
      %v5124 = vld [vmem:[%s5 + $0x4c] sm:$0xf]
      %v5125 = vld [vmem:[%s5 + $0x50] sm:$0xf]
      %v5126 = vld [vmem:[%s5 + $0x54] sm:$0xf]
      %v5127 = vld [vmem:[%s5 + $0x58] sm:$0xf]
      %v5128 = vld [vmem:[%s5 + $0x5c] sm:$0xf]
      %v5129 = vld [vmem:[%s5 + $0x60] sm:$0xf]
      %v5130 = vld [vmem:[%s5 + $0x64] sm:$0xf]
      %v5131 = vld [vmem:[%s5 + $0x68] sm:$0xf]
      %v5132 = vld [vmem:[%s5 + $0x6c] sm:$0xf]
      %v5133 = vld [vmem:[%s5 + $0x70] sm:$0xf]
      %v5134 = vld [vmem:[%s5 + $0x74] sm:$0xf]
      %v5135 = vld [vmem:[%s5 + $0x78] sm:$0xf]
      %v5136 = vld [vmem:[%s5 + $0x7c] sm:$0xf]
      %v5137 = vld [vmem:[%s6] sm:$0x1]
      %v5170 = vunpack.c.l.b16 %v5105
      %v5171 = vunpack.c.l.b16 %v5106
      %v5172 = vunpack.c.l.b16 %v5107
      %v5173 = vunpack.c.l.b16 %v5108
      %v5174 = vunpack.c.l.b16 %v5109
      %v5175 = vunpack.c.l.b16 %v5110
      %v5176 = vunpack.c.l.b16 %v5111
      %v5177 = vunpack.c.l.b16 %v5112
      %v5178 = vunpack.c.l.b16 %v5113
      %v5179 = vunpack.c.l.b16 %v5114
      %v5180 = vunpack.c.l.b16 %v5115
      %v5181 = vunpack.c.l.b16 %v5116
      %v5182 = vunpack.c.l.b16 %v5117
      %v5183 = vunpack.c.l.b16 %v5118
      %v5184 = vunpack.c.l.b16 %v5119
      %v5185 = vunpack.c.l.b16 %v5120
      %v5186 = vunpack.c.l.b16 %v5121
      %v5187 = vunpack.c.l.b16 %v5122
      %v5188 = vunpack.c.l.b16 %v5123
      %v5189 = vunpack.c.l.b16 %v5124
      %v5190 = vunpack.c.l.b16 %v5125
      %v5191 = vunpack.c.l.b16 %v5126
      %v5192 = vunpack.c.l.b16 %v5127
      %v5193 = vunpack.c.l.b16 %v5128
      %v5194 = vunpack.c.l.b16 %v5129
      %v5195 = vunpack.c.l.b16 %v5130
      %v5196 = vunpack.c.l.b16 %v5131
      %v5197 = vunpack.c.l.b16 %v5132
      %v5198 = vunpack.c.l.b16 %v5133
      %v5199 = vunpack.c.l.b16 %v5134
      %v5200 = vunpack.c.l.b16 %v5135
      %v5201 = vunpack.c.l.b16 %v5136
      %v5202 = vpack.c.b16 %v5171, %v5170
      %v5203 = vpack.c.b16 %v5173, %v5172
      %v5204 = vpack.c.b16 %v5175, %v5174
      %v5205 = vpack.c.b16 %v5177, %v5176
      %v5206 = vpack.c.b16 %v5179, %v5178
      %v5207 = vpack.c.b16 %v5181, %v5180
      %v5208 = vpack.c.b16 %v5183, %v5182
      %v5209 = vpack.c.b16 %v5185, %v5184
      %v5210 = vpack.c.b16 %v5187, %v5186
      %v5211 = vpack.c.b16 %v5189, %v5188
      %v5212 = vpack.c.b16 %v5191, %v5190
      %v5213 = vpack.c.b16 %v5193, %v5192
      %v5214 = vpack.c.b16 %v5195, %v5194
      %v5215 = vpack.c.b16 %v5197, %v5196
      %v5216 = vpack.c.b16 %v5199, %v5198
      %v5217 = vpack.c.b16 %v5201, %v5200
      %5234 = vmatprep.subr.bf16.mxu0 0
      %5235 = vmatpush1.bf16.msra.mxu0 %v5202
      %5236 = vmatprep.subr.bf16.mxu0 0
      %5237 = vmatpush1.bf16.msra.mxu0 %v5203
      %5238 = vmatprep.subr.bf16.mxu0 0
      %5239 = vmatpush1.bf16.msra.mxu0 %v5204
      %5240 = vmatprep.subr.bf16.mxu0 0
      %5241 = vmatpush1.bf16.msra.mxu0 %v5205
      %5242 = vmatprep.subr.bf16.mxu0 0
      %5243 = vmatpush1.bf16.msra.mxu0 %v5206
      %5244 = vmatprep.subr.bf16.mxu0 0
      %5245 = vmatpush1.bf16.msra.mxu0 %v5207
      %5246 = vmatprep.subr.bf16.mxu0 0
      %5247 = vmatpush1.bf16.msra.mxu0 %v5208
      %5248 = vmatprep.subr.bf16.mxu0 0
      %5249 = vmatpush1.bf16.msra.mxu0 %v5209
      %5250 = vmatprep.subr.bf16.mxu0 0
      %5251 = vmatpush1.bf16.msra.mxu0 %v5210
      %5252 = vmatprep.subr.bf16.mxu0 0
      %5253 = vmatpush1.bf16.msra.mxu0 %v5211
      %5254 = vmatprep.subr.bf16.mxu0 0
      %5255 = vmatpush1.bf16.msra.mxu0 %v5212
      %5256 = vmatprep.subr.bf16.mxu0 0
      %5257 = vmatpush1.bf16.msra.mxu0 %v5213
      %5258 = vmatprep.subr.bf16.mxu0 0
      %5259 = vmatpush1.bf16.msra.mxu0 %v5214
      %5260 = vmatprep.subr.bf16.mxu0 0
      %5261 = vmatpush1.bf16.msra.mxu0 %v5215
      %5262 = vmatprep.subr.bf16.mxu0 0
      %5263 = vmatpush1.bf16.msra.mxu0 %v5216
      %5264 = vmatprep.subr.bf16.mxu0 0
      %5265 = vmatpush1.bf16.msra.mxu0 %v5217
      %5266 = vmatprep.mubr.bf16.mxu0 %v5104
      %5267 = vmatmul.mubr.bf16.gmra.mrb[0].mxu0 %v5103
      %v5268 = vpop.f32.mrb[0].mxu0
      %v5269 = vadd.f32 %v5137, %v5268
      %v5270 = vpop.f32.mrb[0].mxu0
      %v5271 = vpop.f32.mrb[0].mxu0
      %v5272 = vpop.f32.mrb[0].mxu0
      %5273 = vdwg.mxu0
      %v5274 = vlaneseq
      %v5275 = vshrl.u32 %v5274, 7
      %v5276 = vsub.s32 0, %v5275
      %v5277 = vrot.slane %v5269, %v5276
      %5278 = vst [vmem:[%s276] sm:$0xff] %v5277
      %p5279 = scmp.lt.s32.totalorder %s18, 1
      %s5280 = scalar_select %p5279, %s18, 1
      %s5281 = smul.addr %s5280, 8
      %s5282 = scalar_lea.vmem %s7, %s5281
      // Predicated region
      $region49: #{encoder_forward.3} parent=47 // pred_check
        %p5283 = pneg %p188
      $region50: #{encoder_forward.3} parent=47 // pred_check_branch
        %5285 = sbr.rel (%p5283) target = $region52
      $region51: #{encoder_forward.3} parent=47 // pred_region
        _
      $region52: #{encoder_forward.3} parent=47 // pred_fallthru
        _
    $region48: #{encoder_forward.3} parent=5 // pred_fallthru
      _
    %p5286 = scmp.le.s32.totalorder 2, %s13
    // Predicated region
    $region53: #{encoder_forward.3} parent=5 // pred_check
      %p5287 = pneg %p5286
    $region54: #{encoder_forward.3} parent=5 // pred_check_branch
      %5289 = sbr.rel (%p5287) target = $region56
    $region55: #{encoder_forward.3} parent=5 // pred_region
      %s5290 = ssub.s32 %s13, 2
      // Predicated region
      $region57: #{encoder_forward.3} parent=55 // pred_check
        %p5291 = pneg %p194
      $region58: #{encoder_forward.3} parent=55 // pred_check_branch
        %5293 = sbr.rel (%p5291) target = $region60
      $region59: #{encoder_forward.3} parent=55 // pred_region
        %p5294 = scmp.lt.s32.totalorder %s19, 1
        %s5295 = scalar_select %p5294, %s19, 1
        %s5296 = smul.addr %s5295, 8
        %s5297 = scalar_lea.vmem %s7, %s5296
      $region60: #{encoder_forward.3} parent=55 // pred_fallthru
        _
    $region56: #{encoder_forward.3} parent=5 // pred_fallthru
      _
  $region6: #{encoder_forward.3} parent=0 // loop_footer
    %s17 = sadd.s32 1, %s13
  $region7: #{encoder_forward.3} parent=0 // loop_footer_branch
    %12 = sbr.rel target = $region3
  $region8: #{encoder_forward.3} parent=0 // loop_exit
    _

</llo_original>
